<compile_context>
chip_gen: v5e
topology: v5e:2x2
jax: 0.10.0
libtpu: 0.0.40
codegen_flags: <defaults>
</compile_context>

<pallas_src>
import functools
import math

import jax
import jax.numpy as jnp
from jax.experimental import pallas as pl
from jax.experimental.pallas import tpu as pltpu

# ----------------------------- configuration --------------------------------
B = 2            # batch
CIN = 8          # conv / BN input channels   (512 in the original)
IMG = 8          # spatial H = W              (so H*W == num_pixel == 64)
NUM_PIXEL = IMG * IMG
D_MODEL = 128    # d_model                    (1024 in the original)
NHEAD = 4        # attention heads            (8 in the original)
DFF = 256        # feed-forward hidden        (2048 in the original)
NUM_LAYERS = 2
EPS = 1e-5

# ----------------------------- Pallas kernels -------------------------------


def _conv_embed_kernel(p_ref, m_ref, s_ref, t_ref, w_ref, b_ref, pe_ref, o_ref):
    # eval-mode BatchNorm folded to scale/shift + ReLU applied to the im2col
    # patch block in-kernel.  m_ref is a validity mask that reproduces the
    # conv's zero padding of the BN+ReLU output (and zeroes the K lane-padding).
    act = jnp.maximum(p_ref[0] * s_ref[...] + t_ref[...], 0.0) * m_ref[...]
    tok = jnp.dot(act, w_ref[...], preferred_element_type=jnp.float32)
    o_ref[0] = (tok + b_ref[...] + pe_ref[...]).astype(o_ref.dtype)


def conv_embed(patches, mask, scale, shift, w, bias, pos):
    b, s, k = patches.shape
    d = w.shape[1]
    return pl.pallas_call(
        _conv_embed_kernel,
        out_shape=jax.ShapeDtypeStruct((b, s, d), patches.dtype),
        grid_spec=pltpu.PrefetchScalarGridSpec(
            num_scalar_prefetch=0, grid=(b,),
            in_specs=[pl.BlockSpec((1, s, k), lambda i: (i, 0, 0)),
                      pl.BlockSpec((s, k), lambda i: (0, 0)),
                      pl.BlockSpec((1, k), lambda i: (0, 0)),
                      pl.BlockSpec((1, k), lambda i: (0, 0)),
                      pl.BlockSpec((k, d), lambda i: (0, 0)),
                      pl.BlockSpec((1, d), lambda i: (0, 0)),
                      pl.BlockSpec((s, d), lambda i: (0, 0))],
            out_specs=pl.BlockSpec((1, s, d), lambda i: (i, 0, 0))),
        compiler_params=pltpu.CompilerParams(dimension_semantics=("parallel",)),
    )(patches, mask, scale.reshape(1, k), shift.reshape(1, k),
      w, bias.reshape(1, d), pos)


def _transformer_kernel(x_ref, n1g_ref, n1b_ref, wqkv_ref, bqkv_ref,
                        wo_ref, bo_ref, n2g_ref, n2b_ref,
                        w1_ref, b1_ref, w2_ref, b2_ref,
                        pg_ref, pb_ref, o_ref, xc_ref,
                        *, batch, nhead, scale, eps):
    # One pre-norm nn.TransformerEncoderLayer per grid step, for the WHOLE
    # (token-flattened) batch at once; the running activation lives in the
    # VMEM scratch xc_ref across layer iterations.  Dropouts are identity
    # (eval mode).  The module's post LayerNorm is fused into the last layer.
    layer = pl.program_id(0)

    @pl.when(layer == 0)
    def _():
        xc_ref[...] = x_ref[...].astype(jnp.float32)

    x = xc_ref[...]                                  # (B*S, D) f32
    bs, d = x.shape
    s = bs // batch
    hd = d // nhead

    def ln(t, g, b):
        mu = jnp.mean(t, axis=-1, keepdims=True)
        var = jnp.mean(jnp.square(t - mu), axis=-1, keepdims=True)
        return (t - mu) * jax.lax.rsqrt(var + eps) * g + b

    # ---- self-attention block (pre-norm) ----
    h = ln(x, n1g_ref[0], n1b_ref[0])
    qkv = jnp.dot(h, wqkv_ref[0],
                  preferred_element_type=jnp.float32) + bqkv_ref[0]
    q = qkv[:, :d]
    k = qkv[:, d:2 * d]
    v = qkv[:, 2 * d:]

    rows = []
    for bb in range(batch):                          # static unroll (tiny B)
        rsl = slice(bb * s, (bb + 1) * s)
        heads = []
        for hh in range(nhead):                      # static unroll over heads
            csl = slice(hh * hd, (hh + 1) * hd)
            qh = q[rsl, csl]                         # (S, hd)
            kh = k[rsl, csl]                         # (S, hd)
            vh = v[rsl, csl]                         # (S, hd)
            # q @ k^T via contraction on the last dim of both (no explicit
            # transpose needed; the MXU handles the NT form directly).
            sc = jnp.einsum('qd,kd->qk', qh, kh,
                            preferred_element_type=jnp.float32) * scale
            m = jnp.max(sc, axis=-1, keepdims=True)
            p = jnp.exp(sc - m)
            p = p * pl.reciprocal(jnp.sum(p, axis=-1, keepdims=True),
                                  approx=True)
            heads.append(jnp.dot(p, vh, preferred_element_type=jnp.float32))
        rows.append(jnp.concatenate(heads, axis=-1))  # (S, D) lane-dense
    attn = jnp.concatenate(rows, axis=0)              # (B*S, D)

    x = x + jnp.dot(attn, wo_ref[0],
                    preferred_element_type=jnp.float32) + bo_ref[0]

    # ---- feed-forward block (pre-norm), residual fused ----
    h2 = ln(x, n2g_ref[0], n2b_ref[0])
    f = jnp.maximum(
        jnp.dot(h2, w1_ref[0], preferred_element_type=jnp.float32) + b1_ref[0],
        0.0)
    x = x + jnp.dot(f, w2_ref[0],
                    preferred_element_type=jnp.float32) + b2_ref[0]

    xc_ref[...] = x                                  # carry to next layer

    @pl.when(layer == pl.num_programs(0) - 1)
    def _():                                         # fused post LayerNorm
        o_ref[...] = ln(x, pg_ref[...], pb_ref[...]).astype(o_ref.dtype)


def transformer_stack(x, p):
    b, s, d = x.shape
    nl = len(p["layers"])
    dff = p["layers"][0]["w1"].shape[1]

    def stk(name, shape):
        return jnp.stack([lp[name].reshape(shape) for lp in p["layers"]])

    def lw(r, c):
        # per-layer parameter stacked along axis 0, selected by the layer index
        return pl.BlockSpec((1, r, c), lambda l: (l, 0, 0))

    x2 = x.reshape(b * s, d)                         # token-major, lane-dense
    out = pl.pallas_call(
        functools.partial(_transformer_kernel, batch=b, nhead=NHEAD,
                          scale=1.0 / math.sqrt(d // NHEAD), eps=EPS),
        out_shape=jax.ShapeDtypeStruct((b * s, d), x.dtype),
        grid_spec=pltpu.PrefetchScalarGridSpec(
            num_scalar_prefetch=0, grid=(nl,),
            in_specs=[pl.BlockSpec((b * s, d), lambda l: (0, 0)),
                      lw(1, d), lw(1, d),
                      lw(d, 3 * d), lw(1, 3 * d),
                      lw(d, d), lw(1, d),
                      lw(1, d), lw(1, d),
                      lw(d, dff), lw(1, dff),
                      lw(dff, d), lw(1, d),
                      pl.BlockSpec((1, d), lambda l: (0, 0)),
                      pl.BlockSpec((1, d), lambda l: (0, 0))],
            out_specs=pl.BlockSpec((b * s, d), lambda l: (0, 0)),
            scratch_shapes=[pltpu.VMEM((b * s, d), jnp.float32)]),
        compiler_params=pltpu.CompilerParams(
            dimension_semantics=("arbitrary",)),
    )(x2,
      stk("norm1_g", (1, d)), stk("norm1_b", (1, d)),
      stk("wqkv", (d, 3 * d)), stk("bqkv", (1, 3 * d)),
      stk("wo", (d, d)), stk("bo", (1, d)),
      stk("norm2_g", (1, d)), stk("norm2_b", (1, d)),
      stk("w1", (d, dff)), stk("b1", (1, dff)),
      stk("w2", (dff, d)), stk("b2", (1, d)),
      p["post_g"].reshape(1, d), p["post_b"].reshape(1, d))
    return out.reshape(b, s, d)


# ------------------------------ model glue -----------------------------------


def init_params(key):
    ks = iter(jax.random.split(key, 40))

    def nrm(shape, std=0.02):
        return std * jax.random.normal(next(ks), shape, jnp.float32)

    p = {
        # BatchNorm2d(CIN) -- eval mode running stats
        "bn_gamma": 1.0 + 0.1 * jax.random.normal(next(ks), (CIN,), jnp.float32),
        "bn_beta": 0.1 * jax.random.normal(next(ks), (CIN,), jnp.float32),
        "bn_mean": 0.1 * jax.random.normal(next(ks), (CIN,), jnp.float32),
        "bn_var": jnp.abs(1.0 + 0.1 * jax.random.normal(next(ks), (CIN,), jnp.float32)),
        # Conv2d(CIN, D_MODEL, 3, padding=1) stored as im2col weight (9*CIN, D)
        "conv_w": nrm((9 * CIN, D_MODEL), 0.05),
        "conv_b": nrm((D_MODEL,), 0.02),
        "pos_emb": nrm((1, NUM_PIXEL, D_MODEL), 0.02),
        "post_g": jnp.ones((D_MODEL,), jnp.float32),
        "post_b": jnp.zeros((D_MODEL,), jnp.float32),
        "layers": [],
    }
    for _ in range(NUM_LAYERS):
        p["layers"].append(dict(
            norm1_g=jnp.ones((D_MODEL,), jnp.float32),
            norm1_b=jnp.zeros((D_MODEL,), jnp.float32),
            wqkv=nrm((D_MODEL, 3 * D_MODEL)), bqkv=nrm((3 * D_MODEL,)),
            wo=nrm((D_MODEL, D_MODEL)), bo=nrm((D_MODEL,)),
            norm2_g=jnp.ones((D_MODEL,), jnp.float32),
            norm2_b=jnp.zeros((D_MODEL,), jnp.float32),
            w1=nrm((D_MODEL, DFF)), b1=nrm((DFF,)),
            w2=nrm((DFF, D_MODEL)), b2=nrm((D_MODEL,)),
        ))
    return p


def forward(x_nchw, p):
    b, c, hh, ww = x_nchw.shape
    seq = hh * ww
    d = p["conv_w"].shape[1]
    k_raw = 9 * c
    kpad = pl.cdiv(k_raw, 128) * 128          # lane-align the im2col K dim

    x = jnp.transpose(x_nchw, (0, 2, 3, 1))   # NCHW -> NHWC
    # im2col on the *raw* input (XLA glue); BN(eval)+ReLU folded into the kernel.
    xp = jnp.pad(x, ((0, 0), (1, 1), (1, 1), (0, 0)))
    patches = jnp.concatenate(
        [xp[:, dh:dh + hh, dw:dw + ww, :] for dh in range(3) for dw in range(3)],
        axis=-1).reshape(b, seq, k_raw)
    patches = jnp.pad(patches, ((0, 0), (0, 0), (0, kpad - k_raw)))
    # Validity mask: 1 where a patch entry comes from a real pixel, 0 where it
    # comes from the conv's zero padding (so the zero-padded BN+ReLU output is
    # reproduced exactly) or from the K lane-padding.  Same for every batch.
    op = jnp.pad(jnp.ones((1, hh, ww, c), x.dtype), ((0, 0), (1, 1), (1, 1), (0, 0)))
    mask = jnp.concatenate(
        [op[:, dh:dh + hh, dw:dw + ww, :] for dh in range(3) for dw in range(3)],
        axis=-1).reshape(seq, k_raw)
    mask = jnp.pad(mask, ((0, 0), (0, kpad - k_raw)))

    bn_scale = p["bn_gamma"] / jnp.sqrt(p["bn_var"] + EPS)
    bn_shift = p["bn_beta"] - p["bn_mean"] * bn_scale
    scale_k = jnp.pad(jnp.tile(bn_scale, 9), (0, kpad - k_raw))
    shift_k = jnp.pad(jnp.tile(bn_shift, 9), (0, kpad - k_raw))
    w_pad = jnp.pad(p["conv_w"], ((0, kpad - k_raw), (0, 0)))

    # BN+ReLU + 3x3 conv (im2col matmul) + bias + pos_embedding, one kernel.
    x = conv_embed(patches, mask, scale_k, shift_k, w_pad, p["conv_b"],
                   p["pos_emb"].reshape(seq, d))            # (B, S, D)
    # TODO(synk): pe_drop and encoder-layer dropouts are identity (inference).

    # All encoder layers + post LayerNorm in a single pallas_call.
    x = transformer_stack(x, p)                              # (B, S, D)
    return x


# ----------------------------- pure-JAX reference ----------------------------


def ref_forward(x_nchw, p):
    b, c, hh, ww = x_nchw.shape
    x = jnp.transpose(x_nchw, (0, 2, 3, 1))
    scale = p["bn_gamma"] / jnp.sqrt(p["bn_var"] + EPS)
    shift = p["bn_beta"] - p["bn_mean"] * scale
    x = jnp.maximum(x * scale + shift, 0.0)
    xp = jnp.pad(x, ((0, 0), (1, 1), (1, 1), (0, 0)))
    patches = jnp.concatenate(
        [xp[:, dh:dh + hh, dw:dw + ww, :] for dh in range(3) for dw in range(3)],
        axis=-1)
    tok = patches.reshape(b * hh * ww, 9 * c) @ p["conv_w"] + p["conv_b"]
    d = tok.shape[-1]
    seq = hh * ww
    x = (tok.reshape(b, seq, d) + p["pos_emb"]).reshape(b * seq, d)

    def ln(t, g, bb):
        mu = jnp.mean(t, -1, keepdims=True)
        var = jnp.mean((t - mu) ** 2, -1, keepdims=True)
        return (t - mu) / jnp.sqrt(var + EPS) * g + bb

    hd = d // NHEAD
    for lp in p["layers"]:
        h = ln(x, lp["norm1_g"], lp["norm1_b"])
        qkv = h @ lp["wqkv"] + lp["bqkv"]
        q, k, v = jnp.split(qkv, 3, -1)

        def heads(t):
            return t.reshape(b, seq, NHEAD, hd).transpose(0, 2, 1, 3)

        s = jnp.einsum("bhqd,bhkd->bhqk", heads(q), heads(k)) / math.sqrt(hd)
        a = jax.nn.softmax(s, -1)
        o = jnp.einsum("bhqk,bhkd->bhqd", a, heads(v)).transpose(0, 2, 1, 3)
        x = x + o.reshape(b * seq, d) @ lp["wo"] + lp["bo"]
        h = ln(x, lp["norm2_g"], lp["norm2_b"])
        h = jnp.maximum(h @ lp["w1"] + lp["b1"], 0.0)
        x = x + h @ lp["w2"] + lp["b2"]
    x = ln(x, p["post_g"], p["post_b"])
    return x.reshape(b, seq, d)


# ---------------------------------- main --------------------------------------

if __name__ == "__main__":
    key = jax.random.PRNGKey(0)
    pkey, xkey = jax.random.split(key)
    params = init_params(pkey)
    x = jax.random.normal(xkey, (B, CIN, IMG, IMG), jnp.float32)   # NCHW like torch

    out = jax.jit(forward)(x, params)
    out = jax.block_until_ready(out)

    assert out.shape == (B, NUM_PIXEL, D_MODEL), out.shape
    ref = ref_forward(x, params)
    err = float(jnp.max(jnp.abs(out - ref)))
    assert err < 1e-2, f"max abs diff vs reference: {err}"
    print("KERNEL_OK")
</pallas_src>

<mosaic_0001>
module attributes {stable_mosaic.version = 11 : i64} {
  func.func @_conv_embed_kernel(%arg0: i32, %arg1: memref<1x64x128xf32, #tpu.memory_space<vmem>>, %arg2: memref<64x128xf32, #tpu.memory_space<vmem>>, %arg3: memref<1x128xf32, #tpu.memory_space<vmem>>, %arg4: memref<1x128xf32, #tpu.memory_space<vmem>>, %arg5: memref<128x128xf32, #tpu.memory_space<vmem>>, %arg6: memref<1x128xf32, #tpu.memory_space<vmem>>, %arg7: memref<64x128xf32, #tpu.memory_space<vmem>>, %arg8: memref<1x64x128xf32, #tpu.memory_space<vmem>>) attributes {dimension_semantics = [#tpu.dimension_semantics<parallel>], iteration_bounds = array<i64: 2>, scalar_prefetch = 0 : i64, scratch_operands = 0 : i64, tpu.core_type = #tpu.core_type<tc>, window_params = [{transform_indices = @transform_0, window_bounds = array<i64: 1, 64, 128>}, {pipeline_mode = #tpu.pipeline_mode<synchronous>, transform_indices = @transform_1, window_bounds = array<i64: 64, 128>}, {pipeline_mode = #tpu.pipeline_mode<synchronous>, transform_indices = @transform_2, window_bounds = array<i64: 1, 128>}, {pipeline_mode = #tpu.pipeline_mode<synchronous>, transform_indices = @transform_3, window_bounds = array<i64: 1, 128>}, {pipeline_mode = #tpu.pipeline_mode<synchronous>, transform_indices = @transform_4, window_bounds = array<i64: 128, 128>}, {pipeline_mode = #tpu.pipeline_mode<synchronous>, transform_indices = @transform_5, window_bounds = array<i64: 1, 128>}, {pipeline_mode = #tpu.pipeline_mode<synchronous>, transform_indices = @transform_6, window_bounds = array<i64: 64, 128>}, {transform_indices = @transform_7, window_bounds = array<i64: 1, 64, 128>}]} {
    %c0 = arith.constant 0 : index
    %c0_0 = arith.constant 0 : index
    %c0_1 = arith.constant 0 : index
    %0 = vector.load %arg1[%c0, %c0_0, %c0_1] : memref<1x64x128xf32, #tpu.memory_space<vmem>>, vector<1x64x128xf32>
    %1 = vector.shape_cast %0 : vector<1x64x128xf32> to vector<64x128xf32>
    %c0_2 = arith.constant 0 : index
    %c0_3 = arith.constant 0 : index
    %2 = vector.load %arg3[%c0_2, %c0_3] : memref<1x128xf32, #tpu.memory_space<vmem>>, vector<1x128xf32>
    %3 = vector.broadcast %2 : vector<1x128xf32> to vector<64x128xf32>
    %4 = arith.mulf %1, %3 : vector<64x128xf32>
    %c0_4 = arith.constant 0 : index
    %c0_5 = arith.constant 0 : index
    %5 = vector.load %arg4[%c0_4, %c0_5] : memref<1x128xf32, #tpu.memory_space<vmem>>, vector<1x128xf32>
    %6 = vector.broadcast %5 : vector<1x128xf32> to vector<64x128xf32>
    %7 = arith.addf %4, %6 : vector<64x128xf32>
    %cst = arith.constant 0.000000e+00 : f32
    %8 = vector.broadcast %cst : f32 to vector<64x128xf32>
    %9 = arith.maximumf %7, %8 : vector<64x128xf32>
    %c0_6 = arith.constant 0 : index
    %c0_7 = arith.constant 0 : index
    %10 = vector.load %arg2[%c0_6, %c0_7] : memref<64x128xf32, #tpu.memory_space<vmem>>, vector<64x128xf32>
    %11 = arith.mulf %9, %10 : vector<64x128xf32>
    %c0_8 = arith.constant 0 : index
    %c0_9 = arith.constant 0 : index
    %12 = vector.load %arg5[%c0_8, %c0_9] : memref<128x128xf32, #tpu.memory_space<vmem>>, vector<128x128xf32>
    %cst_10 = arith.constant dense<0.000000e+00> : vector<64x128xf32>
    %13 = tpu.matmul %11, %12, %cst_10 {dimension_numbers = #tpu.dot_dimension_numbers<[1], [0], [0], [1], [0, 0, 1, 1], [], []>} : vector<64x128xf32>, vector<128x128xf32>, vector<64x128xf32> -> vector<64x128xf32>
    %c0_11 = arith.constant 0 : index
    %c0_12 = arith.constant 0 : index
    %14 = vector.load %arg6[%c0_11, %c0_12] : memref<1x128xf32, #tpu.memory_space<vmem>>, vector<1x128xf32>
    %15 = vector.broadcast %14 : vector<1x128xf32> to vector<64x128xf32>
    %16 = arith.addf %13, %15 : vector<64x128xf32>
    %c0_13 = arith.constant 0 : index
    %c0_14 = arith.constant 0 : index
    %17 = vector.load %arg7[%c0_13, %c0_14] : memref<64x128xf32, #tpu.memory_space<vmem>>, vector<64x128xf32>
    %18 = arith.addf %16, %17 : vector<64x128xf32>
    %c0_15 = arith.constant 0 : index
    %c0_16 = arith.constant 0 : index
    %c0_17 = arith.constant 0 : index
    %19 = vector.load %arg8[%c0_15, %c0_16, %c0_17] : memref<1x64x128xf32, #tpu.memory_space<vmem>>, vector<1x64x128xf32>
    %20 = vector.shape_cast %19 : vector<1x64x128xf32> to vector<64x128xf32>
    %21 = vector.shape_cast %18 : vector<64x128xf32> to vector<1x64x128xf32>
    tpu.vector_store %arg8[%c0_15, %c0_16, %c0_17], %21 {strides = array<i32>} : memref<1x64x128xf32, #tpu.memory_space<vmem>>, vector<1x64x128xf32>,
    return
  }
  func.func @transform_0(%arg0: i32) -> (i32, i32, i32) {
    %c0_i32 = arith.constant 0 : i32
    %c0_i32_0 = arith.constant 0 : i32
    %c0_i32_1 = arith.constant 0 : i32
    return %arg0, %c0_i32, %c0_i32_0 : i32, i32, i32
  }
  func.func @transform_1(%arg0: i32) -> (i32, i32) {
    %c0_i32 = arith.constant 0 : i32
    %c0_i32_0 = arith.constant 0 : i32
    %c0_i32_1 = arith.constant 0 : i32
    return %c0_i32, %c0_i32_0 : i32, i32
  }
  func.func @transform_2(%arg0: i32) -> (i32, i32) {
    %c0_i32 = arith.constant 0 : i32
    %c0_i32_0 = arith.constant 0 : i32
    %c0_i32_1 = arith.constant 0 : i32
    return %c0_i32, %c0_i32_0 : i32, i32
  }
  func.func @transform_3(%arg0: i32) -> (i32, i32) {
    %c0_i32 = arith.constant 0 : i32
    %c0_i32_0 = arith.constant 0 : i32
    %c0_i32_1 = arith.constant 0 : i32
    return %c0_i32, %c0_i32_0 : i32, i32
  }
  func.func @transform_4(%arg0: i32) -> (i32, i32) {
    %c0_i32 = arith.constant 0 : i32
    %c0_i32_0 = arith.constant 0 : i32
    %c0_i32_1 = arith.constant 0 : i32
    return %c0_i32, %c0_i32_0 : i32, i32
  }
  func.func @transform_5(%arg0: i32) -> (i32, i32) {
    %c0_i32 = arith.constant 0 : i32
    %c0_i32_0 = arith.constant 0 : i32
    %c0_i32_1 = arith.constant 0 : i32
    return %c0_i32, %c0_i32_0 : i32, i32
  }
  func.func @transform_6(%arg0: i32) -> (i32, i32) {
    %c0_i32 = arith.constant 0 : i32
    %c0_i32_0 = arith.constant 0 : i32
    %c0_i32_1 = arith.constant 0 : i32
    return %c0_i32, %c0_i32_0 : i32, i32
  }
  func.func @transform_7(%arg0: i32) -> (i32, i32, i32) {
    %c0_i32 = arith.constant 0 : i32
    %c0_i32_0 = arith.constant 0 : i32
    %c0_i32_1 = arith.constant 0 : i32
    return %arg0, %c0_i32, %c0_i32_0 : i32, i32, i32
  }
}

module attributes {stable_mosaic.version = 11 : i64} {
  func.func @_transformer_kernel(%arg0: i32, %arg1: memref<128x128xf32, #tpu.memory_space<vmem>>, %arg2: memref<1x1x128xf32, #tpu.memory_space<vmem>>, %arg3: memref<1x1x128xf32, #tpu.memory_space<vmem>>, %arg4: memref<1x128x384xf32, #tpu.memory_space<vmem>>, %arg5: memref<1x1x384xf32, #tpu.memory_space<vmem>>, %arg6: memref<1x128x128xf32, #tpu.memory_space<vmem>>, %arg7: memref<1x1x128xf32, #tpu.memory_space<vmem>>, %arg8: memref<1x1x128xf32, #tpu.memory_space<vmem>>, %arg9: memref<1x1x128xf32, #tpu.memory_space<vmem>>, %arg10: memref<1x128x256xf32, #tpu.memory_space<vmem>>, %arg11: memref<1x1x256xf32, #tpu.memory_space<vmem>>, %arg12: memref<1x256x128xf32, #tpu.memory_space<vmem>>, %arg13: memref<1x1x128xf32, #tpu.memory_space<vmem>>, %arg14: memref<1x128xf32, #tpu.memory_space<vmem>>, %arg15: memref<1x128xf32, #tpu.memory_space<vmem>>, %arg16: memref<128x128xf32, #tpu.memory_space<vmem>>, %arg17: memref<128x128xf32, #tpu.memory_space<vmem>>) attributes {dimension_semantics = [#tpu.dimension_semantics<arbitrary>], iteration_bounds = array<i64: 2>, scalar_prefetch = 0 : i64, scratch_operands = 1 : i64, tpu.core_type = #tpu.core_type<tc>, window_params = [{pipeline_mode = #tpu.pipeline_mode<synchronous>, transform_indices = @transform_0, window_bounds = array<i64: 128, 128>}, {transform_indices = @transform_1, window_bounds = array<i64: 1, 1, 128>}, {transform_indices = @transform_2, window_bounds = array<i64: 1, 1, 128>}, {transform_indices = @transform_3, window_bounds = array<i64: 1, 128, 384>}, {transform_indices = @transform_4, window_bounds = array<i64: 1, 1, 384>}, {transform_indices = @transform_5, window_bounds = array<i64: 1, 128, 128>}, {transform_indices = @transform_6, window_bounds = array<i64: 1, 1, 128>}, {transform_indices = @transform_7, window_bounds = array<i64: 1, 1, 128>}, {transform_indices = @transform_8, window_bounds = array<i64: 1, 1, 128>}, {transform_indices = @transform_9, window_bounds = array<i64: 1, 128, 256>}, {transform_indices = @transform_10, window_bounds = array<i64: 1, 1, 256>}, {transform_indices = @transform_11, window_bounds = array<i64: 1, 256, 128>}, {transform_indices = @transform_12, window_bounds = array<i64: 1, 1, 128>}, {pipeline_mode = #tpu.pipeline_mode<synchronous>, transform_indices = @transform_13, window_bounds = array<i64: 1, 128>}, {pipeline_mode = #tpu.pipeline_mode<synchronous>, transform_indices = @transform_14, window_bounds = array<i64: 1, 128>}, {pipeline_mode = #tpu.pipeline_mode<synchronous>, transform_indices = @transform_15, window_bounds = array<i64: 128, 128>}]} {
    %c0_i32 = arith.constant 0 : i32
    %0 = arith.cmpi eq, %arg0, %c0_i32 : i32
    %1 = arith.extui %0 : i1 to i32
    %c0_i32_0 = arith.constant 0 : i32
    %2 = arith.cmpi ne, %1, %c0_i32_0 : i32
    scf.if %2 {
      %c0_95 = arith.constant 0 : index
      %c0_96 = arith.constant 0 : index
      %234 = vector.load %arg1[%c0_95, %c0_96] : memref<128x128xf32, #tpu.memory_space<vmem>>, vector<128x128xf32>
      %c0_97 = arith.constant 0 : index
      %c0_98 = arith.constant 0 : index
      %235 = vector.load %arg17[%c0_97, %c0_98] : memref<128x128xf32, #tpu.memory_space<vmem>>, vector<128x128xf32>
      tpu.vector_store %arg17[%c0_97, %c0_98], %234 {strides = array<i32>} : memref<128x128xf32, #tpu.memory_space<vmem>>, vector<128x128xf32>,
    } else {
    }
    %c0 = arith.constant 0 : index
    %c0_1 = arith.constant 0 : index
    %3 = vector.load %arg17[%c0, %c0_1] : memref<128x128xf32, #tpu.memory_space<vmem>>, vector<128x128xf32>
    %c0_2 = arith.constant 0 : index
    %c0_3 = arith.constant 0 : index
    %c0_4 = arith.constant 0 : index
    %4 = vector.load %arg2[%c0_2, %c0_3, %c0_4] : memref<1x1x128xf32, #tpu.memory_space<vmem>>, vector<1x1x128xf32>
    %5 = vector.shape_cast %4 : vector<1x1x128xf32> to vector<1x128xf32>
    %c0_5 = arith.constant 0 : index
    %c0_6 = arith.constant 0 : index
    %c0_7 = arith.constant 0 : index
    %6 = vector.load %arg3[%c0_5, %c0_6, %c0_7] : memref<1x1x128xf32, #tpu.memory_space<vmem>>, vector<1x1x128xf32>
    %7 = vector.shape_cast %6 : vector<1x1x128xf32> to vector<1x128xf32>
    %cst = arith.constant dense<0.000000e+00> : vector<128xf32>
    %8 = vector.multi_reduction <add>, %3, %cst [1] : vector<128x128xf32> to vector<128xf32>
    %9 = vector.shape_cast %8 : vector<128xf32> to vector<128x1xf32>
    %cst_8 = arith.constant 1.280000e+02 : f32
    %10 = vector.broadcast %cst_8 : f32 to vector<128x1xf32>
    %11 = arith.divf %9, %10 : vector<128x1xf32>
    %12 = vector.broadcast %11 : vector<128x1xf32> to vector<128x128xf32>
    %13 = arith.subf %3, %12 : vector<128x128xf32>
    %14 = arith.mulf %13, %13 : vector<128x128xf32>
    %cst_9 = arith.constant dense<0.000000e+00> : vector<128xf32>
    %15 = vector.multi_reduction <add>, %14, %cst_9 [1] : vector<128x128xf32> to vector<128xf32>
    %16 = vector.shape_cast %15 : vector<128xf32> to vector<128x1xf32>
    %cst_10 = arith.constant 1.280000e+02 : f32
    %17 = vector.broadcast %cst_10 : f32 to vector<128x1xf32>
    %18 = arith.divf %16, %17 : vector<128x1xf32>
    %19 = vector.broadcast %11 : vector<128x1xf32> to vector<128x128xf32>
    %20 = arith.subf %3, %19 : vector<128x128xf32>
    %cst_11 = arith.constant 9.99999974E-6 : f32
    %21 = vector.broadcast %cst_11 : f32 to vector<128x1xf32>
    %22 = arith.addf %18, %21 : vector<128x1xf32>
    %23 = math.rsqrt %22 : vector<128x1xf32>
    %24 = vector.broadcast %23 : vector<128x1xf32> to vector<128x128xf32>
    %25 = arith.mulf %20, %24 : vector<128x128xf32>
    %26 = vector.broadcast %5 : vector<1x128xf32> to vector<128x128xf32>
    %27 = arith.mulf %25, %26 : vector<128x128xf32>
    %28 = vector.broadcast %7 : vector<1x128xf32> to vector<128x128xf32>
    %29 = arith.addf %27, %28 : vector<128x128xf32>
    %c0_12 = arith.constant 0 : index
    %c0_13 = arith.constant 0 : index
    %c0_14 = arith.constant 0 : index
    %30 = vector.load %arg4[%c0_12, %c0_13, %c0_14] : memref<1x128x384xf32, #tpu.memory_space<vmem>>, vector<1x128x384xf32>
    %31 = vector.shape_cast %30 : vector<1x128x384xf32> to vector<128x384xf32>
    %cst_15 = arith.constant dense<0.000000e+00> : vector<128x384xf32>
    %32 = tpu.matmul %29, %31, %cst_15 {dimension_numbers = #tpu.dot_dimension_numbers<[1], [0], [0], [1], [0, 0, 1, 1], [], []>} : vector<128x128xf32>, vector<128x384xf32>, vector<128x384xf32> -> vector<128x384xf32>
    %c0_16 = arith.constant 0 : index
    %c0_17 = arith.constant 0 : index
    %c0_18 = arith.constant 0 : index
    %33 = vector.load %arg5[%c0_16, %c0_17, %c0_18] : memref<1x1x384xf32, #tpu.memory_space<vmem>>, vector<1x1x384xf32>
    %34 = vector.shape_cast %33 : vector<1x1x384xf32> to vector<1x384xf32>
    %35 = vector.broadcast %34 : vector<1x384xf32> to vector<128x384xf32>
    %36 = arith.addf %32, %35 : vector<128x384xf32>
    %37 = vector.extract_strided_slice %36 {offsets = [0, 0], sizes = [128, 128], strides = [1, 1]} : vector<128x384xf32> to vector<128x128xf32>
    %38 = vector.extract_strided_slice %36 {offsets = [0, 128], sizes = [128, 128], strides = [1, 1]} : vector<128x384xf32> to vector<128x128xf32>
    %39 = vector.extract_strided_slice %36 {offsets = [0, 256], sizes = [128, 128], strides = [1, 1]} : vector<128x384xf32> to vector<128x128xf32>
    %40 = vector.extract_strided_slice %37 {offsets = [0, 0], sizes = [64, 32], strides = [1, 1]} : vector<128x128xf32> to vector<64x32xf32>
    %41 = vector.extract_strided_slice %38 {offsets = [0, 0], sizes = [64, 32], strides = [1, 1]} : vector<128x128xf32> to vector<64x32xf32>
    %42 = vector.extract_strided_slice %39 {offsets = [0, 0], sizes = [64, 32], strides = [1, 1]} : vector<128x128xf32> to vector<64x32xf32>
    "tpu.trace_start"() <{level = 10 : i32, message = "qd,kd->qk"}> : () -> ()
    %cst_19 = arith.constant dense<0.000000e+00> : vector<64x64xf32>
    %43 = tpu.matmul %40, %41, %cst_19 {dimension_numbers = #tpu.dot_dimension_numbers<[1], [1], [0], [0], [0, 0, 1, 0], [], []>} : vector<64x32xf32>, vector<64x32xf32>, vector<64x64xf32> -> vector<64x64xf32>
    "tpu.trace_stop"() : () -> ()
    %cst_20 = arith.constant 0.176776692 : f32
    %44 = vector.broadcast %cst_20 : f32 to vector<64x64xf32>
    %45 = arith.mulf %43, %44 : vector<64x64xf32>
    %cst_21 = arith.constant dense<0xFF800000> : vector<64xf32>
    %46 = vector.multi_reduction <maximumf>, %45, %cst_21 [1] : vector<64x64xf32> to vector<64xf32>
    %47 = vector.shape_cast %46 : vector<64xf32> to vector<64x1xf32>
    %48 = vector.broadcast %47 : vector<64x1xf32> to vector<64x64xf32>
    %49 = arith.subf %45, %48 : vector<64x64xf32>
    %50 = math.exp %49 : vector<64x64xf32>
    %cst_22 = arith.constant dense<0.000000e+00> : vector<64xf32>
    %51 = vector.multi_reduction <add>, %50, %cst_22 [1] : vector<64x64xf32> to vector<64xf32>
    %52 = vector.shape_cast %51 : vector<64xf32> to vector<64x1xf32>
    %53 = tpu.reciprocal %52 {approx = true} : vector<64x1xf32> -> vector<64x1xf32>
    %54 = vector.broadcast %53 : vector<64x1xf32> to vector<64x64xf32>
    %55 = arith.mulf %50, %54 : vector<64x64xf32>
    %cst_23 = arith.constant dense<0.000000e+00> : vector<64x32xf32>
    %56 = tpu.matmul %55, %42, %cst_23 {dimension_numbers = #tpu.dot_dimension_numbers<[1], [0], [0], [1], [0, 0, 1, 1], [], []>} : vector<64x64xf32>, vector<64x32xf32>, vector<64x32xf32> -> vector<64x32xf32>
    %57 = vector.extract_strided_slice %37 {offsets = [0, 32], sizes = [64, 32], strides = [1, 1]} : vector<128x128xf32> to vector<64x32xf32>
    %58 = vector.extract_strided_slice %38 {offsets = [0, 32], sizes = [64, 32], strides = [1, 1]} : vector<128x128xf32> to vector<64x32xf32>
    %59 = vector.extract_strided_slice %39 {offsets = [0, 32], sizes = [64, 32], strides = [1, 1]} : vector<128x128xf32> to vector<64x32xf32>
    "tpu.trace_start"() <{level = 10 : i32, message = "qd,kd->qk"}> : () -> ()
    %cst_24 = arith.constant dense<0.000000e+00> : vector<64x64xf32>
    %60 = tpu.matmul %57, %58, %cst_24 {dimension_numbers = #tpu.dot_dimension_numbers<[1], [1], [0], [0], [0, 0, 1, 0], [], []>} : vector<64x32xf32>, vector<64x32xf32>, vector<64x64xf32> -> vector<64x64xf32>
    "tpu.trace_stop"() : () -> ()
    %cst_25 = arith.constant 0.176776692 : f32
    %61 = vector.broadcast %cst_25 : f32 to vector<64x64xf32>
    %62 = arith.mulf %60, %61 : vector<64x64xf32>
    %cst_26 = arith.constant dense<0xFF800000> : vector<64xf32>
    %63 = vector.multi_reduction <maximumf>, %62, %cst_26 [1] : vector<64x64xf32> to vector<64xf32>
    %64 = vector.shape_cast %63 : vector<64xf32> to vector<64x1xf32>
    %65 = vector.broadcast %64 : vector<64x1xf32> to vector<64x64xf32>
    %66 = arith.subf %62, %65 : vector<64x64xf32>
    %67 = math.exp %66 : vector<64x64xf32>
    %cst_27 = arith.constant dense<0.000000e+00> : vector<64xf32>
    %68 = vector.multi_reduction <add>, %67, %cst_27 [1] : vector<64x64xf32> to vector<64xf32>
    %69 = vector.shape_cast %68 : vector<64xf32> to vector<64x1xf32>
    %70 = tpu.reciprocal %69 {approx = true} : vector<64x1xf32> -> vector<64x1xf32>
    %71 = vector.broadcast %70 : vector<64x1xf32> to vector<64x64xf32>
    %72 = arith.mulf %67, %71 : vector<64x64xf32>
    %cst_28 = arith.constant dense<0.000000e+00> : vector<64x32xf32>
    %73 = tpu.matmul %72, %59, %cst_28 {dimension_numbers = #tpu.dot_dimension_numbers<[1], [0], [0], [1], [0, 0, 1, 1], [], []>} : vector<64x64xf32>, vector<64x32xf32>, vector<64x32xf32> -> vector<64x32xf32>
    %74 = vector.extract_strided_slice %37 {offsets = [0, 64], sizes = [64, 32], strides = [1, 1]} : vector<128x128xf32> to vector<64x32xf32>
    %75 = vector.extract_strided_slice %38 {offsets = [0, 64], sizes = [64, 32], strides = [1, 1]} : vector<128x128xf32> to vector<64x32xf32>
    %76 = vector.extract_strided_slice %39 {offsets = [0, 64], sizes = [64, 32], strides = [1, 1]} : vector<128x128xf32> to vector<64x32xf32>
    "tpu.trace_start"() <{level = 10 : i32, message = "qd,kd->qk"}> : () -> ()
    %cst_29 = arith.constant dense<0.000000e+00> : vector<64x64xf32>
    %77 = tpu.matmul %74, %75, %cst_29 {dimension_numbers = #tpu.dot_dimension_numbers<[1], [1], [0], [0], [0, 0, 1, 0], [], []>} : vector<64x32xf32>, vector<64x32xf32>, vector<64x64xf32> -> vector<64x64xf32>
    "tpu.trace_stop"() : () -> ()
    %cst_30 = arith.constant 0.176776692 : f32
    %78 = vector.broadcast %cst_30 : f32 to vector<64x64xf32>
    %79 = arith.mulf %77, %78 : vector<64x64xf32>
    %cst_31 = arith.constant dense<0xFF800000> : vector<64xf32>
    %80 = vector.multi_reduction <maximumf>, %79, %cst_31 [1] : vector<64x64xf32> to vector<64xf32>
    %81 = vector.shape_cast %80 : vector<64xf32> to vector<64x1xf32>
    %82 = vector.broadcast %81 : vector<64x1xf32> to vector<64x64xf32>
    %83 = arith.subf %79, %82 : vector<64x64xf32>
    %84 = math.exp %83 : vector<64x64xf32>
    %cst_32 = arith.constant dense<0.000000e+00> : vector<64xf32>
    %85 = vector.multi_reduction <add>, %84, %cst_32 [1] : vector<64x64xf32> to vector<64xf32>
    %86 = vector.shape_cast %85 : vector<64xf32> to vector<64x1xf32>
    %87 = tpu.reciprocal %86 {approx = true} : vector<64x1xf32> -> vector<64x1xf32>
    %88 = vector.broadcast %87 : vector<64x1xf32> to vector<64x64xf32>
    %89 = arith.mulf %84, %88 : vector<64x64xf32>
    %cst_33 = arith.constant dense<0.000000e+00> : vector<64x32xf32>
    %90 = tpu.matmul %89, %76, %cst_33 {dimension_numbers = #tpu.dot_dimension_numbers<[1], [0], [0], [1], [0, 0, 1, 1], [], []>} : vector<64x64xf32>, vector<64x32xf32>, vector<64x32xf32> -> vector<64x32xf32>
    %91 = vector.extract_strided_slice %37 {offsets = [0, 96], sizes = [64, 32], strides = [1, 1]} : vector<128x128xf32> to vector<64x32xf32>
    %92 = vector.extract_strided_slice %38 {offsets = [0, 96], sizes = [64, 32], strides = [1, 1]} : vector<128x128xf32> to vector<64x32xf32>
    %93 = vector.extract_strided_slice %39 {offsets = [0, 96], sizes = [64, 32], strides = [1, 1]} : vector<128x128xf32> to vector<64x32xf32>
    "tpu.trace_start"() <{level = 10 : i32, message = "qd,kd->qk"}> : () -> ()
    %cst_34 = arith.constant dense<0.000000e+00> : vector<64x64xf32>
    %94 = tpu.matmul %91, %92, %cst_34 {dimension_numbers = #tpu.dot_dimension_numbers<[1], [1], [0], [0], [0, 0, 1, 0], [], []>} : vector<64x32xf32>, vector<64x32xf32>, vector<64x64xf32> -> vector<64x64xf32>
    "tpu.trace_stop"() : () -> ()
    %cst_35 = arith.constant 0.176776692 : f32
    %95 = vector.broadcast %cst_35 : f32 to vector<64x64xf32>
    %96 = arith.mulf %94, %95 : vector<64x64xf32>
    %cst_36 = arith.constant dense<0xFF800000> : vector<64xf32>
    %97 = vector.multi_reduction <maximumf>, %96, %cst_36 [1] : vector<64x64xf32> to vector<64xf32>
    %98 = vector.shape_cast %97 : vector<64xf32> to vector<64x1xf32>
    %99 = vector.broadcast %98 : vector<64x1xf32> to vector<64x64xf32>
    %100 = arith.subf %96, %99 : vector<64x64xf32>
    %101 = math.exp %100 : vector<64x64xf32>
    %cst_37 = arith.constant dense<0.000000e+00> : vector<64xf32>
    %102 = vector.multi_reduction <add>, %101, %cst_37 [1] : vector<64x64xf32> to vector<64xf32>
    %103 = vector.shape_cast %102 : vector<64xf32> to vector<64x1xf32>
    %104 = tpu.reciprocal %103 {approx = true} : vector<64x1xf32> -> vector<64x1xf32>
    %105 = vector.broadcast %104 : vector<64x1xf32> to vector<64x64xf32>
    %106 = arith.mulf %101, %105 : vector<64x64xf32>
    %cst_38 = arith.constant dense<0.000000e+00> : vector<64x32xf32>
    %107 = tpu.matmul %106, %93, %cst_38 {dimension_numbers = #tpu.dot_dimension_numbers<[1], [0], [0], [1], [0, 0, 1, 1], [], []>} : vector<64x64xf32>, vector<64x32xf32>, vector<64x32xf32> -> vector<64x32xf32>
    %108 = tpu.concatenate %56, %73, %90, %107 in 1 : vector<64x32xf32>, vector<64x32xf32>, vector<64x32xf32>, vector<64x32xf32> -> vector<64x128xf32>
    %109 = vector.extract_strided_slice %37 {offsets = [64, 0], sizes = [64, 32], strides = [1, 1]} : vector<128x128xf32> to vector<64x32xf32>
    %110 = vector.extract_strided_slice %38 {offsets = [64, 0], sizes = [64, 32], strides = [1, 1]} : vector<128x128xf32> to vector<64x32xf32>
    %111 = vector.extract_strided_slice %39 {offsets = [64, 0], sizes = [64, 32], strides = [1, 1]} : vector<128x128xf32> to vector<64x32xf32>
    "tpu.trace_start"() <{level = 10 : i32, message = "qd,kd->qk"}> : () -> ()
    %cst_39 = arith.constant dense<0.000000e+00> : vector<64x64xf32>
    %112 = tpu.matmul %109, %110, %cst_39 {dimension_numbers = #tpu.dot_dimension_numbers<[1], [1], [0], [0], [0, 0, 1, 0], [], []>} : vector<64x32xf32>, vector<64x32xf32>, vector<64x64xf32> -> vector<64x64xf32>
    "tpu.trace_stop"() : () -> ()
    %cst_40 = arith.constant 0.176776692 : f32
    %113 = vector.broadcast %cst_40 : f32 to vector<64x64xf32>
    %114 = arith.mulf %112, %113 : vector<64x64xf32>
    %cst_41 = arith.constant dense<0xFF800000> : vector<64xf32>
    %115 = vector.multi_reduction <maximumf>, %114, %cst_41 [1] : vector<64x64xf32> to vector<64xf32>
    %116 = vector.shape_cast %115 : vector<64xf32> to vector<64x1xf32>
    %117 = vector.broadcast %116 : vector<64x1xf32> to vector<64x64xf32>
    %118 = arith.subf %114, %117 : vector<64x64xf32>
    %119 = math.exp %118 : vector<64x64xf32>
    %cst_42 = arith.constant dense<0.000000e+00> : vector<64xf32>
    %120 = vector.multi_reduction <add>, %119, %cst_42 [1] : vector<64x64xf32> to vector<64xf32>
    %121 = vector.shape_cast %120 : vector<64xf32> to vector<64x1xf32>
    %122 = tpu.reciprocal %121 {approx = true} : vector<64x1xf32> -> vector<64x1xf32>
    %123 = vector.broadcast %122 : vector<64x1xf32> to vector<64x64xf32>
    %124 = arith.mulf %119, %123 : vector<64x64xf32>
    %cst_43 = arith.constant dense<0.000000e+00> : vector<64x32xf32>
    %125 = tpu.matmul %124, %111, %cst_43 {dimension_numbers = #tpu.dot_dimension_numbers<[1], [0], [0], [1], [0, 0, 1, 1], [], []>} : vector<64x64xf32>, vector<64x32xf32>, vector<64x32xf32> -> vector<64x32xf32>
    %126 = vector.extract_strided_slice %37 {offsets = [64, 32], sizes = [64, 32], strides = [1, 1]} : vector<128x128xf32> to vector<64x32xf32>
    %127 = vector.extract_strided_slice %38 {offsets = [64, 32], sizes = [64, 32], strides = [1, 1]} : vector<128x128xf32> to vector<64x32xf32>
    %128 = vector.extract_strided_slice %39 {offsets = [64, 32], sizes = [64, 32], strides = [1, 1]} : vector<128x128xf32> to vector<64x32xf32>
    "tpu.trace_start"() <{level = 10 : i32, message = "qd,kd->qk"}> : () -> ()
    %cst_44 = arith.constant dense<0.000000e+00> : vector<64x64xf32>
    %129 = tpu.matmul %126, %127, %cst_44 {dimension_numbers = #tpu.dot_dimension_numbers<[1], [1], [0], [0], [0, 0, 1, 0], [], []>} : vector<64x32xf32>, vector<64x32xf32>, vector<64x64xf32> -> vector<64x64xf32>
    "tpu.trace_stop"() : () -> ()
    %cst_45 = arith.constant 0.176776692 : f32
    %130 = vector.broadcast %cst_45 : f32 to vector<64x64xf32>
    %131 = arith.mulf %129, %130 : vector<64x64xf32>
    %cst_46 = arith.constant dense<0xFF800000> : vector<64xf32>
    %132 = vector.multi_reduction <maximumf>, %131, %cst_46 [1] : vector<64x64xf32> to vector<64xf32>
    %133 = vector.shape_cast %132 : vector<64xf32> to vector<64x1xf32>
    %134 = vector.broadcast %133 : vector<64x1xf32> to vector<64x64xf32>
    %135 = arith.subf %131, %134 : vector<64x64xf32>
    %136 = math.exp %135 : vector<64x64xf32>
    %cst_47 = arith.constant dense<0.000000e+00> : vector<64xf32>
    %137 = vector.multi_reduction <add>, %136, %cst_47 [1] : vector<64x64xf32> to vector<64xf32>
    %138 = vector.shape_cast %137 : vector<64xf32> to vector<64x1xf32>
    %139 = tpu.reciprocal %138 {approx = true} : vector<64x1xf32> -> vector<64x1xf32>
    %140 = vector.broadcast %139 : vector<64x1xf32> to vector<64x64xf32>
    %141 = arith.mulf %136, %140 : vector<64x64xf32>
    %cst_48 = arith.constant dense<0.000000e+00> : vector<64x32xf32>
    %142 = tpu.matmul %141, %128, %cst_48 {dimension_numbers = #tpu.dot_dimension_numbers<[1], [0], [0], [1], [0, 0, 1, 1], [], []>} : vector<64x64xf32>, vector<64x32xf32>, vector<64x32xf32> -> vector<64x32xf32>
    %143 = vector.extract_strided_slice %37 {offsets = [64, 64], sizes = [64, 32], strides = [1, 1]} : vector<128x128xf32> to vector<64x32xf32>
    %144 = vector.extract_strided_slice %38 {offsets = [64, 64], sizes = [64, 32], strides = [1, 1]} : vector<128x128xf32> to vector<64x32xf32>
    %145 = vector.extract_strided_slice %39 {offsets = [64, 64], sizes = [64, 32], strides = [1, 1]} : vector<128x128xf32> to vector<64x32xf32>
    "tpu.trace_start"() <{level = 10 : i32, message = "qd,kd->qk"}> : () -> ()
    %cst_49 = arith.constant dense<0.000000e+00> : vector<64x64xf32>
    %146 = tpu.matmul %143, %144, %cst_49 {dimension_numbers = #tpu.dot_dimension_numbers<[1], [1], [0], [0], [0, 0, 1, 0], [], []>} : vector<64x32xf32>, vector<64x32xf32>, vector<64x64xf32> -> vector<64x64xf32>
    "tpu.trace_stop"() : () -> ()
    %cst_50 = arith.constant 0.176776692 : f32
    %147 = vector.broadcast %cst_50 : f32 to vector<64x64xf32>
    %148 = arith.mulf %146, %147 : vector<64x64xf32>
    %cst_51 = arith.constant dense<0xFF800000> : vector<64xf32>
    %149 = vector.multi_reduction <maximumf>, %148, %cst_51 [1] : vector<64x64xf32> to vector<64xf32>
    %150 = vector.shape_cast %149 : vector<64xf32> to vector<64x1xf32>
    %151 = vector.broadcast %150 : vector<64x1xf32> to vector<64x64xf32>
    %152 = arith.subf %148, %151 : vector<64x64xf32>
    %153 = math.exp %152 : vector<64x64xf32>
    %cst_52 = arith.constant dense<0.000000e+00> : vector<64xf32>
    %154 = vector.multi_reduction <add>, %153, %cst_52 [1] : vector<64x64xf32> to vector<64xf32>
    %155 = vector.shape_cast %154 : vector<64xf32> to vector<64x1xf32>
    %156 = tpu.reciprocal %155 {approx = true} : vector<64x1xf32> -> vector<64x1xf32>
    %157 = vector.broadcast %156 : vector<64x1xf32> to vector<64x64xf32>
    %158 = arith.mulf %153, %157 : vector<64x64xf32>
    %cst_53 = arith.constant dense<0.000000e+00> : vector<64x32xf32>
    %159 = tpu.matmul %158, %145, %cst_53 {dimension_numbers = #tpu.dot_dimension_numbers<[1], [0], [0], [1], [0, 0, 1, 1], [], []>} : vector<64x64xf32>, vector<64x32xf32>, vector<64x32xf32> -> vector<64x32xf32>
    %160 = vector.extract_strided_slice %37 {offsets = [64, 96], sizes = [64, 32], strides = [1, 1]} : vector<128x128xf32> to vector<64x32xf32>
    %161 = vector.extract_strided_slice %38 {offsets = [64, 96], sizes = [64, 32], strides = [1, 1]} : vector<128x128xf32> to vector<64x32xf32>
    %162 = vector.extract_strided_slice %39 {offsets = [64, 96], sizes = [64, 32], strides = [1, 1]} : vector<128x128xf32> to vector<64x32xf32>
    "tpu.trace_start"() <{level = 10 : i32, message = "qd,kd->qk"}> : () -> ()
    %cst_54 = arith.constant dense<0.000000e+00> : vector<64x64xf32>
    %163 = tpu.matmul %160, %161, %cst_54 {dimension_numbers = #tpu.dot_dimension_numbers<[1], [1], [0], [0], [0, 0, 1, 0], [], []>} : vector<64x32xf32>, vector<64x32xf32>, vector<64x64xf32> -> vector<64x64xf32>
    "tpu.trace_stop"() : () -> ()
    %cst_55 = arith.constant 0.176776692 : f32
    %164 = vector.broadcast %cst_55 : f32 to vector<64x64xf32>
    %165 = arith.mulf %163, %164 : vector<64x64xf32>
    %cst_56 = arith.constant dense<0xFF800000> : vector<64xf32>
    %166 = vector.multi_reduction <maximumf>, %165, %cst_56 [1] : vector<64x64xf32> to vector<64xf32>
    %167 = vector.shape_cast %166 : vector<64xf32> to vector<64x1xf32>
    %168 = vector.broadcast %167 : vector<64x1xf32> to vector<64x64xf32>
    %169 = arith.subf %165, %168 : vector<64x64xf32>
    %170 = math.exp %169 : vector<64x64xf32>
    %cst_57 = arith.constant dense<0.000000e+00> : vector<64xf32>
    %171 = vector.multi_reduction <add>, %170, %cst_57 [1] : vector<64x64xf32> to vector<64xf32>
    %172 = vector.shape_cast %171 : vector<64xf32> to vector<64x1xf32>
    %173 = tpu.reciprocal %172 {approx = true} : vector<64x1xf32> -> vector<64x1xf32>
    %174 = vector.broadcast %173 : vector<64x1xf32> to vector<64x64xf32>
    %175 = arith.mulf %170, %174 : vector<64x64xf32>
    %cst_58 = arith.constant dense<0.000000e+00> : vector<64x32xf32>
    %176 = tpu.matmul %175, %162, %cst_58 {dimension_numbers = #tpu.dot_dimension_numbers<[1], [0], [0], [1], [0, 0, 1, 1], [], []>} : vector<64x64xf32>, vector<64x32xf32>, vector<64x32xf32> -> vector<64x32xf32>
    %177 = tpu.concatenate %125, %142, %159, %176 in 1 : vector<64x32xf32>, vector<64x32xf32>, vector<64x32xf32>, vector<64x32xf32> -> vector<64x128xf32>
    %178 = tpu.concatenate %108, %177 in 0 : vector<64x128xf32>, vector<64x128xf32> -> vector<128x128xf32>
    %c0_59 = arith.constant 0 : index
    %c0_60 = arith.constant 0 : index
    %c0_61 = arith.constant 0 : index
    %179 = vector.load %arg6[%c0_59, %c0_60, %c0_61] : memref<1x128x128xf32, #tpu.memory_space<vmem>>, vector<1x128x128xf32>
    %180 = vector.shape_cast %179 : vector<1x128x128xf32> to vector<128x128xf32>
    %cst_62 = arith.constant dense<0.000000e+00> : vector<128x128xf32>
    %181 = tpu.matmul %178, %180, %cst_62 {dimension_numbers = #tpu.dot_dimension_numbers<[1], [0], [0], [1], [0, 0, 1, 1], [], []>} : vector<128x128xf32>, vector<128x128xf32>, vector<128x128xf32> -> vector<128x128xf32>
    %182 = arith.addf %3, %181 : vector<128x128xf32>
    %c0_63 = arith.constant 0 : index
    %c0_64 = arith.constant 0 : index
    %c0_65 = arith.constant 0 : index
    %183 = vector.load %arg7[%c0_63, %c0_64, %c0_65] : memref<1x1x128xf32, #tpu.memory_space<vmem>>, vector<1x1x128xf32>
    %184 = vector.shape_cast %183 : vector<1x1x128xf32> to vector<1x128xf32>
    %185 = vector.broadcast %184 : vector<1x128xf32> to vector<128x128xf32>
    %186 = arith.addf %182, %185 : vector<128x128xf32>
    %c0_66 = arith.constant 0 : index
    %c0_67 = arith.constant 0 : index
    %c0_68 = arith.constant 0 : index
    %187 = vector.load %arg8[%c0_66, %c0_67, %c0_68] : memref<1x1x128xf32, #tpu.memory_space<vmem>>, vector<1x1x128xf32>
    %188 = vector.shape_cast %187 : vector<1x1x128xf32> to vector<1x128xf32>
    %c0_69 = arith.constant 0 : index
    %c0_70 = arith.constant 0 : index
    %c0_71 = arith.constant 0 : index
    %189 = vector.load %arg9[%c0_69, %c0_70, %c0_71] : memref<1x1x128xf32, #tpu.memory_space<vmem>>, vector<1x1x128xf32>
    %190 = vector.shape_cast %189 : vector<1x1x128xf32> to vector<1x128xf32>
    %cst_72 = arith.constant dense<0.000000e+00> : vector<128xf32>
    %191 = vector.multi_reduction <add>, %186, %cst_72 [1] : vector<128x128xf32> to vector<128xf32>
    %192 = vector.shape_cast %191 : vector<128xf32> to vector<128x1xf32>
    %cst_73 = arith.constant 1.280000e+02 : f32
    %193 = vector.broadcast %cst_73 : f32 to vector<128x1xf32>
    %194 = arith.divf %192, %193 : vector<128x1xf32>
    %195 = vector.broadcast %194 : vector<128x1xf32> to vector<128x128xf32>
    %196 = arith.subf %186, %195 : vector<128x128xf32>
    %197 = arith.mulf %196, %196 : vector<128x128xf32>
    %cst_74 = arith.constant dense<0.000000e+00> : vector<128xf32>
    %198 = vector.multi_reduction <add>, %197, %cst_74 [1] : vector<128x128xf32> to vector<128xf32>
    %199 = vector.shape_cast %198 : vector<128xf32> to vector<128x1xf32>
    %cst_75 = arith.constant 1.280000e+02 : f32
    %200 = vector.broadcast %cst_75 : f32 to vector<128x1xf32>
    %201 = arith.divf %199, %200 : vector<128x1xf32>
    %202 = vector.broadcast %194 : vector<128x1xf32> to vector<128x128xf32>
    %203 = arith.subf %186, %202 : vector<128x128xf32>
    %cst_76 = arith.constant 9.99999974E-6 : f32
    %204 = vector.broadcast %cst_76 : f32 to vector<128x1xf32>
    %205 = arith.addf %201, %204 : vector<128x1xf32>
    %206 = math.rsqrt %205 : vector<128x1xf32>
    %207 = vector.broadcast %206 : vector<128x1xf32> to vector<128x128xf32>
    %208 = arith.mulf %203, %207 : vector<128x128xf32>
    %209 = vector.broadcast %188 : vector<1x128xf32> to vector<128x128xf32>
    %210 = arith.mulf %208, %209 : vector<128x128xf32>
    %211 = vector.broadcast %190 : vector<1x128xf32> to vector<128x128xf32>
    %212 = arith.addf %210, %211 : vector<128x128xf32>
    %c0_77 = arith.constant 0 : index
    %c0_78 = arith.constant 0 : index
    %c0_79 = arith.constant 0 : index
    %213 = vector.load %arg10[%c0_77, %c0_78, %c0_79] : memref<1x128x256xf32, #tpu.memory_space<vmem>>, vector<1x128x256xf32>
    %214 = vector.shape_cast %213 : vector<1x128x256xf32> to vector<128x256xf32>
    %cst_80 = arith.constant dense<0.000000e+00> : vector<128x256xf32>
    %215 = tpu.matmul %212, %214, %cst_80 {dimension_numbers = #tpu.dot_dimension_numbers<[1], [0], [0], [1], [0, 0, 1, 1], [], []>} : vector<128x128xf32>, vector<128x256xf32>, vector<128x256xf32> -> vector<128x256xf32>
    %c0_81 = arith.constant 0 : index
    %c0_82 = arith.constant 0 : index
    %c0_83 = arith.constant 0 : index
    %216 = vector.load %arg11[%c0_81, %c0_82, %c0_83] : memref<1x1x256xf32, #tpu.memory_space<vmem>>, vector<1x1x256xf32>
    %217 = vector.shape_cast %216 : vector<1x1x256xf32> to vector<1x256xf32>
    %218 = vector.broadcast %217 : vector<1x256xf32> to vector<128x256xf32>
    %219 = arith.addf %215, %218 : vector<128x256xf32>
    %cst_84 = arith.constant 0.000000e+00 : f32
    %220 = vector.broadcast %cst_84 : f32 to vector<128x256xf32>
    %221 = arith.maximumf %219, %220 : vector<128x256xf32>
    %c0_85 = arith.constant 0 : index
    %c0_86 = arith.constant 0 : index
    %c0_87 = arith.constant 0 : index
    %222 = vector.load %arg12[%c0_85, %c0_86, %c0_87] : memref<1x256x128xf32, #tpu.memory_space<vmem>>, vector<1x256x128xf32>
    %223 = vector.shape_cast %222 : vector<1x256x128xf32> to vector<256x128xf32>
    %cst_88 = arith.constant dense<0.000000e+00> : vector<128x128xf32>
    %224 = tpu.matmul %221, %223, %cst_88 {dimension_numbers = #tpu.dot_dimension_numbers<[1], [0], [0], [1], [0, 0, 1, 1], [], []>} : vector<128x256xf32>, vector<256x128xf32>, vector<128x128xf32> -> vector<128x128xf32>
    %225 = arith.addf %186, %224 : vector<128x128xf32>
    %c0_89 = arith.constant 0 : index
    %c0_90 = arith.constant 0 : index
    %c0_91 = arith.constant 0 : index
    %226 = vector.load %arg13[%c0_89, %c0_90, %c0_91] : memref<1x1x128xf32, #tpu.memory_space<vmem>>, vector<1x1x128xf32>
    %227 = vector.shape_cast %226 : vector<1x1x128xf32> to vector<1x128xf32>
    %228 = vector.broadcast %227 : vector<1x128xf32> to vector<128x128xf32>
    %229 = arith.addf %225, %228 : vector<128x128xf32>
    %c0_92 = arith.constant 0 : index
    %c0_93 = arith.constant 0 : index
    %230 = vector.load %arg17[%c0_92, %c0_93] : memref<128x128xf32, #tpu.memory_space<vmem>>, vector<128x128xf32>
    tpu.vector_store %arg17[%c0_92, %c0_93], %229 {strides = array<i32>} : memref<128x128xf32, #tpu.memory_space<vmem>>, vector<128x128xf32>,
    %c1_i32 = arith.constant 1 : i32
    %231 = arith.cmpi eq, %arg0, %c1_i32 : i32
    %232 = arith.extui %231 : i1 to i32
    %c0_i32_94 = arith.constant 0 : i32
    %233 = arith.cmpi ne, %232, %c0_i32_94 : i32
    scf.if %233 {
      %c0_95 = arith.constant 0 : index
      %c0_96 = arith.constant 0 : index
      %234 = vector.load %arg14[%c0_95, %c0_96] : memref<1x128xf32, #tpu.memory_space<vmem>>, vector<1x128xf32>
      %c0_97 = arith.constant 0 : index
      %c0_98 = arith.constant 0 : index
      %235 = vector.load %arg15[%c0_97, %c0_98] : memref<1x128xf32, #tpu.memory_space<vmem>>, vector<1x128xf32>
      %cst_99 = arith.constant dense<0.000000e+00> : vector<128xf32>
      %236 = vector.multi_reduction <add>, %229, %cst_99 [1] : vector<128x128xf32> to vector<128xf32>
      %237 = vector.shape_cast %236 : vector<128xf32> to vector<128x1xf32>
      %cst_100 = arith.constant 1.280000e+02 : f32
      %238 = vector.broadcast %cst_100 : f32 to vector<128x1xf32>
      %239 = arith.divf %237, %238 : vector<128x1xf32>
      %240 = vector.broadcast %239 : vector<128x1xf32> to vector<128x128xf32>
      %241 = arith.subf %229, %240 : vector<128x128xf32>
      %242 = arith.mulf %241, %241 : vector<128x128xf32>
      %cst_101 = arith.constant dense<0.000000e+00> : vector<128xf32>
      %243 = vector.multi_reduction <add>, %242, %cst_101 [1] : vector<128x128xf32> to vector<128xf32>
      %244 = vector.shape_cast %243 : vector<128xf32> to vector<128x1xf32>
      %cst_102 = arith.constant 1.280000e+02 : f32
      %245 = vector.broadcast %cst_102 : f32 to vector<128x1xf32>
      %246 = arith.divf %244, %245 : vector<128x1xf32>
      %247 = vector.broadcast %239 : vector<128x1xf32> to vector<128x128xf32>
      %248 = arith.subf %229, %247 : vector<128x128xf32>
      %cst_103 = arith.constant 9.99999974E-6 : f32
      %249 = vector.broadcast %cst_103 : f32 to vector<128x1xf32>
      %250 = arith.addf %246, %249 : vector<128x1xf32>
      %251 = math.rsqrt %250 : vector<128x1xf32>
      %252 = vector.broadcast %251 : vector<128x1xf32> to vector<128x128xf32>
      %253 = arith.mulf %248, %252 : vector<128x128xf32>
      %254 = vector.broadcast %234 : vector<1x128xf32> to vector<128x128xf32>
      %255 = arith.mulf %253, %254 : vector<128x128xf32>
      %256 = vector.broadcast %235 : vector<1x128xf32> to vector<128x128xf32>
      %257 = arith.addf %255, %256 : vector<128x128xf32>
      %c0_104 = arith.constant 0 : index
      %c0_105 = arith.constant 0 : index
      %258 = vector.load %arg16[%c0_104, %c0_105] : memref<128x128xf32, #tpu.memory_space<vmem>>, vector<128x128xf32>
      tpu.vector_store %arg16[%c0_104, %c0_105], %257 {strides = array<i32>} : memref<128x128xf32, #tpu.memory_space<vmem>>, vector<128x128xf32>,
    } else {
    }
    return
  }
  func.func @transform_0(%arg0: i32) -> (i32, i32) {
    %c0_i32 = arith.constant 0 : i32
    %c0_i32_0 = arith.constant 0 : i32
    %c0_i32_1 = arith.constant 0 : i32
    return %c0_i32, %c0_i32_0 : i32, i32
  }
  func.func @transform_1(%arg0: i32) -> (i32, i32, i32) {
    %c0_i32 = arith.constant 0 : i32
    %c0_i32_0 = arith.constant 0 : i32
    %c0_i32_1 = arith.constant 0 : i32
    return %arg0, %c0_i32, %c0_i32_0 : i32, i32, i32
  }
  func.func @transform_2(%arg0: i32) -> (i32, i32, i32) {
    %c0_i32 = arith.constant 0 : i32
    %c0_i32_0 = arith.constant 0 : i32
    %c0_i32_1 = arith.constant 0 : i32
    return %arg0, %c0_i32, %c0_i32_0 : i32, i32, i32
  }
  func.func @transform_3(%arg0: i32) -> (i32, i32, i32) {
    %c0_i32 = arith.constant 0 : i32
    %c0_i32_0 = arith.constant 0 : i32
    %c0_i32_1 = arith.constant 0 : i32
    return %arg0, %c0_i32, %c0_i32_0 : i32, i32, i32
  }
  func.func @transform_4(%arg0: i32) -> (i32, i32, i32) {
    %c0_i32 = arith.constant 0 : i32
    %c0_i32_0 = arith.constant 0 : i32
    %c0_i32_1 = arith.constant 0 : i32
    return %arg0, %c0_i32, %c0_i32_0 : i32, i32, i32
  }
  func.func @transform_5(%arg0: i32) -> (i32, i32, i32) {
    %c0_i32 = arith.constant 0 : i32
    %c0_i32_0 = arith.constant 0 : i32
    %c0_i32_1 = arith.constant 0 : i32
    return %arg0, %c0_i32, %c0_i32_0 : i32, i32, i32
  }
  func.func @transform_6(%arg0: i32) -> (i32, i32, i32) {
    %c0_i32 = arith.constant 0 : i32
    %c0_i32_0 = arith.constant 0 : i32
    %c0_i32_1 = arith.constant 0 : i32
    return %arg0, %c0_i32, %c0_i32_0 : i32, i32, i32
  }
  func.func @transform_7(%arg0: i32) -> (i32, i32, i32) {
    %c0_i32 = arith.constant 0 : i32
    %c0_i32_0 = arith.constant 0 : i32
    %c0_i32_1 = arith.constant 0 : i32
    return %arg0, %c0_i32, %c0_i32_0 : i32, i32, i32
  }
  func.func @transform_8(%arg0: i32) -> (i32, i32, i32) {
    %c0_i32 = arith.constant 0 : i32
    %c0_i32_0 = arith.constant 0 : i32
    %c0_i32_1 = arith.constant 0 : i32
    return %arg0, %c0_i32, %c0_i32_0 : i32, i32, i32
  }
  func.func @transform_9(%arg0: i32) -> (i32, i32, i32) {
    %c0_i32 = arith.constant 0 : i32
    %c0_i32_0 = arith.constant 0 : i32
    %c0_i32_1 = arith.constant 0 : i32
    return %arg0, %c0_i32, %c0_i32_0 : i32, i32, i32
  }
  func.func @transform_10(%arg0: i32) -> (i32, i32, i32) {
    %c0_i32 = arith.constant 0 : i32
    %c0_i32_0 = arith.constant 0 : i32
    %c0_i32_1 = arith.constant 0 : i32
    return %arg0, %c0_i32, %c0_i32_0 : i32, i32, i32
  }
  func.func @transform_11(%arg0: i32) -> (i32, i32, i32) {
    %c0_i32 = arith.constant 0 : i32
    %c0_i32_0 = arith.constant 0 : i32
    %c0_i32_1 = arith.constant 0 : i32
    return %arg0, %c0_i32, %c0_i32_0 : i32, i32, i32
  }
  func.func @transform_12(%arg0: i32) -> (i32, i32, i32) {
    %c0_i32 = arith.constant 0 : i32
    %c0_i32_0 = arith.constant 0 : i32
    %c0_i32_1 = arith.constant 0 : i32
    return %arg0, %c0_i32, %c0_i32_0 : i32, i32, i32
  }
  func.func @transform_13(%arg0: i32) -> (i32, i32) {
    %c0_i32 = arith.constant 0 : i32
    %c0_i32_0 = arith.constant 0 : i32
    %c0_i32_1 = arith.constant 0 : i32
    return %c0_i32, %c0_i32_0 : i32, i32
  }
  func.func @transform_14(%arg0: i32) -> (i32, i32) {
    %c0_i32 = arith.constant 0 : i32
    %c0_i32_0 = arith.constant 0 : i32
    %c0_i32_1 = arith.constant 0 : i32
    return %c0_i32, %c0_i32_0 : i32, i32
  }
  func.func @transform_15(%arg0: i32) -> (i32, i32) {
    %c0_i32 = arith.constant 0 : i32
    %c0_i32_0 = arith.constant 0 : i32
    %c0_i32_1 = arith.constant 0 : i32
    return %c0_i32, %c0_i32_0 : i32, i32
  }
}

</mosaic_0001>

<llo_original>
// kernel: tile.18
$region0: #{tile.18}
  #allocation0 [shape = 's32[1]{0}', space=sflag, size = 0x4, scoped, tag = 'scoped memory for tile.18']
  %s0 = inlined_call_operand.vmem [shape: f32[8], index: 0, kind: input, shape index: {}]
  %s1 = inlined_call_operand.vmem [shape: f32[9,8], index: 1, kind: output, shape index: {}]
  // Predicated region
  $region2: #{tile.18} parent=0 // pred_check
    _
  $region3: #{tile.18} parent=0 // pred_check_branch
    %3 = sbr.rel (0) target = $region5
  $region4: #{tile.18} parent=0 // pred_region
    _
  $region5: #{tile.18} parent=0 // pred_fallthru
    _
  %v4 = vld [vmem:[%s0] ss:$0 sm:$0xff]
  %5 = vst [vmem:[%s1] sm:$0xff] %v4
  %s6 = scalar_lea.vmem %s1, 8
  %7 = vst [vmem:[%s6] sm:$0xff] %v4

// kernel: tile.19
$region0: #{tile.19}
  %s0 = inlined_call_operand.vmem [shape: f32[9,8], index: 0, kind: input, shape index: {}]
  %s1 = inlined_call_operand.vmem [shape: f32[72], index: 1, kind: output, shape index: {}]
  $region1: #{tile.19} parent=0
    #allocation0 [shape = 'u8[4096]{0}', space=vmem, size = 0x1000, scoped, tag = 'scoped mem for output reshape']
    %v2 = vld [vmem:[%s0] sm:$0x1]
    %vm3 = vcmask 64512
    %4 = vst.msk [vmem:[#allocation0] sm:$0x1] %vm3, %v2
    %s5 = scalar_lea.vmem %s0, 8
    %v6 = vld [vmem:[%s5] sm:$0x1]
    %7 = vrot.lane.b32.xlu0 %v6, 64
    %v8 = vpop.permute.xlu0 %7
    %vm9 = vcmask 589312
    %10 = vst.msk [vmem:[#allocation0] sm:$0x1] %vm9, %v8
    %s11 = scalar_lea.vmem %s0, 7
    %v12 = vld [vmem:[%s11] sm:$0x1]
    %13 = vrot.lane.b32.xlu0 %v12, 56
    %v14 = vpop.permute.xlu0 %13
    %vm15 = vcmask 523712
    %16 = vst.msk [vmem:[#allocation0] sm:$0x1] %vm15, %v14
    %s17 = scalar_lea.vmem %s0, 6
    %v18 = vld [vmem:[%s17] sm:$0x1]
    %19 = vrot.lane.b32.xlu0 %v18, 48
    %v20 = vpop.permute.xlu0 %19
    %vm21 = vcmask 458112
    %22 = vst.msk [vmem:[#allocation0] sm:$0x1] %vm21, %v20
    %s23 = scalar_lea.vmem %s0, 5
    %v24 = vld [vmem:[%s23] sm:$0x1]
    %25 = vrot.lane.b32.xlu0 %v24, 40
    %v26 = vpop.permute.xlu0 %25
    %vm27 = vcmask 392512
    %28 = vst.msk [vmem:[#allocation0] sm:$0x1] %vm27, %v26
    %s29 = scalar_lea.vmem %s0, 4
    %v30 = vld [vmem:[%s29] sm:$0x1]
    %31 = vrot.lane.b32.xlu0 %v30, 32
    %v32 = vpop.permute.xlu0 %31
    %vm33 = vcmask 326912
    %34 = vst.msk [vmem:[#allocation0] sm:$0x1] %vm33, %v32
    %s35 = scalar_lea.vmem %s0, 3
    %v36 = vld [vmem:[%s35] sm:$0x1]
    %37 = vrot.lane.b32.xlu0 %v36, 24
    %v38 = vpop.permute.xlu0 %37
    %vm39 = vcmask 261312
    %40 = vst.msk [vmem:[#allocation0] sm:$0x1] %vm39, %v38
    %s41 = scalar_lea.vmem %s0, 2
    %v42 = vld [vmem:[%s41] sm:$0x1]
    %43 = vrot.lane.b32.xlu0 %v42, 16
    %v44 = vpop.permute.xlu0 %43
    %vm45 = vcmask 195712
    %46 = vst.msk [vmem:[#allocation0] sm:$0x1] %vm45, %v44
    %s47 = scalar_lea.vmem %s0, 1
    %v48 = vld [vmem:[%s47] sm:$0x1]
    %49 = vrot.lane.b32.xlu0 %v48, 8
    %v50 = vpop.permute.xlu0 %49
    %vm51 = vcmask 130112
    %52 = vst.msk [vmem:[#allocation0] sm:$0x1] %vm51, %v50
    %s54 = ssub.s32 2, 1
    %v55 = vld [vmem:[#allocation0] sm:%s54]
    %s57 = ssub.s32 2, 1
    %58 = vst [vmem:[%s1] sm:%s57] %v55

// kernel: forward.2
$region0: #{forward.2}
  #allocation0 [shape = 'u32[]', space=smem, size = 0x4, offset = 0x4, fixed_abs, tag = 'smem constant byte address 0x4 - core index']
  #allocation1 [shape = 'u32[72,128]{1,0:T(1,128)}', space=vmem, size = 0x9000, scoped, tag = 'internal scratch']
  %s0 = inlined_call_operand.vmem [shape: f32[2,64,128], index: 0, kind: input, shape index: {}]
  %s1 = inlined_call_operand.vmem [shape: f32[64,128], index: 1, kind: input, shape index: {}]
  %s2 = inlined_call_operand.vmem [shape: f32[1,128], index: 2, kind: input, shape index: {}]
  %s3 = inlined_call_operand.vmem [shape: f32[1,128], index: 3, kind: input, shape index: {}]
  %s4 = inlined_call_operand.vmem [shape: f32[128,128], index: 4, kind: input, shape index: {}]
  %s5 = inlined_call_operand.vmem [shape: f32[1,128], index: 5, kind: input, shape index: {}]
  %s6 = inlined_call_operand.vmem [shape: f32[64,128], index: 6, kind: input, shape index: {}]
  %s7 = inlined_call_operand.vmem [shape: f32[2,64,128], index: 7, kind: output, shape index: {}]
  %s8 = sld [smem:[#allocation0]]
  $region61: #{forward.2} parent=0
    _
  %s10 = ssub.s32 1, %s8
  %s11 = scalar_select 0, %s10, %s8
  loop: start=0, step=1, limit=4
  $region2: #{forward.2} parent=0 // loop_pre_header
    _
  $region3: #{forward.2} parent=0 // loop_header
    %s13 = sphi 0, %s17
    %p14 = scmp.ge.s32.totalorder %s13, 4
    %s23 = sphi 0, %s25
    %s26 = sphi 0, %s23
    %s27 = sphi 0, %s26
    %s43 = sphi 0, %s27
    %s47 = sphi 0, %s47
    %s49 = sphi 0, %s47
    %s50 = sphi 0, %s49
    %s64 = sphi 0, %s50
    %s68 = sphi 0, %s68
    %s70 = sphi 0, %s68
    %s71 = sphi 0, %s70
    %s85 = sphi 0, %s71
    %s89 = sphi 0, %s89
    %s91 = sphi 0, %s89
    %s92 = sphi 0, %s91
    %s106 = sphi 0, %s92
    %s110 = sphi 0, %s110
    %s112 = sphi 0, %s110
    %s113 = sphi 0, %s112
    %s127 = sphi 0, %s113
    %s131 = sphi 0, %s131
    %s133 = sphi 0, %s131
    %s134 = sphi 0, %s133
    %s148 = sphi 0, %s134
    %s152 = sphi 0, %s152
    %s154 = sphi 0, %s152
    %s155 = sphi 0, %s154
    %s169 = sphi 0, %s155
    %s175 = sphi 0, %s177
    %s178 = sphi 0, %s175
    %s179 = sphi 0, %s178
    %s195 = sphi 0, %s179
  $region4: #{forward.2} parent=0 // loop_header_branch
    %16 = sbr.rel (%p14) target = $region8
  $region5: #{forward.2} parent=0 // loop_body
    %s18 = ssub.s32 %s13, 1
    %s19 = ssub.s32 %s13, 2
    %s20 = sadd.s32 %s13, 1
    %s21 = ssub.s32 %s13, %s20
    %p22 = scmp.eq.s32.totalorder %s21, 0
    %s24 = sadd.s32 %s23, 1
    %s25 = scalar_select %p22, %s23, %s24
    %p28 = pneg %p22
    %p29 = scmp.eq.s32.totalorder %s13, 1
    %p30 = por %p28, %p29
    %p31 = scmp.ne.s32.totalorder %s23, %s26
    %p32 = scmp.eq.s32.totalorder %s13, 0
    %p33 = por %p31, %p32
    %p34 = scmp.ne.s32.totalorder %s23, %s26
    %p35 = scmp.eq.s32.totalorder %s18, 1
    %p36 = por %p34, %p35
    %p37 = scmp.ne.s32.totalorder %s26, %s27
    %p38 = scmp.eq.s32.totalorder %s18, 0
    %p39 = por %p37, %p38
    %p40 = scmp.ne.s32.totalorder %s26, %s27
    %p41 = scmp.eq.s32.totalorder %s19, 1
    %p42 = por %p40, %p41
    %p44 = scmp.ne.s32.totalorder %s27, %s43
    %p45 = scmp.eq.s32.totalorder %s19, 0
    %p46 = por %p44, %p45
    %s48 = sadd.s32 %s47, 1
    %p51 = scmp.eq.s32.totalorder %s13, 1
    %p52 = scmp.ne.s32.totalorder %s47, %s49
    %p53 = scmp.eq.s32.totalorder %s13, 0
    %p54 = por %p52, %p53
    %p55 = scmp.ne.s32.totalorder %s47, %s49
    %p56 = scmp.eq.s32.totalorder %s18, 1
    %p57 = por %p55, %p56
    %p58 = scmp.ne.s32.totalorder %s49, %s50
    %p59 = scmp.eq.s32.totalorder %s18, 0
    %p60 = por %p58, %p59
    %p61 = scmp.ne.s32.totalorder %s49, %s50
    %p62 = scmp.eq.s32.totalorder %s19, 1
    %p63 = por %p61, %p62
    %p65 = scmp.ne.s32.totalorder %s50, %s64
    %p66 = scmp.eq.s32.totalorder %s19, 0
    %p67 = por %p65, %p66
    %s69 = sadd.s32 %s68, 1
    %p72 = scmp.eq.s32.totalorder %s13, 1
    %p73 = scmp.ne.s32.totalorder %s68, %s70
    %p74 = scmp.eq.s32.totalorder %s13, 0
    %p75 = por %p73, %p74
    %p76 = scmp.ne.s32.totalorder %s68, %s70
    %p77 = scmp.eq.s32.totalorder %s18, 1
    %p78 = por %p76, %p77
    %p79 = scmp.ne.s32.totalorder %s70, %s71
    %p80 = scmp.eq.s32.totalorder %s18, 0
    %p81 = por %p79, %p80
    %p82 = scmp.ne.s32.totalorder %s70, %s71
    %p83 = scmp.eq.s32.totalorder %s19, 1
    %p84 = por %p82, %p83
    %p86 = scmp.ne.s32.totalorder %s71, %s85
    %p87 = scmp.eq.s32.totalorder %s19, 0
    %p88 = por %p86, %p87
    %s90 = sadd.s32 %s89, 1
    %p93 = scmp.eq.s32.totalorder %s13, 1
    %p94 = scmp.ne.s32.totalorder %s89, %s91
    %p95 = scmp.eq.s32.totalorder %s13, 0
    %p96 = por %p94, %p95
    %p97 = scmp.ne.s32.totalorder %s89, %s91
    %p98 = scmp.eq.s32.totalorder %s18, 1
    %p99 = por %p97, %p98
    %p100 = scmp.ne.s32.totalorder %s91, %s92
    %p101 = scmp.eq.s32.totalorder %s18, 0
    %p102 = por %p100, %p101
    %p103 = scmp.ne.s32.totalorder %s91, %s92
    %p104 = scmp.eq.s32.totalorder %s19, 1
    %p105 = por %p103, %p104
    %p107 = scmp.ne.s32.totalorder %s92, %s106
    %p108 = scmp.eq.s32.totalorder %s19, 0
    %p109 = por %p107, %p108
    %s111 = sadd.s32 %s110, 1
    %p114 = scmp.eq.s32.totalorder %s13, 1
    %p115 = scmp.ne.s32.totalorder %s110, %s112
    %p116 = scmp.eq.s32.totalorder %s13, 0
    %p117 = por %p115, %p116
    %p118 = scmp.ne.s32.totalorder %s110, %s112
    %p119 = scmp.eq.s32.totalorder %s18, 1
    %p120 = por %p118, %p119
    %p121 = scmp.ne.s32.totalorder %s112, %s113
    %p122 = scmp.eq.s32.totalorder %s18, 0
    %p123 = por %p121, %p122
    %p124 = scmp.ne.s32.totalorder %s112, %s113
    %p125 = scmp.eq.s32.totalorder %s19, 1
    %p126 = por %p124, %p125
    %p128 = scmp.ne.s32.totalorder %s113, %s127
    %p129 = scmp.eq.s32.totalorder %s19, 0
    %p130 = por %p128, %p129
    %s132 = sadd.s32 %s131, 1
    %p135 = scmp.eq.s32.totalorder %s13, 1
    %p136 = scmp.ne.s32.totalorder %s131, %s133
    %p137 = scmp.eq.s32.totalorder %s13, 0
    %p138 = por %p136, %p137
    %p139 = scmp.ne.s32.totalorder %s131, %s133
    %p140 = scmp.eq.s32.totalorder %s18, 1
    %p141 = por %p139, %p140
    %p142 = scmp.ne.s32.totalorder %s133, %s134
    %p143 = scmp.eq.s32.totalorder %s18, 0
    %p144 = por %p142, %p143
    %p145 = scmp.ne.s32.totalorder %s133, %s134
    %p146 = scmp.eq.s32.totalorder %s19, 1
    %p147 = por %p145, %p146
    %p149 = scmp.ne.s32.totalorder %s134, %s148
    %p150 = scmp.eq.s32.totalorder %s19, 0
    %p151 = por %p149, %p150
    %s153 = sadd.s32 %s152, 1
    %p156 = scmp.eq.s32.totalorder %s13, 1
    %p157 = scmp.ne.s32.totalorder %s152, %s154
    %p158 = scmp.eq.s32.totalorder %s13, 0
    %p159 = por %p157, %p158
    %p160 = scmp.ne.s32.totalorder %s152, %s154
    %p161 = scmp.eq.s32.totalorder %s18, 1
    %p162 = por %p160, %p161
    %p163 = scmp.ne.s32.totalorder %s154, %s155
    %p164 = scmp.eq.s32.totalorder %s18, 0
    %p165 = por %p163, %p164
    %p166 = scmp.ne.s32.totalorder %s154, %s155
    %p167 = scmp.eq.s32.totalorder %s19, 1
    %p168 = por %p166, %p167
    %p170 = scmp.ne.s32.totalorder %s155, %s169
    %p171 = scmp.eq.s32.totalorder %s19, 0
    %p172 = por %p170, %p171
    %s173 = ssub.s32 %s13, %s20
    %p174 = scmp.eq.s32.totalorder %s173, 0
    %s176 = sadd.s32 %s175, 1
    %s177 = scalar_select %p174, %s175, %s176
    %p180 = pneg %p174
    %p181 = scmp.eq.s32.totalorder %s13, 1
    %p182 = por %p180, %p181
    %p183 = scmp.ne.s32.totalorder %s175, %s178
    %p184 = scmp.eq.s32.totalorder %s13, 0
    %p185 = por %p183, %p184
    %p186 = scmp.ne.s32.totalorder %s175, %s178
    %p187 = scmp.eq.s32.totalorder %s18, 1
    %p188 = por %p186, %p187
    %p189 = scmp.ne.s32.totalorder %s178, %s179
    %p190 = scmp.eq.s32.totalorder %s18, 0
    %p191 = por %p189, %p190
    %p192 = scmp.ne.s32.totalorder %s178, %s179
    %p193 = scmp.eq.s32.totalorder %s19, 1
    %p194 = por %p192, %p193
    %p196 = scmp.ne.s32.totalorder %s179, %s195
    %p197 = scmp.eq.s32.totalorder %s19, 0
    %p198 = por %p196, %p197
    %p199 = scmp.le.s32.totalorder 1, %s13
    %p200 = scmp.lt.s32.totalorder %s13, 3
    %p201 = pnand %p199, %p200
    %p202 = pneg %p201
    // Predicated region
    $region9: #{forward.2} parent=5 // pred_check
      _
    $region10: #{forward.2} parent=5 // pred_check_branch
      %204 = sbr.rel (%p201) target = $region12
    $region11: #{forward.2} parent=5 // pred_region
      %s205 = ssub.s32 %s13, 1
      // Predicated region
      $region13: #{forward.2} parent=11 // pred_check
        %p206 = pneg %p60
      $region14: #{forward.2} parent=11 // pred_check_branch
        %208 = sbr.rel (%p206) target = $region16
      $region15: #{forward.2} parent=11 // pred_region
        _
      $region16: #{forward.2} parent=11 // pred_fallthru
        _
      // Predicated region
      $region17: #{forward.2} parent=11 // pred_check
        %p209 = pneg %p81
      $region18: #{forward.2} parent=11 // pred_check_branch
        %211 = sbr.rel (%p209) target = $region20
      $region19: #{forward.2} parent=11 // pred_region
        _
      $region20: #{forward.2} parent=11 // pred_fallthru
        _
      // Predicated region
      $region21: #{forward.2} parent=11 // pred_check
        %p212 = pneg %p102
      $region22: #{forward.2} parent=11 // pred_check_branch
        %214 = sbr.rel (%p212) target = $region24
      $region23: #{forward.2} parent=11 // pred_region
        _
      $region24: #{forward.2} parent=11 // pred_fallthru
        _
      // Predicated region
      $region25: #{forward.2} parent=11 // pred_check
        %p215 = pneg %p123
      $region26: #{forward.2} parent=11 // pred_check_branch
        %217 = sbr.rel (%p215) target = $region28
      $region27: #{forward.2} parent=11 // pred_region
        _
      $region28: #{forward.2} parent=11 // pred_fallthru
        _
      // Predicated region
      $region29: #{forward.2} parent=11 // pred_check
        %p218 = pneg %p144
      $region30: #{forward.2} parent=11 // pred_check_branch
        %220 = sbr.rel (%p218) target = $region32
      $region31: #{forward.2} parent=11 // pred_region
        _
      $region32: #{forward.2} parent=11 // pred_fallthru
        _
      // Predicated region
      $region33: #{forward.2} parent=11 // pred_check
        %p221 = pneg %p165
      $region34: #{forward.2} parent=11 // pred_check_branch
        %223 = sbr.rel (%p221) target = $region36
      $region35: #{forward.2} parent=11 // pred_region
        _
      $region36: #{forward.2} parent=11 // pred_fallthru
        _
    $region12: #{forward.2} parent=5 // pred_fallthru
      _
    %p224 = scmp.lt.s32.totalorder %s13, 2
    // Predicated region
    $region37: #{forward.2} parent=5 // pred_check
      %p225 = pneg %p224
    $region38: #{forward.2} parent=5 // pred_check_branch
      %227 = sbr.rel (%p225) target = $region40
    $region39: #{forward.2} parent=5 // pred_region
      // Predicated region
      $region41: #{forward.2} parent=39 // pred_check
        %p228 = pneg %p33
      $region42: #{forward.2} parent=39 // pred_check_branch
        %230 = sbr.rel (%p228) target = $region44
      $region43: #{forward.2} parent=39 // pred_region
        %p231 = scmp.lt.s32.totalorder %s13, 1
        %s232 = scalar_select %p231, %s13, 1
        %s233 = smul.addr %s232, 8
        %s234 = smul.addr %s233, 8
        %s235 = scalar_lea.vmem %s0, %s234
      $region44: #{forward.2} parent=39 // pred_fallthru
        _
    $region40: #{forward.2} parent=5 // pred_fallthru
      _
    %p236 = scmp.le.s32.totalorder 1, %s13
    %p237 = scmp.lt.s32.totalorder %s13, 3
    %p238 = pnand %p236, %p237
    %p239 = pneg %p238
    // Predicated region
    $region45: #{forward.2} parent=5 // pred_check
      _
    $region46: #{forward.2} parent=5 // pred_check_branch
      %241 = sbr.rel (%p238) target = $region48
    $region47: #{forward.2} parent=5 // pred_region
      %s242 = ssub.s32 %s13, 1
      %p243 = scmp.lt.s32.totalorder %s18, 1
      %s244 = scalar_select %p243, %s18, 1
      %s245 = smul.addr %s244, 8
      %s246 = smul.addr %s245, 8
      %s247 = scalar_lea.vmem %s0, %s246
      %p248 = pneg %p39
      %p249 = pneg %p36
      %p250 = pneg %p60
      %p251 = pneg %p57
      %p252 = pneg %p81
      %p253 = pneg %p78
      %p254 = pneg %p102
      %p255 = pneg %p99
      %p256 = pneg %p123
      %p257 = pneg %p120
      %p258 = pneg %p144
      %p259 = pneg %p141
      %p260 = pneg %p165
      %p261 = pneg %p162
      %p262 = pneg %p191
      %p263 = pneg %p188
      %p264 = scmp.lt.s32.totalorder %s18, 1
      %s265 = scalar_select %p264, %s18, 1
      %s266 = smul.addr %s265, 8
      %s267 = smul.addr %s266, 8
      %s268 = scalar_lea.vmem %s7, %s267
      %p269 = scmp.lt.s32.totalorder %s18, 1
      %s270 = scalar_select %p269, %s18, 1
      %s271 = smul.addr %s270, 8
      %s272 = smul.addr %s271, 8
      %s273 = scalar_lea.vmem %s0, %s272
      %p274 = scmp.lt.s32.totalorder %s18, 1
      %s275 = scalar_select %p274, %s18, 1
      %s276 = smul.addr %s275, 8
      %s277 = smul.addr %s276, 8
      %s278 = scalar_lea.vmem %s7, %s277
      %v279 = vld [vmem:[%s273] sm:$0xff]
      %v280 = vld [vmem:[%s273 + $0x8] sm:$0xff]
      %v281 = vld [vmem:[%s273 + $0x10] sm:$0xff]
      %v282 = vld [vmem:[%s273 + $0x18] sm:$0xff]
      %v283 = vld [vmem:[%s273 + $0x20] sm:$0xff]
      %v284 = vld [vmem:[%s273 + $0x28] sm:$0xff]
      %v285 = vld [vmem:[%s273 + $0x30] sm:$0xff]
      %v286 = vld [vmem:[%s273 + $0x38] sm:$0xff]
      %v287 = vld [vmem:[%s2] sm:$0x1]
      %v289 = vperm.slane %v287, 0
      %v291 = vmul.f32 %v279, %v289
      %v292 = vmul.f32 %v280, %v289
      %v293 = vmul.f32 %v281, %v289
      %v294 = vmul.f32 %v282, %v289
      %v295 = vmul.f32 %v283, %v289
      %v296 = vmul.f32 %v284, %v289
      %v297 = vmul.f32 %v285, %v289
      %v298 = vmul.f32 %v286, %v289
      %v299 = vld [vmem:[%s3] sm:$0x1]
      %v301 = vperm.slane %v299, 0
      %v303 = vadd.f32 %v291, %v301
      %v304 = vadd.f32 %v292, %v301
      %v305 = vadd.f32 %v293, %v301
      %v306 = vadd.f32 %v294, %v301
      %v307 = vadd.f32 %v295, %v301
      %v308 = vadd.f32 %v296, %v301
      %v309 = vadd.f32 %v297, %v301
      %v310 = vadd.f32 %v298, %v301
      %v311 = vmax.f32 %v303, 0.0
      %v312 = vmax.f32 %v304, 0.0
      %v313 = vmax.f32 %v305, 0.0
      %v314 = vmax.f32 %v306, 0.0
      %v315 = vmax.f32 %v307, 0.0
      %v316 = vmax.f32 %v308, 0.0
      %v317 = vmax.f32 %v309, 0.0
      %v318 = vmax.f32 %v310, 0.0
      %v319 = vld [vmem:[%s1] sm:$0xff]
      %v320 = vld [vmem:[%s1 + $0x8] sm:$0xff]
      %v321 = vld [vmem:[%s1 + $0x10] sm:$0xff]
      %v322 = vld [vmem:[%s1 + $0x18] sm:$0xff]
      %v323 = vld [vmem:[%s1 + $0x20] sm:$0xff]
      %v324 = vld [vmem:[%s1 + $0x28] sm:$0xff]
      %v325 = vld [vmem:[%s1 + $0x30] sm:$0xff]
      %v326 = vld [vmem:[%s1 + $0x38] sm:$0xff]
      %v327 = vmul.f32 %v311, %v319
      %v328 = vmul.f32 %v312, %v320
      %v329 = vmul.f32 %v313, %v321
      %v330 = vmul.f32 %v314, %v322
      %v331 = vmul.f32 %v315, %v323
      %v332 = vmul.f32 %v316, %v324
      %v333 = vmul.f32 %v317, %v325
      %v334 = vmul.f32 %v318, %v326
      %v335 = vld [vmem:[%s4] sm:$0xff]
      %v336 = vld [vmem:[%s4 + $0x8] sm:$0xff]
      %v337 = vld [vmem:[%s4 + $0x10] sm:$0xff]
      %v338 = vld [vmem:[%s4 + $0x18] sm:$0xff]
      %v339 = vld [vmem:[%s4 + $0x20] sm:$0xff]
      %v340 = vld [vmem:[%s4 + $0x28] sm:$0xff]
      %v341 = vld [vmem:[%s4 + $0x30] sm:$0xff]
      %v342 = vld [vmem:[%s4 + $0x38] sm:$0xff]
      %v343 = vld [vmem:[%s4 + $0x40] sm:$0xff]
      %v344 = vld [vmem:[%s4 + $0x48] sm:$0xff]
      %v345 = vld [vmem:[%s4 + $0x50] sm:$0xff]
      %v346 = vld [vmem:[%s4 + $0x58] sm:$0xff]
      %v347 = vld [vmem:[%s4 + $0x60] sm:$0xff]
      %v348 = vld [vmem:[%s4 + $0x68] sm:$0xff]
      %v349 = vld [vmem:[%s4 + $0x70] sm:$0xff]
      %v350 = vld [vmem:[%s4 + $0x78] sm:$0xff]
      %v351 = vld [vmem:[%s5] sm:$0x1]
      %v353 = vperm.slane %v351, 0
      %355 = vmatpush.msra.mxu0 %v350
      %356 = vmatpush.msra.mxu0 %v349
      %357 = vmatpush.msra.mxu0 %v348
      %358 = vmatpush.msra.mxu0 %v347
      %359 = vmatpush.msra.mxu0 %v346
      %360 = vmatpush.msra.mxu0 %v345
      %361 = vmatpush.msra.mxu0 %v344
      %362 = vmatpush.msra.mxu0 %v343
      %363 = vmatpush.msra.mxu0 %v342
      %364 = vmatpush.msra.mxu0 %v341
      %365 = vmatpush.msra.mxu0 %v340
      %366 = vmatpush.msra.mxu0 %v339
      %367 = vmatpush.msra.mxu0 %v338
      %368 = vmatpush.msra.mxu0 %v337
      %369 = vmatpush.msra.mxu0 %v336
      %370 = vmatpush.msra.mxu0 %v335
      %371 = vmatmul.f32.gmra.mxu0 %v327
      %v372 = vpop.f32.mrf.mxu0
      %v373 = vadd.f32 %v353, %v372
      %374 = vmatmul.f32.gmra.mxu0 %v328
      %v375 = vpop.f32.mrf.mxu0
      %v376 = vadd.f32 %v353, %v375
      %377 = vmatmul.f32.gmra.mxu0 %v329
      %v378 = vpop.f32.mrf.mxu0
      %v379 = vadd.f32 %v353, %v378
      %380 = vmatmul.f32.gmra.mxu0 %v330
      %v381 = vpop.f32.mrf.mxu0
      %v382 = vadd.f32 %v353, %v381
      %383 = vmatmul.f32.gmra.mxu0 %v331
      %v384 = vpop.f32.mrf.mxu0
      %v385 = vadd.f32 %v353, %v384
      %386 = vmatmul.f32.gmra.mxu0 %v332
      %v387 = vpop.f32.mrf.mxu0
      %v388 = vadd.f32 %v353, %v387
      %389 = vmatmul.f32.gmra.mxu0 %v333
      %v390 = vpop.f32.mrf.mxu0
      %v391 = vadd.f32 %v353, %v390
      %392 = vmatmul.f32.gmra.mxu0 %v334
      %v393 = vpop.f32.mrf.mxu0
      %v394 = vadd.f32 %v353, %v393
      %395 = vdwg.mxu0
      %v396 = vld [vmem:[%s6] sm:$0xff]
      %v397 = vld [vmem:[%s6 + $0x8] sm:$0xff]
      %v398 = vld [vmem:[%s6 + $0x10] sm:$0xff]
      %v399 = vld [vmem:[%s6 + $0x18] sm:$0xff]
      %v400 = vld [vmem:[%s6 + $0x20] sm:$0xff]
      %v401 = vld [vmem:[%s6 + $0x28] sm:$0xff]
      %v402 = vld [vmem:[%s6 + $0x30] sm:$0xff]
      %v403 = vld [vmem:[%s6 + $0x38] sm:$0xff]
      %v404 = vadd.f32 %v373, %v396
      %v405 = vadd.f32 %v376, %v397
      %v406 = vadd.f32 %v379, %v398
      %v407 = vadd.f32 %v382, %v399
      %v408 = vadd.f32 %v385, %v400
      %v409 = vadd.f32 %v388, %v401
      %v410 = vadd.f32 %v391, %v402
      %v411 = vadd.f32 %v394, %v403
      %412 = vst [vmem:[%s278] sm:$0xff] %v404
      %413 = vst [vmem:[%s278 + $0x8] sm:$0xff] %v405
      %414 = vst [vmem:[%s278 + $0x10] sm:$0xff] %v406
      %415 = vst [vmem:[%s278 + $0x18] sm:$0xff] %v407
      %416 = vst [vmem:[%s278 + $0x20] sm:$0xff] %v408
      %417 = vst [vmem:[%s278 + $0x28] sm:$0xff] %v409
      %418 = vst [vmem:[%s278 + $0x30] sm:$0xff] %v410
      %419 = vst [vmem:[%s278 + $0x38] sm:$0xff] %v411
      %p420 = scmp.lt.s32.totalorder %s18, 1
      %s421 = scalar_select %p420, %s18, 1
      %s422 = smul.addr %s421, 8
      %s423 = smul.addr %s422, 8
      %s424 = scalar_lea.vmem %s7, %s423
      // Predicated region
      $region49: #{forward.2} parent=47 // pred_check
        %p425 = pneg %p188
      $region50: #{forward.2} parent=47 // pred_check_branch
        %427 = sbr.rel (%p425) target = $region52
      $region51: #{forward.2} parent=47 // pred_region
        _
      $region52: #{forward.2} parent=47 // pred_fallthru
        _
    $region48: #{forward.2} parent=5 // pred_fallthru
      _
    %p428 = scmp.le.s32.totalorder 2, %s13
    // Predicated region
    $region53: #{forward.2} parent=5 // pred_check
      %p429 = pneg %p428
    $region54: #{forward.2} parent=5 // pred_check_branch
      %431 = sbr.rel (%p429) target = $region56
    $region55: #{forward.2} parent=5 // pred_region
      %s432 = ssub.s32 %s13, 2
      // Predicated region
      $region57: #{forward.2} parent=55 // pred_check
        %p433 = pneg %p194
      $region58: #{forward.2} parent=55 // pred_check_branch
        %435 = sbr.rel (%p433) target = $region60
      $region59: #{forward.2} parent=55 // pred_region
        %p436 = scmp.lt.s32.totalorder %s19, 1
        %s437 = scalar_select %p436, %s19, 1
        %s438 = smul.addr %s437, 8
        %s439 = smul.addr %s438, 8
        %s440 = scalar_lea.vmem %s7, %s439
      $region60: #{forward.2} parent=55 // pred_fallthru
        _
    $region56: #{forward.2} parent=5 // pred_fallthru
      _
  $region6: #{forward.2} parent=0 // loop_footer
    %s17 = sadd.s32 1, %s13
  $region7: #{forward.2} parent=0 // loop_footer_branch
    %12 = sbr.rel target = $region3
  $region8: #{forward.2} parent=0 // loop_exit
    _

// kernel: forward.3
$region0: #{forward.3}
  #allocation0 [shape = 'u32[]', space=smem, size = 0x4, offset = 0x4, fixed_abs, tag = 'smem constant byte address 0x4 - core index']
  #allocation1 [shape = 'u32[72,128]{1,0:T(1,128)}', space=vmem, size = 0x9000, scoped, tag = 'internal scratch']
  #allocation2 [shape = 'f32[128,128]{1,0:T(8,128)}', space=vmem, size = 0x10000, scoped, tag = 'scratch operand']
  %s0 = inlined_call_operand.vmem [shape: f32[128,128], index: 0, kind: input, shape index: {}]
  %s1 = inlined_call_operand.vmem [shape: f32[2,1,128], index: 1, kind: input, shape index: {}]
  %s2 = inlined_call_operand.vmem [shape: f32[2,1,128], index: 2, kind: input, shape index: {}]
  %s3 = inlined_call_operand.vmem [shape: f32[2,128,384], index: 3, kind: input, shape index: {}]
  %s4 = inlined_call_operand.vmem [shape: f32[2,1,384], index: 4, kind: input, shape index: {}]
  %s5 = inlined_call_operand.vmem [shape: f32[2,128,128], index: 5, kind: input, shape index: {}]
  %s6 = inlined_call_operand.vmem [shape: f32[2,1,128], index: 6, kind: input, shape index: {}]
  %s7 = inlined_call_operand.vmem [shape: f32[2,1,128], index: 7, kind: input, shape index: {}]
  %s8 = inlined_call_operand.vmem [shape: f32[2,1,128], index: 8, kind: input, shape index: {}]
  %s9 = inlined_call_operand.vmem [shape: f32[2,128,256], index: 9, kind: input, shape index: {}]
  %s10 = inlined_call_operand.vmem [shape: f32[2,1,256], index: 10, kind: input, shape index: {}]
  %s11 = inlined_call_operand.vmem [shape: f32[2,256,128], index: 11, kind: input, shape index: {}]
  %s12 = inlined_call_operand.vmem [shape: f32[2,1,128], index: 12, kind: input, shape index: {}]
  %s13 = inlined_call_operand.vmem [shape: f32[1,128], index: 13, kind: input, shape index: {}]
  %s14 = inlined_call_operand.vmem [shape: f32[1,128], index: 14, kind: input, shape index: {}]
  %s15 = inlined_call_operand.hbm [shape: f32[128,128], index: 15, kind: output, shape index: {}]
  %s16 = sld [smem:[#allocation0]]
  $region101: #{forward.3} parent=0
    _
  %s18 = ssub.s32 1, %s16
  %s19 = scalar_select 0, %s18, %s16
  $region1: #{forward.3} parent=0
    #allocation3 [shape = 'u8[65536]{0}', space=vmem, size = 0x10000, scoped, tag = 'output window, operand 0, single buffered']
    #allocation4 [shape = 's32[2]{0}', space=sflag, size = 0x8, scoped, tag = 'scoped memory for forward.3']
    %20 = vsyncpa [#allocation4], 0
    loop: start=0, step=1, limit=4
    $region2: #{forward.3} parent=1 // loop_pre_header
      _
    $region3: #{forward.3} parent=1 // loop_header
      %s22 = sphi 0, %s26
      %p23 = scmp.ge.s32.totalorder %s22, 4
      %s30 = sphi 0, %s30
      %s32 = sphi 0, %s30
      %s33 = sphi 0, %s32
      %s47 = sphi 0, %s33
      %s53 = sphi 0, %s55
      %s56 = sphi 0, %s53
      %s57 = sphi 0, %s56
      %s73 = sphi 0, %s57
      %s79 = sphi 0, %s81
      %s82 = sphi 0, %s79
      %s83 = sphi 0, %s82
      %s99 = sphi 0, %s83
      %s105 = sphi 0, %s107
      %s108 = sphi 0, %s105
      %s109 = sphi 0, %s108
      %s125 = sphi 0, %s109
      %s131 = sphi 0, %s133
      %s134 = sphi 0, %s131
      %s135 = sphi 0, %s134
      %s151 = sphi 0, %s135
      %s157 = sphi 0, %s159
      %s160 = sphi 0, %s157
      %s161 = sphi 0, %s160
      %s177 = sphi 0, %s161
      %s183 = sphi 0, %s185
      %s186 = sphi 0, %s183
      %s187 = sphi 0, %s186
      %s203 = sphi 0, %s187
      %s209 = sphi 0, %s211
      %s212 = sphi 0, %s209
      %s213 = sphi 0, %s212
      %s229 = sphi 0, %s213
      %s235 = sphi 0, %s237
      %s238 = sphi 0, %s235
      %s239 = sphi 0, %s238
      %s255 = sphi 0, %s239
      %s261 = sphi 0, %s263
      %s264 = sphi 0, %s261
      %s265 = sphi 0, %s264
      %s281 = sphi 0, %s265
      %s287 = sphi 0, %s289
      %s290 = sphi 0, %s287
      %s291 = sphi 0, %s290
      %s307 = sphi 0, %s291
      %s313 = sphi 0, %s315
      %s316 = sphi 0, %s313
      %s317 = sphi 0, %s316
      %s333 = sphi 0, %s317
      %s339 = sphi 0, %s341
      %s342 = sphi 0, %s339
      %s343 = sphi 0, %s342
      %s359 = sphi 0, %s343
      %s363 = sphi 0, %s363
      %s365 = sphi 0, %s363
      %s366 = sphi 0, %s365
      %s380 = sphi 0, %s366
      %s384 = sphi 0, %s384
      %s386 = sphi 0, %s384
      %s387 = sphi 0, %s386
      %s401 = sphi 0, %s387
      %s405 = sphi 0, %s405
      %s407 = sphi 0, %s405
      %s408 = sphi 0, %s407
      %s422 = sphi 0, %s408
    $region4: #{forward.3} parent=1 // loop_header_branch
      %25 = sbr.rel (%p23) target = $region8
    $region5: #{forward.3} parent=1 // loop_body
      %s27 = ssub.s32 %s22, 1
      %s28 = ssub.s32 %s22, 2
      %s29 = sadd.s32 %s22, 1
      %s31 = sadd.s32 %s30, 1
      %p34 = scmp.eq.s32.totalorder %s22, 1
      %p35 = scmp.ne.s32.totalorder %s30, %s32
      %p36 = scmp.eq.s32.totalorder %s22, 0
      %p37 = por %p35, %p36
      %p38 = scmp.ne.s32.totalorder %s30, %s32
      %p39 = scmp.eq.s32.totalorder %s27, 1
      %p40 = por %p38, %p39
      %p41 = scmp.ne.s32.totalorder %s32, %s33
      %p42 = scmp.eq.s32.totalorder %s27, 0
      %p43 = por %p41, %p42
      %p44 = scmp.ne.s32.totalorder %s32, %s33
      %p45 = scmp.eq.s32.totalorder %s28, 1
      %p46 = por %p44, %p45
      %p48 = scmp.ne.s32.totalorder %s33, %s47
      %p49 = scmp.eq.s32.totalorder %s28, 0
      %p50 = por %p48, %p49
      %s51 = ssub.s32 %s22, %s29
      %p52 = scmp.eq.s32.totalorder %s51, 0
      %s54 = sadd.s32 %s53, 1
      %s55 = scalar_select %p52, %s53, %s54
      %p58 = pneg %p52
      %p59 = scmp.eq.s32.totalorder %s22, 1
      %p60 = por %p58, %p59
      %p61 = scmp.ne.s32.totalorder %s53, %s56
      %p62 = scmp.eq.s32.totalorder %s22, 0
      %p63 = por %p61, %p62
      %p64 = scmp.ne.s32.totalorder %s53, %s56
      %p65 = scmp.eq.s32.totalorder %s27, 1
      %p66 = por %p64, %p65
      %p67 = scmp.ne.s32.totalorder %s56, %s57
      %p68 = scmp.eq.s32.totalorder %s27, 0
      %p69 = por %p67, %p68
      %p70 = scmp.ne.s32.totalorder %s56, %s57
      %p71 = scmp.eq.s32.totalorder %s28, 1
      %p72 = por %p70, %p71
      %p74 = scmp.ne.s32.totalorder %s57, %s73
      %p75 = scmp.eq.s32.totalorder %s28, 0
      %p76 = por %p74, %p75
      %s77 = ssub.s32 %s22, %s29
      %p78 = scmp.eq.s32.totalorder %s77, 0
      %s80 = sadd.s32 %s79, 1
      %s81 = scalar_select %p78, %s79, %s80
      %p84 = pneg %p78
      %p85 = scmp.eq.s32.totalorder %s22, 1
      %p86 = por %p84, %p85
      %p87 = scmp.ne.s32.totalorder %s79, %s82
      %p88 = scmp.eq.s32.totalorder %s22, 0
      %p89 = por %p87, %p88
      %p90 = scmp.ne.s32.totalorder %s79, %s82
      %p91 = scmp.eq.s32.totalorder %s27, 1
      %p92 = por %p90, %p91
      %p93 = scmp.ne.s32.totalorder %s82, %s83
      %p94 = scmp.eq.s32.totalorder %s27, 0
      %p95 = por %p93, %p94
      %p96 = scmp.ne.s32.totalorder %s82, %s83
      %p97 = scmp.eq.s32.totalorder %s28, 1
      %p98 = por %p96, %p97
      %p100 = scmp.ne.s32.totalorder %s83, %s99
      %p101 = scmp.eq.s32.totalorder %s28, 0
      %p102 = por %p100, %p101
      %s103 = ssub.s32 %s22, %s29
      %p104 = scmp.eq.s32.totalorder %s103, 0
      %s106 = sadd.s32 %s105, 1
      %s107 = scalar_select %p104, %s105, %s106
      %p110 = pneg %p104
      %p111 = scmp.eq.s32.totalorder %s22, 1
      %p112 = por %p110, %p111
      %p113 = scmp.ne.s32.totalorder %s105, %s108
      %p114 = scmp.eq.s32.totalorder %s22, 0
      %p115 = por %p113, %p114
      %p116 = scmp.ne.s32.totalorder %s105, %s108
      %p117 = scmp.eq.s32.totalorder %s27, 1
      %p118 = por %p116, %p117
      %p119 = scmp.ne.s32.totalorder %s108, %s109
      %p120 = scmp.eq.s32.totalorder %s27, 0
      %p121 = por %p119, %p120
      %p122 = scmp.ne.s32.totalorder %s108, %s109
      %p123 = scmp.eq.s32.totalorder %s28, 1
      %p124 = por %p122, %p123
      %p126 = scmp.ne.s32.totalorder %s109, %s125
      %p127 = scmp.eq.s32.totalorder %s28, 0
      %p128 = por %p126, %p127
      %s129 = ssub.s32 %s22, %s29
      %p130 = scmp.eq.s32.totalorder %s129, 0
      %s132 = sadd.s32 %s131, 1
      %s133 = scalar_select %p130, %s131, %s132
      %p136 = pneg %p130
      %p137 = scmp.eq.s32.totalorder %s22, 1
      %p138 = por %p136, %p137
      %p139 = scmp.ne.s32.totalorder %s131, %s134
      %p140 = scmp.eq.s32.totalorder %s22, 0
      %p141 = por %p139, %p140
      %p142 = scmp.ne.s32.totalorder %s131, %s134
      %p143 = scmp.eq.s32.totalorder %s27, 1
      %p144 = por %p142, %p143
      %p145 = scmp.ne.s32.totalorder %s134, %s135
      %p146 = scmp.eq.s32.totalorder %s27, 0
      %p147 = por %p145, %p146
      %p148 = scmp.ne.s32.totalorder %s134, %s135
      %p149 = scmp.eq.s32.totalorder %s28, 1
      %p150 = por %p148, %p149
      %p152 = scmp.ne.s32.totalorder %s135, %s151
      %p153 = scmp.eq.s32.totalorder %s28, 0
      %p154 = por %p152, %p153
      %s155 = ssub.s32 %s22, %s29
      %p156 = scmp.eq.s32.totalorder %s155, 0
      %s158 = sadd.s32 %s157, 1
      %s159 = scalar_select %p156, %s157, %s158
      %p162 = pneg %p156
      %p163 = scmp.eq.s32.totalorder %s22, 1
      %p164 = por %p162, %p163
      %p165 = scmp.ne.s32.totalorder %s157, %s160
      %p166 = scmp.eq.s32.totalorder %s22, 0
      %p167 = por %p165, %p166
      %p168 = scmp.ne.s32.totalorder %s157, %s160
      %p169 = scmp.eq.s32.totalorder %s27, 1
      %p170 = por %p168, %p169
      %p171 = scmp.ne.s32.totalorder %s160, %s161
      %p172 = scmp.eq.s32.totalorder %s27, 0
      %p173 = por %p171, %p172
      %p174 = scmp.ne.s32.totalorder %s160, %s161
      %p175 = scmp.eq.s32.totalorder %s28, 1
      %p176 = por %p174, %p175
      %p178 = scmp.ne.s32.totalorder %s161, %s177
      %p179 = scmp.eq.s32.totalorder %s28, 0
      %p180 = por %p178, %p179
      %s181 = ssub.s32 %s22, %s29
      %p182 = scmp.eq.s32.totalorder %s181, 0
      %s184 = sadd.s32 %s183, 1
      %s185 = scalar_select %p182, %s183, %s184
      %p188 = pneg %p182
      %p189 = scmp.eq.s32.totalorder %s22, 1
      %p190 = por %p188, %p189
      %p191 = scmp.ne.s32.totalorder %s183, %s186
      %p192 = scmp.eq.s32.totalorder %s22, 0
      %p193 = por %p191, %p192
      %p194 = scmp.ne.s32.totalorder %s183, %s186
      %p195 = scmp.eq.s32.totalorder %s27, 1
      %p196 = por %p194, %p195
      %p197 = scmp.ne.s32.totalorder %s186, %s187
      %p198 = scmp.eq.s32.totalorder %s27, 0
      %p199 = por %p197, %p198
      %p200 = scmp.ne.s32.totalorder %s186, %s187
      %p201 = scmp.eq.s32.totalorder %s28, 1
      %p202 = por %p200, %p201
      %p204 = scmp.ne.s32.totalorder %s187, %s203
      %p205 = scmp.eq.s32.totalorder %s28, 0
      %p206 = por %p204, %p205
      %s207 = ssub.s32 %s22, %s29
      %p208 = scmp.eq.s32.totalorder %s207, 0
      %s210 = sadd.s32 %s209, 1
      %s211 = scalar_select %p208, %s209, %s210
      %p214 = pneg %p208
      %p215 = scmp.eq.s32.totalorder %s22, 1
      %p216 = por %p214, %p215
      %p217 = scmp.ne.s32.totalorder %s209, %s212
      %p218 = scmp.eq.s32.totalorder %s22, 0
      %p219 = por %p217, %p218
      %p220 = scmp.ne.s32.totalorder %s209, %s212
      %p221 = scmp.eq.s32.totalorder %s27, 1
      %p222 = por %p220, %p221
      %p223 = scmp.ne.s32.totalorder %s212, %s213
      %p224 = scmp.eq.s32.totalorder %s27, 0
      %p225 = por %p223, %p224
      %p226 = scmp.ne.s32.totalorder %s212, %s213
      %p227 = scmp.eq.s32.totalorder %s28, 1
      %p228 = por %p226, %p227
      %p230 = scmp.ne.s32.totalorder %s213, %s229
      %p231 = scmp.eq.s32.totalorder %s28, 0
      %p232 = por %p230, %p231
      %s233 = ssub.s32 %s22, %s29
      %p234 = scmp.eq.s32.totalorder %s233, 0
      %s236 = sadd.s32 %s235, 1
      %s237 = scalar_select %p234, %s235, %s236
      %p240 = pneg %p234
      %p241 = scmp.eq.s32.totalorder %s22, 1
      %p242 = por %p240, %p241
      %p243 = scmp.ne.s32.totalorder %s235, %s238
      %p244 = scmp.eq.s32.totalorder %s22, 0
      %p245 = por %p243, %p244
      %p246 = scmp.ne.s32.totalorder %s235, %s238
      %p247 = scmp.eq.s32.totalorder %s27, 1
      %p248 = por %p246, %p247
      %p249 = scmp.ne.s32.totalorder %s238, %s239
      %p250 = scmp.eq.s32.totalorder %s27, 0
      %p251 = por %p249, %p250
      %p252 = scmp.ne.s32.totalorder %s238, %s239
      %p253 = scmp.eq.s32.totalorder %s28, 1
      %p254 = por %p252, %p253
      %p256 = scmp.ne.s32.totalorder %s239, %s255
      %p257 = scmp.eq.s32.totalorder %s28, 0
      %p258 = por %p256, %p257
      %s259 = ssub.s32 %s22, %s29
      %p260 = scmp.eq.s32.totalorder %s259, 0
      %s262 = sadd.s32 %s261, 1
      %s263 = scalar_select %p260, %s261, %s262
      %p266 = pneg %p260
      %p267 = scmp.eq.s32.totalorder %s22, 1
      %p268 = por %p266, %p267
      %p269 = scmp.ne.s32.totalorder %s261, %s264
      %p270 = scmp.eq.s32.totalorder %s22, 0
      %p271 = por %p269, %p270
      %p272 = scmp.ne.s32.totalorder %s261, %s264
      %p273 = scmp.eq.s32.totalorder %s27, 1
      %p274 = por %p272, %p273
      %p275 = scmp.ne.s32.totalorder %s264, %s265
      %p276 = scmp.eq.s32.totalorder %s27, 0
      %p277 = por %p275, %p276
      %p278 = scmp.ne.s32.totalorder %s264, %s265
      %p279 = scmp.eq.s32.totalorder %s28, 1
      %p280 = por %p278, %p279
      %p282 = scmp.ne.s32.totalorder %s265, %s281
      %p283 = scmp.eq.s32.totalorder %s28, 0
      %p284 = por %p282, %p283
      %s285 = ssub.s32 %s22, %s29
      %p286 = scmp.eq.s32.totalorder %s285, 0
      %s288 = sadd.s32 %s287, 1
      %s289 = scalar_select %p286, %s287, %s288
      %p292 = pneg %p286
      %p293 = scmp.eq.s32.totalorder %s22, 1
      %p294 = por %p292, %p293
      %p295 = scmp.ne.s32.totalorder %s287, %s290
      %p296 = scmp.eq.s32.totalorder %s22, 0
      %p297 = por %p295, %p296
      %p298 = scmp.ne.s32.totalorder %s287, %s290
      %p299 = scmp.eq.s32.totalorder %s27, 1
      %p300 = por %p298, %p299
      %p301 = scmp.ne.s32.totalorder %s290, %s291
      %p302 = scmp.eq.s32.totalorder %s27, 0
      %p303 = por %p301, %p302
      %p304 = scmp.ne.s32.totalorder %s290, %s291
      %p305 = scmp.eq.s32.totalorder %s28, 1
      %p306 = por %p304, %p305
      %p308 = scmp.ne.s32.totalorder %s291, %s307
      %p309 = scmp.eq.s32.totalorder %s28, 0
      %p310 = por %p308, %p309
      %s311 = ssub.s32 %s22, %s29
      %p312 = scmp.eq.s32.totalorder %s311, 0
      %s314 = sadd.s32 %s313, 1
      %s315 = scalar_select %p312, %s313, %s314
      %p318 = pneg %p312
      %p319 = scmp.eq.s32.totalorder %s22, 1
      %p320 = por %p318, %p319
      %p321 = scmp.ne.s32.totalorder %s313, %s316
      %p322 = scmp.eq.s32.totalorder %s22, 0
      %p323 = por %p321, %p322
      %p324 = scmp.ne.s32.totalorder %s313, %s316
      %p325 = scmp.eq.s32.totalorder %s27, 1
      %p326 = por %p324, %p325
      %p327 = scmp.ne.s32.totalorder %s316, %s317
      %p328 = scmp.eq.s32.totalorder %s27, 0
      %p329 = por %p327, %p328
      %p330 = scmp.ne.s32.totalorder %s316, %s317
      %p331 = scmp.eq.s32.totalorder %s28, 1
      %p332 = por %p330, %p331
      %p334 = scmp.ne.s32.totalorder %s317, %s333
      %p335 = scmp.eq.s32.totalorder %s28, 0
      %p336 = por %p334, %p335
      %s337 = ssub.s32 %s22, %s29
      %p338 = scmp.eq.s32.totalorder %s337, 0
      %s340 = sadd.s32 %s339, 1
      %s341 = scalar_select %p338, %s339, %s340
      %p344 = pneg %p338
      %p345 = scmp.eq.s32.totalorder %s22, 1
      %p346 = por %p344, %p345
      %p347 = scmp.ne.s32.totalorder %s339, %s342
      %p348 = scmp.eq.s32.totalorder %s22, 0
      %p349 = por %p347, %p348
      %p350 = scmp.ne.s32.totalorder %s339, %s342
      %p351 = scmp.eq.s32.totalorder %s27, 1
      %p352 = por %p350, %p351
      %p353 = scmp.ne.s32.totalorder %s342, %s343
      %p354 = scmp.eq.s32.totalorder %s27, 0
      %p355 = por %p353, %p354
      %p356 = scmp.ne.s32.totalorder %s342, %s343
      %p357 = scmp.eq.s32.totalorder %s28, 1
      %p358 = por %p356, %p357
      %p360 = scmp.ne.s32.totalorder %s343, %s359
      %p361 = scmp.eq.s32.totalorder %s28, 0
      %p362 = por %p360, %p361
      %s364 = sadd.s32 %s363, 1
      %p367 = scmp.eq.s32.totalorder %s22, 1
      %p368 = scmp.ne.s32.totalorder %s363, %s365
      %p369 = scmp.eq.s32.totalorder %s22, 0
      %p370 = por %p368, %p369
      %p371 = scmp.ne.s32.totalorder %s363, %s365
      %p372 = scmp.eq.s32.totalorder %s27, 1
      %p373 = por %p371, %p372
      %p374 = scmp.ne.s32.totalorder %s365, %s366
      %p375 = scmp.eq.s32.totalorder %s27, 0
      %p376 = por %p374, %p375
      %p377 = scmp.ne.s32.totalorder %s365, %s366
      %p378 = scmp.eq.s32.totalorder %s28, 1
      %p379 = por %p377, %p378
      %p381 = scmp.ne.s32.totalorder %s366, %s380
      %p382 = scmp.eq.s32.totalorder %s28, 0
      %p383 = por %p381, %p382
      %s385 = sadd.s32 %s384, 1
      %p388 = scmp.eq.s32.totalorder %s22, 1
      %p389 = scmp.ne.s32.totalorder %s384, %s386
      %p390 = scmp.eq.s32.totalorder %s22, 0
      %p391 = por %p389, %p390
      %p392 = scmp.ne.s32.totalorder %s384, %s386
      %p393 = scmp.eq.s32.totalorder %s27, 1
      %p394 = por %p392, %p393
      %p395 = scmp.ne.s32.totalorder %s386, %s387
      %p396 = scmp.eq.s32.totalorder %s27, 0
      %p397 = por %p395, %p396
      %p398 = scmp.ne.s32.totalorder %s386, %s387
      %p399 = scmp.eq.s32.totalorder %s28, 1
      %p400 = por %p398, %p399
      %p402 = scmp.ne.s32.totalorder %s387, %s401
      %p403 = scmp.eq.s32.totalorder %s28, 0
      %p404 = por %p402, %p403
      %s406 = sadd.s32 %s405, 1
      %p409 = scmp.eq.s32.totalorder %s22, 1
      %p410 = scmp.ne.s32.totalorder %s405, %s407
      %p411 = scmp.eq.s32.totalorder %s22, 0
      %p412 = por %p410, %p411
      %p413 = scmp.ne.s32.totalorder %s405, %s407
      %p414 = scmp.eq.s32.totalorder %s27, 1
      %p415 = por %p413, %p414
      %p416 = scmp.ne.s32.totalorder %s407, %s408
      %p417 = scmp.eq.s32.totalorder %s27, 0
      %p418 = por %p416, %p417
      %p419 = scmp.ne.s32.totalorder %s407, %s408
      %p420 = scmp.eq.s32.totalorder %s28, 1
      %p421 = por %p419, %p420
      %p423 = scmp.ne.s32.totalorder %s408, %s422
      %p424 = scmp.eq.s32.totalorder %s28, 0
      %p425 = por %p423, %p424
      %p426 = scmp.le.s32.totalorder 1, %s22
      %p427 = scmp.lt.s32.totalorder %s22, 3
      %p428 = pnand %p426, %p427
      %p429 = pneg %p428
      // Predicated region
      $region9: #{forward.3} parent=5 // pred_check
        _
      $region10: #{forward.3} parent=5 // pred_check_branch
        %431 = sbr.rel (%p428) target = $region12
      $region11: #{forward.3} parent=5 // pred_region
        %s432 = ssub.s32 %s22, 1
        // Predicated region
        $region13: #{forward.3} parent=11 // pred_check
          %p433 = pneg %p43
        $region14: #{forward.3} parent=11 // pred_check_branch
          %435 = sbr.rel (%p433) target = $region16
        $region15: #{forward.3} parent=11 // pred_region
          _
        $region16: #{forward.3} parent=11 // pred_fallthru
          _
        // Predicated region
        $region17: #{forward.3} parent=11 // pred_check
          %p436 = pneg %p376
        $region18: #{forward.3} parent=11 // pred_check_branch
          %438 = sbr.rel (%p436) target = $region20
        $region19: #{forward.3} parent=11 // pred_region
          _
        $region20: #{forward.3} parent=11 // pred_fallthru
          _
        // Predicated region
        $region21: #{forward.3} parent=11 // pred_check
          %p439 = pneg %p397
        $region22: #{forward.3} parent=11 // pred_check_branch
          %441 = sbr.rel (%p439) target = $region24
        $region23: #{forward.3} parent=11 // pred_region
          _
        $region24: #{forward.3} parent=11 // pred_fallthru
          _
      $region12: #{forward.3} parent=5 // pred_fallthru
        _
      %p442 = scmp.lt.s32.totalorder %s22, 2
      // Predicated region
      $region25: #{forward.3} parent=5 // pred_check
        %p443 = pneg %p442
      $region26: #{forward.3} parent=5 // pred_check_branch
        %445 = sbr.rel (%p443) target = $region28
      $region27: #{forward.3} parent=5 // pred_region
        // Predicated region
        $region29: #{forward.3} parent=27 // pred_check
          %p446 = pneg %p63
        $region30: #{forward.3} parent=27 // pred_check_branch
          %448 = sbr.rel (%p446) target = $region32
        $region31: #{forward.3} parent=27 // pred_region
          %p449 = scmp.lt.s32.totalorder %s22, 1
          %s450 = scalar_select %p449, %s22, 1
          %s451 = scalar_lea.vmem %s1, %s450
        $region32: #{forward.3} parent=27 // pred_fallthru
          _
        // Predicated region
        $region33: #{forward.3} parent=27 // pred_check
          %p452 = pneg %p89
        $region34: #{forward.3} parent=27 // pred_check_branch
          %454 = sbr.rel (%p452) target = $region36
        $region35: #{forward.3} parent=27 // pred_region
          %p455 = scmp.lt.s32.totalorder %s22, 1
          %s456 = scalar_select %p455, %s22, 1
          %s457 = scalar_lea.vmem %s2, %s456
        $region36: #{forward.3} parent=27 // pred_fallthru
          _
        // Predicated region
        $region37: #{forward.3} parent=27 // pred_check
          %p458 = pneg %p115
        $region38: #{forward.3} parent=27 // pred_check_branch
          %460 = sbr.rel (%p458) target = $region40
        $region39: #{forward.3} parent=27 // pred_region
          %p461 = scmp.lt.s32.totalorder %s22, 1
          %s462 = scalar_select %p461, %s22, 1
          %s463 = smul.addr %s462, 48
          %s464 = smul.addr %s463, 8
          %s465 = scalar_lea.vmem %s3, %s464
        $region40: #{forward.3} parent=27 // pred_fallthru
          _
        // Predicated region
        $region41: #{forward.3} parent=27 // pred_check
          %p466 = pneg %p141
        $region42: #{forward.3} parent=27 // pred_check_branch
          %468 = sbr.rel (%p466) target = $region44
        $region43: #{forward.3} parent=27 // pred_region
          %p469 = scmp.lt.s32.totalorder %s22, 1
          %s470 = scalar_select %p469, %s22, 1
          %s471 = smul.addr %s470, 3
          %s472 = scalar_lea.vmem %s4, %s471
        $region44: #{forward.3} parent=27 // pred_fallthru
          _
        // Predicated region
        $region45: #{forward.3} parent=27 // pred_check
          %p473 = pneg %p167
        $region46: #{forward.3} parent=27 // pred_check_branch
          %475 = sbr.rel (%p473) target = $region48
        $region47: #{forward.3} parent=27 // pred_region
          %p476 = scmp.lt.s32.totalorder %s22, 1
          %s477 = scalar_select %p476, %s22, 1
          %s478 = smul.addr %s477, 16
          %s479 = smul.addr %s478, 8
          %s480 = scalar_lea.vmem %s5, %s479
        $region48: #{forward.3} parent=27 // pred_fallthru
          _
        // Predicated region
        $region49: #{forward.3} parent=27 // pred_check
          %p481 = pneg %p193
        $region50: #{forward.3} parent=27 // pred_check_branch
          %483 = sbr.rel (%p481) target = $region52
        $region51: #{forward.3} parent=27 // pred_region
          %p484 = scmp.lt.s32.totalorder %s22, 1
          %s485 = scalar_select %p484, %s22, 1
          %s486 = scalar_lea.vmem %s6, %s485
        $region52: #{forward.3} parent=27 // pred_fallthru
          _
        // Predicated region
        $region53: #{forward.3} parent=27 // pred_check
          %p487 = pneg %p219
        $region54: #{forward.3} parent=27 // pred_check_branch
          %489 = sbr.rel (%p487) target = $region56
        $region55: #{forward.3} parent=27 // pred_region
          %p490 = scmp.lt.s32.totalorder %s22, 1
          %s491 = scalar_select %p490, %s22, 1
          %s492 = scalar_lea.vmem %s7, %s491
        $region56: #{forward.3} parent=27 // pred_fallthru
          _
        // Predicated region
        $region57: #{forward.3} parent=27 // pred_check
          %p493 = pneg %p245
        $region58: #{forward.3} parent=27 // pred_check_branch
          %495 = sbr.rel (%p493) target = $region60
        $region59: #{forward.3} parent=27 // pred_region
          %p496 = scmp.lt.s32.totalorder %s22, 1
          %s497 = scalar_select %p496, %s22, 1
          %s498 = scalar_lea.vmem %s8, %s497
        $region60: #{forward.3} parent=27 // pred_fallthru
          _
        // Predicated region
        $region61: #{forward.3} parent=27 // pred_check
          %p499 = pneg %p271
        $region62: #{forward.3} parent=27 // pred_check_branch
          %501 = sbr.rel (%p499) target = $region64
        $region63: #{forward.3} parent=27 // pred_region
          %p502 = scmp.lt.s32.totalorder %s22, 1
          %s503 = scalar_select %p502, %s22, 1
          %s504 = smul.addr %s503, 32
          %s505 = smul.addr %s504, 8
          %s506 = scalar_lea.vmem %s9, %s505
        $region64: #{forward.3} parent=27 // pred_fallthru
          _
        // Predicated region
        $region65: #{forward.3} parent=27 // pred_check
          %p507 = pneg %p297
        $region66: #{forward.3} parent=27 // pred_check_branch
          %509 = sbr.rel (%p507) target = $region68
        $region67: #{forward.3} parent=27 // pred_region
          %p510 = scmp.lt.s32.totalorder %s22, 1
          %s511 = scalar_select %p510, %s22, 1
          %s512 = smul.addr %s511, 2
          %s513 = scalar_lea.vmem %s10, %s512
        $region68: #{forward.3} parent=27 // pred_fallthru
          _
        // Predicated region
        $region69: #{forward.3} parent=27 // pred_check
          %p514 = pneg %p323
        $region70: #{forward.3} parent=27 // pred_check_branch
          %516 = sbr.rel (%p514) target = $region72
        $region71: #{forward.3} parent=27 // pred_region
          %p517 = scmp.lt.s32.totalorder %s22, 1
          %s518 = scalar_select %p517, %s22, 1
          %s519 = smul.addr %s518, 32
          %s520 = smul.addr %s519, 8
          %s521 = scalar_lea.vmem %s11, %s520
        $region72: #{forward.3} parent=27 // pred_fallthru
          _
        // Predicated region
        $region73: #{forward.3} parent=27 // pred_check
          %p522 = pneg %p349
        $region74: #{forward.3} parent=27 // pred_check_branch
          %524 = sbr.rel (%p522) target = $region76
        $region75: #{forward.3} parent=27 // pred_region
          %p525 = scmp.lt.s32.totalorder %s22, 1
          %s526 = scalar_select %p525, %s22, 1
          %s527 = scalar_lea.vmem %s12, %s526
        $region76: #{forward.3} parent=27 // pred_fallthru
          _
      $region28: #{forward.3} parent=5 // pred_fallthru
        _
      %p528 = scmp.le.s32.totalorder 1, %s22
      %p529 = scmp.lt.s32.totalorder %s22, 3
      %p530 = pnand %p528, %p529
      %p531 = pneg %p530
      // Predicated region
      $region77: #{forward.3} parent=5 // pred_check
        _
      $region78: #{forward.3} parent=5 // pred_check_branch
        %533 = sbr.rel (%p530) target = $region80
      $region79: #{forward.3} parent=5 // pred_region
        %s534 = ssub.s32 %s22, 1
        %p535 = pneg %p43
        %p536 = pneg %p40
        %p537 = scmp.lt.s32.totalorder %s27, 1
        %s538 = scalar_select %p537, %s27, 1
        %s539 = scalar_lea.vmem %s1, %s538
        %p540 = pneg %p69
        %p541 = pneg %p66
        %p542 = scmp.lt.s32.totalorder %s27, 1
        %s543 = scalar_select %p542, %s27, 1
        %s544 = scalar_lea.vmem %s2, %s543
        %p545 = pneg %p95
        %p546 = pneg %p92
        %p547 = scmp.lt.s32.totalorder %s27, 1
        %s548 = scalar_select %p547, %s27, 1
        %s549 = smul.addr %s548, 48
        %s550 = smul.addr %s549, 8
        %s551 = scalar_lea.vmem %s3, %s550
        %p552 = pneg %p121
        %p553 = pneg %p118
        %p554 = scmp.lt.s32.totalorder %s27, 1
        %s555 = scalar_select %p554, %s27, 1
        %s556 = smul.addr %s555, 3
        %s557 = scalar_lea.vmem %s4, %s556
        %p558 = pneg %p147
        %p559 = pneg %p144
        %p560 = scmp.lt.s32.totalorder %s27, 1
        %s561 = scalar_select %p560, %s27, 1
        %s562 = smul.addr %s561, 16
        %s563 = smul.addr %s562, 8
        %s564 = scalar_lea.vmem %s5, %s563
        %p565 = pneg %p173
        %p566 = pneg %p170
        %p567 = scmp.lt.s32.totalorder %s27, 1
        %s568 = scalar_select %p567, %s27, 1
        %s569 = scalar_lea.vmem %s6, %s568
        %p570 = pneg %p199
        %p571 = pneg %p196
        %p572 = scmp.lt.s32.totalorder %s27, 1
        %s573 = scalar_select %p572, %s27, 1
        %s574 = scalar_lea.vmem %s7, %s573
        %p575 = pneg %p225
        %p576 = pneg %p222
        %p577 = scmp.lt.s32.totalorder %s27, 1
        %s578 = scalar_select %p577, %s27, 1
        %s579 = scalar_lea.vmem %s8, %s578
        %p580 = pneg %p251
        %p581 = pneg %p248
        %p582 = scmp.lt.s32.totalorder %s27, 1
        %s583 = scalar_select %p582, %s27, 1
        %s584 = smul.addr %s583, 32
        %s585 = smul.addr %s584, 8
        %s586 = scalar_lea.vmem %s9, %s585
        %p587 = pneg %p277
        %p588 = pneg %p274
        %p589 = scmp.lt.s32.totalorder %s27, 1
        %s590 = scalar_select %p589, %s27, 1
        %s591 = smul.addr %s590, 2
        %s592 = scalar_lea.vmem %s10, %s591
        %p593 = pneg %p303
        %p594 = pneg %p300
        %p595 = scmp.lt.s32.totalorder %s27, 1
        %s596 = scalar_select %p595, %s27, 1
        %s597 = smul.addr %s596, 32
        %s598 = smul.addr %s597, 8
        %s599 = scalar_lea.vmem %s11, %s598
        %p600 = pneg %p329
        %p601 = pneg %p326
        %p602 = scmp.lt.s32.totalorder %s27, 1
        %s603 = scalar_select %p602, %s27, 1
        %s604 = scalar_lea.vmem %s12, %s603
        %p605 = pneg %p355
        %p606 = pneg %p352
        %p607 = pneg %p376
        %p608 = pneg %p373
        %p609 = pneg %p397
        %p610 = pneg %p394
        %p611 = pneg %p418
        %p612 = pneg %p415
        %p613 = scmp.lt.s32.totalorder %s27, 1
        %s614 = scalar_select %p613, %s27, 1
        %s615 = scalar_lea.vmem %s1, %s614
        %p616 = scmp.lt.s32.totalorder %s27, 1
        %s617 = scalar_select %p616, %s27, 1
        %s618 = scalar_lea.vmem %s2, %s617
        %p619 = scmp.lt.s32.totalorder %s27, 1
        %s620 = scalar_select %p619, %s27, 1
        %s621 = smul.addr %s620, 48
        %s622 = smul.addr %s621, 8
        %s623 = scalar_lea.vmem %s3, %s622
        %p624 = scmp.lt.s32.totalorder %s27, 1
        %s625 = scalar_select %p624, %s27, 1
        %s626 = smul.addr %s625, 3
        %s627 = scalar_lea.vmem %s4, %s626
        %p628 = scmp.lt.s32.totalorder %s27, 1
        %s629 = scalar_select %p628, %s27, 1
        %s630 = smul.addr %s629, 16
        %s631 = smul.addr %s630, 8
        %s632 = scalar_lea.vmem %s5, %s631
        %p633 = scmp.lt.s32.totalorder %s27, 1
        %s634 = scalar_select %p633, %s27, 1
        %s635 = scalar_lea.vmem %s6, %s634
        %p636 = scmp.lt.s32.totalorder %s27, 1
        %s637 = scalar_select %p636, %s27, 1
        %s638 = scalar_lea.vmem %s7, %s637
        %p639 = scmp.lt.s32.totalorder %s27, 1
        %s640 = scalar_select %p639, %s27, 1
        %s641 = scalar_lea.vmem %s8, %s640
        %p642 = scmp.lt.s32.totalorder %s27, 1
        %s643 = scalar_select %p642, %s27, 1
        %s644 = smul.addr %s643, 32
        %s645 = smul.addr %s644, 8
        %s646 = scalar_lea.vmem %s9, %s645
        %p647 = scmp.lt.s32.totalorder %s27, 1
        %s648 = scalar_select %p647, %s27, 1
        %s649 = smul.addr %s648, 2
        %s650 = scalar_lea.vmem %s10, %s649
        %p651 = scmp.lt.s32.totalorder %s27, 1
        %s652 = scalar_select %p651, %s27, 1
        %s653 = smul.addr %s652, 32
        %s654 = smul.addr %s653, 8
        %s655 = scalar_lea.vmem %s11, %s654
        %p656 = scmp.lt.s32.totalorder %s27, 1
        %s657 = scalar_select %p656, %s27, 1
        %s658 = scalar_lea.vmem %s12, %s657
        %p659 = scmp.eq.s32.totalorder %s27, 0
        // Predicated region
        $region81: #{forward.3} parent=79 // pred_check
          %p660 = pneg %p659
        $region82: #{forward.3} parent=79 // pred_check_branch
          %662 = sbr.rel (%p660) target = $region84
        $region83: #{forward.3} parent=79 // pred_region
          %v663 = vld [vmem:[%s0] sm:$0xff]
          %v664 = vld [vmem:[%s0 + $0x8] sm:$0xff]
          %v665 = vld [vmem:[%s0 + $0x10] sm:$0xff]
          %v666 = vld [vmem:[%s0 + $0x18] sm:$0xff]
          %v667 = vld [vmem:[%s0 + $0x20] sm:$0xff]
          %v668 = vld [vmem:[%s0 + $0x28] sm:$0xff]
          %v669 = vld [vmem:[%s0 + $0x30] sm:$0xff]
          %v670 = vld [vmem:[%s0 + $0x38] sm:$0xff]
          %v671 = vld [vmem:[%s0 + $0x40] sm:$0xff]
          %v672 = vld [vmem:[%s0 + $0x48] sm:$0xff]
          %v673 = vld [vmem:[%s0 + $0x50] sm:$0xff]
          %v674 = vld [vmem:[%s0 + $0x58] sm:$0xff]
          %v675 = vld [vmem:[%s0 + $0x60] sm:$0xff]
          %v676 = vld [vmem:[%s0 + $0x68] sm:$0xff]
          %v677 = vld [vmem:[%s0 + $0x70] sm:$0xff]
          %v678 = vld [vmem:[%s0 + $0x78] sm:$0xff]
          %679 = vst [vmem:[#allocation2] sm:$0xff] %v663
          %680 = vst [vmem:[#allocation2 + $0x8] sm:$0xff] %v664
          %681 = vst [vmem:[#allocation2 + $0x10] sm:$0xff] %v665
          %682 = vst [vmem:[#allocation2 + $0x18] sm:$0xff] %v666
          %683 = vst [vmem:[#allocation2 + $0x20] sm:$0xff] %v667
          %684 = vst [vmem:[#allocation2 + $0x28] sm:$0xff] %v668
          %685 = vst [vmem:[#allocation2 + $0x30] sm:$0xff] %v669
          %686 = vst [vmem:[#allocation2 + $0x38] sm:$0xff] %v670
          %687 = vst [vmem:[#allocation2 + $0x40] sm:$0xff] %v671
          %688 = vst [vmem:[#allocation2 + $0x48] sm:$0xff] %v672
          %689 = vst [vmem:[#allocation2 + $0x50] sm:$0xff] %v673
          %690 = vst [vmem:[#allocation2 + $0x58] sm:$0xff] %v674
          %691 = vst [vmem:[#allocation2 + $0x60] sm:$0xff] %v675
          %692 = vst [vmem:[#allocation2 + $0x68] sm:$0xff] %v676
          %693 = vst [vmem:[#allocation2 + $0x70] sm:$0xff] %v677
          %694 = vst [vmem:[#allocation2 + $0x78] sm:$0xff] %v678
        $region84: #{forward.3} parent=79 // pred_fallthru
          _
        %v695 = vld [vmem:[#allocation2] sm:$0xff]
        %v696 = vld [vmem:[#allocation2 + $0x8] sm:$0xff]
        %v697 = vld [vmem:[#allocation2 + $0x10] sm:$0xff]
        %v698 = vld [vmem:[#allocation2 + $0x18] sm:$0xff]
        %v699 = vld [vmem:[#allocation2 + $0x20] sm:$0xff]
        %v700 = vld [vmem:[#allocation2 + $0x28] sm:$0xff]
        %v701 = vld [vmem:[#allocation2 + $0x30] sm:$0xff]
        %v702 = vld [vmem:[#allocation2 + $0x38] sm:$0xff]
        %v703 = vld [vmem:[#allocation2 + $0x40] sm:$0xff]
        %v704 = vld [vmem:[#allocation2 + $0x48] sm:$0xff]
        %v705 = vld [vmem:[#allocation2 + $0x50] sm:$0xff]
        %v706 = vld [vmem:[#allocation2 + $0x58] sm:$0xff]
        %v707 = vld [vmem:[#allocation2 + $0x60] sm:$0xff]
        %v708 = vld [vmem:[#allocation2 + $0x68] sm:$0xff]
        %v709 = vld [vmem:[#allocation2 + $0x70] sm:$0xff]
        %v710 = vld [vmem:[#allocation2 + $0x78] sm:$0xff]
        %v711 = vld [vmem:[%s615] sm:$0x1]
        %v712 = vld [vmem:[%s618] sm:$0x1]
        %713 = vadd.xlane.f32.xlu0 %v695
        %v714 = vpop.xlane.xlu0 %713
        %715 = vadd.xlane.f32.xlu0 %v696
        %v716 = vpop.xlane.xlu0 %715
        %717 = vadd.xlane.f32.xlu0 %v697
        %v718 = vpop.xlane.xlu0 %717
        %719 = vadd.xlane.f32.xlu0 %v698
        %v720 = vpop.xlane.xlu0 %719
        %721 = vadd.xlane.f32.xlu0 %v699
        %v722 = vpop.xlane.xlu0 %721
        %723 = vadd.xlane.f32.xlu0 %v700
        %v724 = vpop.xlane.xlu0 %723
        %725 = vadd.xlane.f32.xlu0 %v701
        %v726 = vpop.xlane.xlu0 %725
        %727 = vadd.xlane.f32.xlu0 %v702
        %v728 = vpop.xlane.xlu0 %727
        %729 = vadd.xlane.f32.xlu0 %v703
        %v730 = vpop.xlane.xlu0 %729
        %731 = vadd.xlane.f32.xlu0 %v704
        %v732 = vpop.xlane.xlu0 %731
        %733 = vadd.xlane.f32.xlu0 %v705
        %v734 = vpop.xlane.xlu0 %733
        %735 = vadd.xlane.f32.xlu0 %v706
        %v736 = vpop.xlane.xlu0 %735
        %737 = vadd.xlane.f32.xlu0 %v707
        %v738 = vpop.xlane.xlu0 %737
        %739 = vadd.xlane.f32.xlu0 %v708
        %v740 = vpop.xlane.xlu0 %739
        %741 = vadd.xlane.f32.xlu0 %v709
        %v742 = vpop.xlane.xlu0 %741
        %743 = vadd.xlane.f32.xlu0 %v710
        %v744 = vpop.xlane.xlu0 %743
        %v745 = vrcp.pop 128.0
        %v746 = vmul.f32 128.0, %v745
        %v747 = vsub.f32 1.0, %v746
        %v748 = vmul.f32 %v745, %v747
        %v749 = vadd.f32 %v745, %v748
        %vm750 = vweird.f32 %v745
        %v751 = vsel %vm750, %v745, %v749
        %v752 = vmul.f32 %v714, %v751
        %v753 = vmul.f32 %v716, %v751
        %v754 = vmul.f32 %v718, %v751
        %v755 = vmul.f32 %v720, %v751
        %v756 = vmul.f32 %v722, %v751
        %v757 = vmul.f32 %v724, %v751
        %v758 = vmul.f32 %v726, %v751
        %v759 = vmul.f32 %v728, %v751
        %v760 = vmul.f32 %v730, %v751
        %v761 = vmul.f32 %v732, %v751
        %v762 = vmul.f32 %v734, %v751
        %v763 = vmul.f32 %v736, %v751
        %v764 = vmul.f32 %v738, %v751
        %v765 = vmul.f32 %v740, %v751
        %v766 = vmul.f32 %v742, %v751
        %v767 = vmul.f32 %v744, %v751
        %v768 = vsub.f32 %v695, %v752
        %v769 = vsub.f32 %v696, %v753
        %v770 = vsub.f32 %v697, %v754
        %v771 = vsub.f32 %v698, %v755
        %v772 = vsub.f32 %v699, %v756
        %v773 = vsub.f32 %v700, %v757
        %v774 = vsub.f32 %v701, %v758
        %v775 = vsub.f32 %v702, %v759
        %v776 = vsub.f32 %v703, %v760
        %v777 = vsub.f32 %v704, %v761
        %v778 = vsub.f32 %v705, %v762
        %v779 = vsub.f32 %v706, %v763
        %v780 = vsub.f32 %v707, %v764
        %v781 = vsub.f32 %v708, %v765
        %v782 = vsub.f32 %v709, %v766
        %v783 = vsub.f32 %v710, %v767
        %v784 = vmul.f32 %v768, %v768
        %v785 = vmul.f32 %v769, %v769
        %v786 = vmul.f32 %v770, %v770
        %v787 = vmul.f32 %v771, %v771
        %v788 = vmul.f32 %v772, %v772
        %v789 = vmul.f32 %v773, %v773
        %v790 = vmul.f32 %v774, %v774
        %v791 = vmul.f32 %v775, %v775
        %v792 = vmul.f32 %v776, %v776
        %v793 = vmul.f32 %v777, %v777
        %v794 = vmul.f32 %v778, %v778
        %v795 = vmul.f32 %v779, %v779
        %v796 = vmul.f32 %v780, %v780
        %v797 = vmul.f32 %v781, %v781
        %v798 = vmul.f32 %v782, %v782
        %v799 = vmul.f32 %v783, %v783
        %800 = vadd.xlane.f32.xlu0 %v784
        %v801 = vpop.xlane.xlu0 %800
        %802 = vadd.xlane.f32.xlu0 %v785
        %v803 = vpop.xlane.xlu0 %802
        %804 = vadd.xlane.f32.xlu0 %v786
        %v805 = vpop.xlane.xlu0 %804
        %806 = vadd.xlane.f32.xlu0 %v787
        %v807 = vpop.xlane.xlu0 %806
        %808 = vadd.xlane.f32.xlu0 %v788
        %v809 = vpop.xlane.xlu0 %808
        %810 = vadd.xlane.f32.xlu0 %v789
        %v811 = vpop.xlane.xlu0 %810
        %812 = vadd.xlane.f32.xlu0 %v790
        %v813 = vpop.xlane.xlu0 %812
        %814 = vadd.xlane.f32.xlu0 %v791
        %v815 = vpop.xlane.xlu0 %814
        %816 = vadd.xlane.f32.xlu0 %v792
        %v817 = vpop.xlane.xlu0 %816
        %818 = vadd.xlane.f32.xlu0 %v793
        %v819 = vpop.xlane.xlu0 %818
        %820 = vadd.xlane.f32.xlu0 %v794
        %v821 = vpop.xlane.xlu0 %820
        %822 = vadd.xlane.f32.xlu0 %v795
        %v823 = vpop.xlane.xlu0 %822
        %824 = vadd.xlane.f32.xlu0 %v796
        %v825 = vpop.xlane.xlu0 %824
        %826 = vadd.xlane.f32.xlu0 %v797
        %v827 = vpop.xlane.xlu0 %826
        %828 = vadd.xlane.f32.xlu0 %v798
        %v829 = vpop.xlane.xlu0 %828
        %830 = vadd.xlane.f32.xlu0 %v799
        %v831 = vpop.xlane.xlu0 %830
        %v832 = vmul.f32 %v801, %v751
        %v833 = vmul.f32 %v803, %v751
        %v834 = vmul.f32 %v805, %v751
        %v835 = vmul.f32 %v807, %v751
        %v836 = vmul.f32 %v809, %v751
        %v837 = vmul.f32 %v811, %v751
        %v838 = vmul.f32 %v813, %v751
        %v839 = vmul.f32 %v815, %v751
        %v840 = vmul.f32 %v817, %v751
        %v841 = vmul.f32 %v819, %v751
        %v842 = vmul.f32 %v821, %v751
        %v843 = vmul.f32 %v823, %v751
        %v844 = vmul.f32 %v825, %v751
        %v845 = vmul.f32 %v827, %v751
        %v846 = vmul.f32 %v829, %v751
        %v847 = vmul.f32 %v831, %v751
        %v848 = vadd.f32 %v832, 1e-05
        %v849 = vadd.f32 %v833, 1e-05
        %v850 = vadd.f32 %v834, 1e-05
        %v851 = vadd.f32 %v835, 1e-05
        %v852 = vadd.f32 %v836, 1e-05
        %v853 = vadd.f32 %v837, 1e-05
        %v854 = vadd.f32 %v838, 1e-05
        %v855 = vadd.f32 %v839, 1e-05
        %v856 = vadd.f32 %v840, 1e-05
        %v857 = vadd.f32 %v841, 1e-05
        %v858 = vadd.f32 %v842, 1e-05
        %v859 = vadd.f32 %v843, 1e-05
        %v860 = vadd.f32 %v844, 1e-05
        %v861 = vadd.f32 %v845, 1e-05
        %v862 = vadd.f32 %v846, 1e-05
        %v863 = vadd.f32 %v847, 1e-05
        %v864 = vrsqrt.pop %v848
        %v865 = vmul.f32 %v864, %v848
        %v866 = vmul.f32 %v865, %v864
        %v867 = vmul.f32 0.5, %v866
        %v868 = vsub.f32 1.5, %v867
        %v869 = vmul.f32 %v864, %v868
        %vm870 = vweird.f32 %v848
        %vm871 = vweird.f32 %v864
        %vm872 = vmor %vm870, %vm871
        %v873 = vsel %vm872, %v864, %v869
        %v874 = vrsqrt.pop %v849
        %v875 = vmul.f32 %v874, %v849
        %v876 = vmul.f32 %v875, %v874
        %v877 = vmul.f32 0.5, %v876
        %v878 = vsub.f32 1.5, %v877
        %v879 = vmul.f32 %v874, %v878
        %vm880 = vweird.f32 %v849
        %vm881 = vweird.f32 %v874
        %vm882 = vmor %vm880, %vm881
        %v883 = vsel %vm882, %v874, %v879
        %v884 = vrsqrt.pop %v850
        %v885 = vmul.f32 %v884, %v850
        %v886 = vmul.f32 %v885, %v884
        %v887 = vmul.f32 0.5, %v886
        %v888 = vsub.f32 1.5, %v887
        %v889 = vmul.f32 %v884, %v888
        %vm890 = vweird.f32 %v850
        %vm891 = vweird.f32 %v884
        %vm892 = vmor %vm890, %vm891
        %v893 = vsel %vm892, %v884, %v889
        %v894 = vrsqrt.pop %v851
        %v895 = vmul.f32 %v894, %v851
        %v896 = vmul.f32 %v895, %v894
        %v897 = vmul.f32 0.5, %v896
        %v898 = vsub.f32 1.5, %v897
        %v899 = vmul.f32 %v894, %v898
        %vm900 = vweird.f32 %v851
        %vm901 = vweird.f32 %v894
        %vm902 = vmor %vm900, %vm901
        %v903 = vsel %vm902, %v894, %v899
        %v904 = vrsqrt.pop %v852
        %v905 = vmul.f32 %v904, %v852
        %v906 = vmul.f32 %v905, %v904
        %v907 = vmul.f32 0.5, %v906
        %v908 = vsub.f32 1.5, %v907
        %v909 = vmul.f32 %v904, %v908
        %vm910 = vweird.f32 %v852
        %vm911 = vweird.f32 %v904
        %vm912 = vmor %vm910, %vm911
        %v913 = vsel %vm912, %v904, %v909
        %v914 = vrsqrt.pop %v853
        %v915 = vmul.f32 %v914, %v853
        %v916 = vmul.f32 %v915, %v914
        %v917 = vmul.f32 0.5, %v916
        %v918 = vsub.f32 1.5, %v917
        %v919 = vmul.f32 %v914, %v918
        %vm920 = vweird.f32 %v853
        %vm921 = vweird.f32 %v914
        %vm922 = vmor %vm920, %vm921
        %v923 = vsel %vm922, %v914, %v919
        %v924 = vrsqrt.pop %v854
        %v925 = vmul.f32 %v924, %v854
        %v926 = vmul.f32 %v925, %v924
        %v927 = vmul.f32 0.5, %v926
        %v928 = vsub.f32 1.5, %v927
        %v929 = vmul.f32 %v924, %v928
        %vm930 = vweird.f32 %v854
        %vm931 = vweird.f32 %v924
        %vm932 = vmor %vm930, %vm931
        %v933 = vsel %vm932, %v924, %v929
        %v934 = vrsqrt.pop %v855
        %v935 = vmul.f32 %v934, %v855
        %v936 = vmul.f32 %v935, %v934
        %v937 = vmul.f32 0.5, %v936
        %v938 = vsub.f32 1.5, %v937
        %v939 = vmul.f32 %v934, %v938
        %vm940 = vweird.f32 %v855
        %vm941 = vweird.f32 %v934
        %vm942 = vmor %vm940, %vm941
        %v943 = vsel %vm942, %v934, %v939
        %v944 = vrsqrt.pop %v856
        %v945 = vmul.f32 %v944, %v856
        %v946 = vmul.f32 %v945, %v944
        %v947 = vmul.f32 0.5, %v946
        %v948 = vsub.f32 1.5, %v947
        %v949 = vmul.f32 %v944, %v948
        %vm950 = vweird.f32 %v856
        %vm951 = vweird.f32 %v944
        %vm952 = vmor %vm950, %vm951
        %v953 = vsel %vm952, %v944, %v949
        %v954 = vrsqrt.pop %v857
        %v955 = vmul.f32 %v954, %v857
        %v956 = vmul.f32 %v955, %v954
        %v957 = vmul.f32 0.5, %v956
        %v958 = vsub.f32 1.5, %v957
        %v959 = vmul.f32 %v954, %v958
        %vm960 = vweird.f32 %v857
        %vm961 = vweird.f32 %v954
        %vm962 = vmor %vm960, %vm961
        %v963 = vsel %vm962, %v954, %v959
        %v964 = vrsqrt.pop %v858
        %v965 = vmul.f32 %v964, %v858
        %v966 = vmul.f32 %v965, %v964
        %v967 = vmul.f32 0.5, %v966
        %v968 = vsub.f32 1.5, %v967
        %v969 = vmul.f32 %v964, %v968
        %vm970 = vweird.f32 %v858
        %vm971 = vweird.f32 %v964
        %vm972 = vmor %vm970, %vm971
        %v973 = vsel %vm972, %v964, %v969
        %v974 = vrsqrt.pop %v859
        %v975 = vmul.f32 %v974, %v859
        %v976 = vmul.f32 %v975, %v974
        %v977 = vmul.f32 0.5, %v976
        %v978 = vsub.f32 1.5, %v977
        %v979 = vmul.f32 %v974, %v978
        %vm980 = vweird.f32 %v859
        %vm981 = vweird.f32 %v974
        %vm982 = vmor %vm980, %vm981
        %v983 = vsel %vm982, %v974, %v979
        %v984 = vrsqrt.pop %v860
        %v985 = vmul.f32 %v984, %v860
        %v986 = vmul.f32 %v985, %v984
        %v987 = vmul.f32 0.5, %v986
        %v988 = vsub.f32 1.5, %v987
        %v989 = vmul.f32 %v984, %v988
        %vm990 = vweird.f32 %v860
        %vm991 = vweird.f32 %v984
        %vm992 = vmor %vm990, %vm991
        %v993 = vsel %vm992, %v984, %v989
        %v994 = vrsqrt.pop %v861
        %v995 = vmul.f32 %v994, %v861
        %v996 = vmul.f32 %v995, %v994
        %v997 = vmul.f32 0.5, %v996
        %v998 = vsub.f32 1.5, %v997
        %v999 = vmul.f32 %v994, %v998
        %vm1000 = vweird.f32 %v861
        %vm1001 = vweird.f32 %v994
        %vm1002 = vmor %vm1000, %vm1001
        %v1003 = vsel %vm1002, %v994, %v999
        %v1004 = vrsqrt.pop %v862
        %v1005 = vmul.f32 %v1004, %v862
        %v1006 = vmul.f32 %v1005, %v1004
        %v1007 = vmul.f32 0.5, %v1006
        %v1008 = vsub.f32 1.5, %v1007
        %v1009 = vmul.f32 %v1004, %v1008
        %vm1010 = vweird.f32 %v862
        %vm1011 = vweird.f32 %v1004
        %vm1012 = vmor %vm1010, %vm1011
        %v1013 = vsel %vm1012, %v1004, %v1009
        %v1014 = vrsqrt.pop %v863
        %v1015 = vmul.f32 %v1014, %v863
        %v1016 = vmul.f32 %v1015, %v1014
        %v1017 = vmul.f32 0.5, %v1016
        %v1018 = vsub.f32 1.5, %v1017
        %v1019 = vmul.f32 %v1014, %v1018
        %vm1020 = vweird.f32 %v863
        %vm1021 = vweird.f32 %v1014
        %vm1022 = vmor %vm1020, %vm1021
        %v1023 = vsel %vm1022, %v1014, %v1019
        %v1024 = vmul.f32 %v768, %v873
        %v1025 = vmul.f32 %v769, %v883
        %v1026 = vmul.f32 %v770, %v893
        %v1027 = vmul.f32 %v771, %v903
        %v1028 = vmul.f32 %v772, %v913
        %v1029 = vmul.f32 %v773, %v923
        %v1030 = vmul.f32 %v774, %v933
        %v1031 = vmul.f32 %v775, %v943
        %v1032 = vmul.f32 %v776, %v953
        %v1033 = vmul.f32 %v777, %v963
        %v1034 = vmul.f32 %v778, %v973
        %v1035 = vmul.f32 %v779, %v983
        %v1036 = vmul.f32 %v780, %v993
        %v1037 = vmul.f32 %v781, %v1003
        %v1038 = vmul.f32 %v782, %v1013
        %v1039 = vmul.f32 %v783, %v1023
        %v1041 = vperm.slane %v711, 0
        %v1043 = vmul.f32 %v1024, %v1041
        %v1044 = vmul.f32 %v1025, %v1041
        %v1045 = vmul.f32 %v1026, %v1041
        %v1046 = vmul.f32 %v1027, %v1041
        %v1047 = vmul.f32 %v1028, %v1041
        %v1048 = vmul.f32 %v1029, %v1041
        %v1049 = vmul.f32 %v1030, %v1041
        %v1050 = vmul.f32 %v1031, %v1041
        %v1051 = vmul.f32 %v1032, %v1041
        %v1052 = vmul.f32 %v1033, %v1041
        %v1053 = vmul.f32 %v1034, %v1041
        %v1054 = vmul.f32 %v1035, %v1041
        %v1055 = vmul.f32 %v1036, %v1041
        %v1056 = vmul.f32 %v1037, %v1041
        %v1057 = vmul.f32 %v1038, %v1041
        %v1058 = vmul.f32 %v1039, %v1041
        %v1060 = vperm.slane %v712, 0
        %v1062 = vadd.f32 %v1043, %v1060
        %v1063 = vadd.f32 %v1044, %v1060
        %v1064 = vadd.f32 %v1045, %v1060
        %v1065 = vadd.f32 %v1046, %v1060
        %v1066 = vadd.f32 %v1047, %v1060
        %v1067 = vadd.f32 %v1048, %v1060
        %v1068 = vadd.f32 %v1049, %v1060
        %v1069 = vadd.f32 %v1050, %v1060
        %v1070 = vadd.f32 %v1051, %v1060
        %v1071 = vadd.f32 %v1052, %v1060
        %v1072 = vadd.f32 %v1053, %v1060
        %v1073 = vadd.f32 %v1054, %v1060
        %v1074 = vadd.f32 %v1055, %v1060
        %v1075 = vadd.f32 %v1056, %v1060
        %v1076 = vadd.f32 %v1057, %v1060
        %v1077 = vadd.f32 %v1058, %v1060
        %v1078 = vld [vmem:[%s623] sm:$0xff]
        %v1079 = vld [vmem:[%s623 + $0x8] sm:$0xff]
        %v1080 = vld [vmem:[%s623 + $0x10] sm:$0xff]
        %v1081 = vld [vmem:[%s623 + $0x18] sm:$0xff]
        %v1082 = vld [vmem:[%s623 + $0x20] sm:$0xff]
        %v1083 = vld [vmem:[%s623 + $0x28] sm:$0xff]
        %v1084 = vld [vmem:[%s623 + $0x30] sm:$0xff]
        %v1085 = vld [vmem:[%s623 + $0x38] sm:$0xff]
        %v1086 = vld [vmem:[%s623 + $0x40] sm:$0xff]
        %v1087 = vld [vmem:[%s623 + $0x48] sm:$0xff]
        %v1088 = vld [vmem:[%s623 + $0x50] sm:$0xff]
        %v1089 = vld [vmem:[%s623 + $0x58] sm:$0xff]
        %v1090 = vld [vmem:[%s623 + $0x60] sm:$0xff]
        %v1091 = vld [vmem:[%s623 + $0x68] sm:$0xff]
        %v1092 = vld [vmem:[%s623 + $0x70] sm:$0xff]
        %v1093 = vld [vmem:[%s623 + $0x78] sm:$0xff]
        %v1094 = vld [vmem:[%s623 + $0x80] sm:$0xff]
        %v1095 = vld [vmem:[%s623 + $0x88] sm:$0xff]
        %v1096 = vld [vmem:[%s623 + $0x90] sm:$0xff]
        %v1097 = vld [vmem:[%s623 + $0x98] sm:$0xff]
        %v1098 = vld [vmem:[%s623 + $0xa0] sm:$0xff]
        %v1099 = vld [vmem:[%s623 + $0xa8] sm:$0xff]
        %v1100 = vld [vmem:[%s623 + $0xb0] sm:$0xff]
        %v1101 = vld [vmem:[%s623 + $0xb8] sm:$0xff]
        %v1102 = vld [vmem:[%s623 + $0xc0] sm:$0xff]
        %v1103 = vld [vmem:[%s623 + $0xc8] sm:$0xff]
        %v1104 = vld [vmem:[%s623 + $0xd0] sm:$0xff]
        %v1105 = vld [vmem:[%s623 + $0xd8] sm:$0xff]
        %v1106 = vld [vmem:[%s623 + $0xe0] sm:$0xff]
        %v1107 = vld [vmem:[%s623 + $0xe8] sm:$0xff]
        %v1108 = vld [vmem:[%s623 + $0xf0] sm:$0xff]
        %v1109 = vld [vmem:[%s623 + $0xf8] sm:$0xff]
        %v1110 = vld [vmem:[%s623 + $0x100] sm:$0xff]
        %v1111 = vld [vmem:[%s623 + $0x108] sm:$0xff]
        %v1112 = vld [vmem:[%s623 + $0x110] sm:$0xff]
        %v1113 = vld [vmem:[%s623 + $0x118] sm:$0xff]
        %v1114 = vld [vmem:[%s623 + $0x120] sm:$0xff]
        %v1115 = vld [vmem:[%s623 + $0x128] sm:$0xff]
        %v1116 = vld [vmem:[%s623 + $0x130] sm:$0xff]
        %v1117 = vld [vmem:[%s623 + $0x138] sm:$0xff]
        %v1118 = vld [vmem:[%s623 + $0x140] sm:$0xff]
        %v1119 = vld [vmem:[%s623 + $0x148] sm:$0xff]
        %v1120 = vld [vmem:[%s623 + $0x150] sm:$0xff]
        %v1121 = vld [vmem:[%s623 + $0x158] sm:$0xff]
        %v1122 = vld [vmem:[%s623 + $0x160] sm:$0xff]
        %v1123 = vld [vmem:[%s623 + $0x168] sm:$0xff]
        %v1124 = vld [vmem:[%s623 + $0x170] sm:$0xff]
        %v1125 = vld [vmem:[%s623 + $0x178] sm:$0xff]
        %v1126 = vld [vmem:[%s627] sm:$0x7]
        %v1128 = vperm.slane %v1126, 0
        %v1129 = vperm.slane %v1126, 1
        %v1130 = vperm.slane %v1126, 2
        %1134 = vmatpush.msra.mxu0 %v1123
        %1135 = vmatpush.msra.mxu0 %v1120
        %1136 = vmatpush.msra.mxu0 %v1117
        %1137 = vmatpush.msra.mxu0 %v1114
        %1138 = vmatpush.msra.mxu0 %v1111
        %1139 = vmatpush.msra.mxu0 %v1108
        %1140 = vmatpush.msra.mxu0 %v1105
        %1141 = vmatpush.msra.mxu0 %v1102
        %1142 = vmatpush.msra.mxu0 %v1099
        %1143 = vmatpush.msra.mxu0 %v1096
        %1144 = vmatpush.msra.mxu0 %v1093
        %1145 = vmatpush.msra.mxu0 %v1090
        %1146 = vmatpush.msra.mxu0 %v1087
        %1147 = vmatpush.msra.mxu0 %v1084
        %1148 = vmatpush.msra.mxu0 %v1081
        %1149 = vmatpush.msra.mxu0 %v1078
        %1150 = vmatmul.f32.gmra.mxu0 %v1062
        %v1151 = vpop.f32.mrf.mxu0
        %v1152 = vadd.f32 %v1128, %v1151
        %1153 = vmatmul.f32.gmra.mxu0 %v1063
        %v1154 = vpop.f32.mrf.mxu0
        %v1155 = vadd.f32 %v1128, %v1154
        %1156 = vmatmul.f32.gmra.mxu0 %v1064
        %v1157 = vpop.f32.mrf.mxu0
        %v1158 = vadd.f32 %v1128, %v1157
        %1159 = vmatmul.f32.gmra.mxu0 %v1065
        %v1160 = vpop.f32.mrf.mxu0
        %v1161 = vadd.f32 %v1128, %v1160
        %1162 = vmatmul.f32.gmra.mxu0 %v1066
        %v1163 = vpop.f32.mrf.mxu0
        %v1164 = vadd.f32 %v1128, %v1163
        %1165 = vmatmul.f32.gmra.mxu0 %v1067
        %v1166 = vpop.f32.mrf.mxu0
        %v1167 = vadd.f32 %v1128, %v1166
        %1168 = vmatmul.f32.gmra.mxu0 %v1068
        %v1169 = vpop.f32.mrf.mxu0
        %v1170 = vadd.f32 %v1128, %v1169
        %1171 = vmatmul.f32.gmra.mxu0 %v1069
        %v1172 = vpop.f32.mrf.mxu0
        %v1173 = vadd.f32 %v1128, %v1172
        %1174 = vmatmul.f32.gmra.mxu0 %v1070
        %v1175 = vpop.f32.mrf.mxu0
        %v1176 = vadd.f32 %v1128, %v1175
        %1177 = vmatmul.f32.gmra.mxu0 %v1071
        %v1178 = vpop.f32.mrf.mxu0
        %v1179 = vadd.f32 %v1128, %v1178
        %1180 = vmatmul.f32.gmra.mxu0 %v1072
        %v1181 = vpop.f32.mrf.mxu0
        %v1182 = vadd.f32 %v1128, %v1181
        %1183 = vmatmul.f32.gmra.mxu0 %v1073
        %v1184 = vpop.f32.mrf.mxu0
        %v1185 = vadd.f32 %v1128, %v1184
        %1186 = vmatmul.f32.gmra.mxu0 %v1074
        %v1187 = vpop.f32.mrf.mxu0
        %v1188 = vadd.f32 %v1128, %v1187
        %1189 = vmatmul.f32.gmra.mxu0 %v1075
        %v1190 = vpop.f32.mrf.mxu0
        %v1191 = vadd.f32 %v1128, %v1190
        %1192 = vmatmul.f32.gmra.mxu0 %v1076
        %v1193 = vpop.f32.mrf.mxu0
        %v1194 = vadd.f32 %v1128, %v1193
        %1195 = vmatmul.f32.gmra.mxu0 %v1077
        %v1196 = vpop.f32.mrf.mxu0
        %v1197 = vadd.f32 %v1128, %v1196
        %1198 = vdwg.mxu0
        %1199 = vmatpush.msra.mxu0 %v1124
        %1200 = vmatpush.msra.mxu0 %v1121
        %1201 = vmatpush.msra.mxu0 %v1118
        %1202 = vmatpush.msra.mxu0 %v1115
        %1203 = vmatpush.msra.mxu0 %v1112
        %1204 = vmatpush.msra.mxu0 %v1109
        %1205 = vmatpush.msra.mxu0 %v1106
        %1206 = vmatpush.msra.mxu0 %v1103
        %1207 = vmatpush.msra.mxu0 %v1100
        %1208 = vmatpush.msra.mxu0 %v1097
        %1209 = vmatpush.msra.mxu0 %v1094
        %1210 = vmatpush.msra.mxu0 %v1091
        %1211 = vmatpush.msra.mxu0 %v1088
        %1212 = vmatpush.msra.mxu0 %v1085
        %1213 = vmatpush.msra.mxu0 %v1082
        %1214 = vmatpush.msra.mxu0 %v1079
        %1215 = vmatmul.f32.gmra.mxu0 %v1062
        %v1216 = vpop.f32.mrf.mxu0
        %v1217 = vadd.f32 %v1129, %v1216
        %1218 = vmatmul.f32.gmra.mxu0 %v1063
        %v1219 = vpop.f32.mrf.mxu0
        %v1220 = vadd.f32 %v1129, %v1219
        %1221 = vmatmul.f32.gmra.mxu0 %v1064
        %v1222 = vpop.f32.mrf.mxu0
        %v1223 = vadd.f32 %v1129, %v1222
        %1224 = vmatmul.f32.gmra.mxu0 %v1065
        %v1225 = vpop.f32.mrf.mxu0
        %v1226 = vadd.f32 %v1129, %v1225
        %1227 = vmatmul.f32.gmra.mxu0 %v1066
        %v1228 = vpop.f32.mrf.mxu0
        %v1229 = vadd.f32 %v1129, %v1228
        %1230 = vmatmul.f32.gmra.mxu0 %v1067
        %v1231 = vpop.f32.mrf.mxu0
        %v1232 = vadd.f32 %v1129, %v1231
        %1233 = vmatmul.f32.gmra.mxu0 %v1068
        %v1234 = vpop.f32.mrf.mxu0
        %v1235 = vadd.f32 %v1129, %v1234
        %1236 = vmatmul.f32.gmra.mxu0 %v1069
        %v1237 = vpop.f32.mrf.mxu0
        %v1238 = vadd.f32 %v1129, %v1237
        %1239 = vmatmul.f32.gmra.mxu0 %v1070
        %v1240 = vpop.f32.mrf.mxu0
        %v1241 = vadd.f32 %v1129, %v1240
        %1242 = vmatmul.f32.gmra.mxu0 %v1071
        %v1243 = vpop.f32.mrf.mxu0
        %v1244 = vadd.f32 %v1129, %v1243
        %1245 = vmatmul.f32.gmra.mxu0 %v1072
        %v1246 = vpop.f32.mrf.mxu0
        %v1247 = vadd.f32 %v1129, %v1246
        %1248 = vmatmul.f32.gmra.mxu0 %v1073
        %v1249 = vpop.f32.mrf.mxu0
        %v1250 = vadd.f32 %v1129, %v1249
        %1251 = vmatmul.f32.gmra.mxu0 %v1074
        %v1252 = vpop.f32.mrf.mxu0
        %v1253 = vadd.f32 %v1129, %v1252
        %1254 = vmatmul.f32.gmra.mxu0 %v1075
        %v1255 = vpop.f32.mrf.mxu0
        %v1256 = vadd.f32 %v1129, %v1255
        %1257 = vmatmul.f32.gmra.mxu0 %v1076
        %v1258 = vpop.f32.mrf.mxu0
        %v1259 = vadd.f32 %v1129, %v1258
        %1260 = vmatmul.f32.gmra.mxu0 %v1077
        %v1261 = vpop.f32.mrf.mxu0
        %v1262 = vadd.f32 %v1129, %v1261
        %1263 = vdwg.mxu0
        %1264 = vmatpush.msra.mxu0 %v1125
        %1265 = vmatpush.msra.mxu0 %v1122
        %1266 = vmatpush.msra.mxu0 %v1119
        %1267 = vmatpush.msra.mxu0 %v1116
        %1268 = vmatpush.msra.mxu0 %v1113
        %1269 = vmatpush.msra.mxu0 %v1110
        %1270 = vmatpush.msra.mxu0 %v1107
        %1271 = vmatpush.msra.mxu0 %v1104
        %1272 = vmatpush.msra.mxu0 %v1101
        %1273 = vmatpush.msra.mxu0 %v1098
        %1274 = vmatpush.msra.mxu0 %v1095
        %1275 = vmatpush.msra.mxu0 %v1092
        %1276 = vmatpush.msra.mxu0 %v1089
        %1277 = vmatpush.msra.mxu0 %v1086
        %1278 = vmatpush.msra.mxu0 %v1083
        %1279 = vmatpush.msra.mxu0 %v1080
        %1280 = vmatmul.f32.gmra.mxu0 %v1062
        %v1281 = vpop.f32.mrf.mxu0
        %v1282 = vadd.f32 %v1130, %v1281
        %1283 = vmatmul.f32.gmra.mxu0 %v1063
        %v1284 = vpop.f32.mrf.mxu0
        %v1285 = vadd.f32 %v1130, %v1284
        %1286 = vmatmul.f32.gmra.mxu0 %v1064
        %v1287 = vpop.f32.mrf.mxu0
        %v1288 = vadd.f32 %v1130, %v1287
        %1289 = vmatmul.f32.gmra.mxu0 %v1065
        %v1290 = vpop.f32.mrf.mxu0
        %v1291 = vadd.f32 %v1130, %v1290
        %1292 = vmatmul.f32.gmra.mxu0 %v1066
        %v1293 = vpop.f32.mrf.mxu0
        %v1294 = vadd.f32 %v1130, %v1293
        %1295 = vmatmul.f32.gmra.mxu0 %v1067
        %v1296 = vpop.f32.mrf.mxu0
        %v1297 = vadd.f32 %v1130, %v1296
        %1298 = vmatmul.f32.gmra.mxu0 %v1068
        %v1299 = vpop.f32.mrf.mxu0
        %v1300 = vadd.f32 %v1130, %v1299
        %1301 = vmatmul.f32.gmra.mxu0 %v1069
        %v1302 = vpop.f32.mrf.mxu0
        %v1303 = vadd.f32 %v1130, %v1302
        %1304 = vmatmul.f32.gmra.mxu0 %v1070
        %v1305 = vpop.f32.mrf.mxu0
        %v1306 = vadd.f32 %v1130, %v1305
        %1307 = vmatmul.f32.gmra.mxu0 %v1071
        %v1308 = vpop.f32.mrf.mxu0
        %v1309 = vadd.f32 %v1130, %v1308
        %1310 = vmatmul.f32.gmra.mxu0 %v1072
        %v1311 = vpop.f32.mrf.mxu0
        %v1312 = vadd.f32 %v1130, %v1311
        %1313 = vmatmul.f32.gmra.mxu0 %v1073
        %v1314 = vpop.f32.mrf.mxu0
        %v1315 = vadd.f32 %v1130, %v1314
        %1316 = vmatmul.f32.gmra.mxu0 %v1074
        %v1317 = vpop.f32.mrf.mxu0
        %v1318 = vadd.f32 %v1130, %v1317
        %1319 = vmatmul.f32.gmra.mxu0 %v1075
        %v1320 = vpop.f32.mrf.mxu0
        %v1321 = vadd.f32 %v1130, %v1320
        %1322 = vmatmul.f32.gmra.mxu0 %v1076
        %v1323 = vpop.f32.mrf.mxu0
        %v1324 = vadd.f32 %v1130, %v1323
        %1325 = vmatmul.f32.gmra.mxu0 %v1077
        %v1326 = vpop.f32.mrf.mxu0
        %v1327 = vadd.f32 %v1130, %v1326
        %1328 = vdwg.mxu0
        %vm1329 = vcmask 261120
        %v1331 = vsel %vm1329, %v1152, 0
        %v1334 = vsel %vm1329, %v1155, 0
        %v1337 = vsel %vm1329, %v1158, 0
        %v1340 = vsel %vm1329, %v1161, 0
        %v1343 = vsel %vm1329, %v1164, 0
        %v1346 = vsel %vm1329, %v1167, 0
        %v1349 = vsel %vm1329, %v1170, 0
        %v1352 = vsel %vm1329, %v1173, 0
        %v1355 = vsel %vm1329, %v1217, 0
        %v1358 = vsel %vm1329, %v1220, 0
        %v1361 = vsel %vm1329, %v1223, 0
        %v1364 = vsel %vm1329, %v1226, 0
        %v1367 = vsel %vm1329, %v1229, 0
        %v1370 = vsel %vm1329, %v1232, 0
        %v1373 = vsel %vm1329, %v1235, 0
        %v1376 = vsel %vm1329, %v1238, 0
        %1378 = vmatpush.xpose.msra.mxu0 0.0
        %1379 = vmatpush.xpose.msra.mxu0 0.0
        %1380 = vmatpush.xpose.msra.mxu0 0.0
        %1381 = vmatpush.xpose.msra.mxu0 0.0
        %1382 = vmatpush.xpose.msra.mxu0 0.0
        %1383 = vmatpush.xpose.msra.mxu0 0.0
        %1384 = vmatpush.xpose.msra.mxu0 0.0
        %1385 = vmatpush.xpose.msra.mxu0 0.0
        %1386 = vmatpush.xpose.msra.mxu0 %v1376
        %1387 = vmatpush.xpose.msra.mxu0 %v1373
        %1388 = vmatpush.xpose.msra.mxu0 %v1370
        %1389 = vmatpush.xpose.msra.mxu0 %v1367
        %1390 = vmatpush.xpose.msra.mxu0 %v1364
        %1391 = vmatpush.xpose.msra.mxu0 %v1361
        %1392 = vmatpush.xpose.msra.mxu0 %v1358
        %1393 = vmatpush.xpose.msra.mxu0 %v1355
        %1394 = vmatmul.f32.gmra.mxu0 %v1331
        %v1395 = vpop.f32.mrf.mxu0
        %v1396 = vadd.f32 0.0, %v1395
        %1397 = vmatmul.f32.gmra.mxu0 %v1334
        %v1398 = vpop.f32.mrf.mxu0
        %v1399 = vadd.f32 0.0, %v1398
        %1400 = vmatmul.f32.gmra.mxu0 %v1337
        %v1401 = vpop.f32.mrf.mxu0
        %v1402 = vadd.f32 0.0, %v1401
        %1403 = vmatmul.f32.gmra.mxu0 %v1340
        %v1404 = vpop.f32.mrf.mxu0
        %v1405 = vadd.f32 0.0, %v1404
        %1406 = vmatmul.f32.gmra.mxu0 %v1343
        %v1407 = vpop.f32.mrf.mxu0
        %v1408 = vadd.f32 0.0, %v1407
        %1409 = vmatmul.f32.gmra.mxu0 %v1346
        %v1410 = vpop.f32.mrf.mxu0
        %v1411 = vadd.f32 0.0, %v1410
        %1412 = vmatmul.f32.gmra.mxu0 %v1349
        %v1413 = vpop.f32.mrf.mxu0
        %v1414 = vadd.f32 0.0, %v1413
        %1415 = vmatmul.f32.gmra.mxu0 %v1352
        %v1416 = vpop.f32.mrf.mxu0
        %v1417 = vadd.f32 0.0, %v1416
        %1418 = vdwg.mxu0
        %v1419 = vmul.f32 %v1396, 0.17677669
        %v1420 = vmul.f32 %v1399, 0.17677669
        %v1421 = vmul.f32 %v1402, 0.17677669
        %v1422 = vmul.f32 %v1405, 0.17677669
        %v1423 = vmul.f32 %v1408, 0.17677669
        %v1424 = vmul.f32 %v1411, 0.17677669
        %v1425 = vmul.f32 %v1414, 0.17677669
        %v1426 = vmul.f32 %v1417, 0.17677669
        %vm1427 = vcmask 523264
        %v1428 = vsel %vm1427, %v1419, -inf
        %1429 = vmax.xlane.f32.xlu0 %v1428
        %v1430 = vpop.xlane.xlu0 %1429
        %v1431 = vsel %vm1427, %v1420, -inf
        %1432 = vmax.xlane.f32.xlu0 %v1431
        %v1433 = vpop.xlane.xlu0 %1432
        %v1434 = vsel %vm1427, %v1421, -inf
        %1435 = vmax.xlane.f32.xlu0 %v1434
        %v1436 = vpop.xlane.xlu0 %1435
        %v1437 = vsel %vm1427, %v1422, -inf
        %1438 = vmax.xlane.f32.xlu0 %v1437
        %v1439 = vpop.xlane.xlu0 %1438
        %v1440 = vsel %vm1427, %v1423, -inf
        %1441 = vmax.xlane.f32.xlu0 %v1440
        %v1442 = vpop.xlane.xlu0 %1441
        %v1443 = vsel %vm1427, %v1424, -inf
        %1444 = vmax.xlane.f32.xlu0 %v1443
        %v1445 = vpop.xlane.xlu0 %1444
        %v1446 = vsel %vm1427, %v1425, -inf
        %1447 = vmax.xlane.f32.xlu0 %v1446
        %v1448 = vpop.xlane.xlu0 %1447
        %v1449 = vsel %vm1427, %v1426, -inf
        %1450 = vmax.xlane.f32.xlu0 %v1449
        %v1451 = vpop.xlane.xlu0 %1450
        %v1452 = vsub.f32 %v1419, %v1430
        %v1453 = vsub.f32 %v1420, %v1433
        %v1454 = vsub.f32 %v1421, %v1436
        %v1455 = vsub.f32 %v1422, %v1439
        %v1456 = vsub.f32 %v1423, %v1442
        %v1457 = vsub.f32 %v1424, %v1445
        %v1458 = vsub.f32 %v1425, %v1448
        %v1459 = vsub.f32 %v1426, %v1451
        %v1460 = vmul.f32 %v1452, 1.442695
        %v1461 = vpow.pop %v1460
        %v1462 = vmul.f32 %v1453, 1.442695
        %v1463 = vpow.pop %v1462
        %v1464 = vmul.f32 %v1454, 1.442695
        %v1465 = vpow.pop %v1464
        %v1466 = vmul.f32 %v1455, 1.442695
        %v1467 = vpow.pop %v1466
        %v1468 = vmul.f32 %v1456, 1.442695
        %v1469 = vpow.pop %v1468
        %v1470 = vmul.f32 %v1457, 1.442695
        %v1471 = vpow.pop %v1470
        %v1472 = vmul.f32 %v1458, 1.442695
        %v1473 = vpow.pop %v1472
        %v1474 = vmul.f32 %v1459, 1.442695
        %v1475 = vpow.pop %v1474
        %v1476 = vsel %vm1427, %v1461, 0.0
        %1477 = vadd.xlane.f32.xlu0 %v1476
        %v1478 = vpop.xlane.xlu0 %1477
        %v1479 = vsel %vm1427, %v1463, 0.0
        %1480 = vadd.xlane.f32.xlu0 %v1479
        %v1481 = vpop.xlane.xlu0 %1480
        %v1482 = vsel %vm1427, %v1465, 0.0
        %1483 = vadd.xlane.f32.xlu0 %v1482
        %v1484 = vpop.xlane.xlu0 %1483
        %v1485 = vsel %vm1427, %v1467, 0.0
        %1486 = vadd.xlane.f32.xlu0 %v1485
        %v1487 = vpop.xlane.xlu0 %1486
        %v1488 = vsel %vm1427, %v1469, 0.0
        %1489 = vadd.xlane.f32.xlu0 %v1488
        %v1490 = vpop.xlane.xlu0 %1489
        %v1491 = vsel %vm1427, %v1471, 0.0
        %1492 = vadd.xlane.f32.xlu0 %v1491
        %v1493 = vpop.xlane.xlu0 %1492
        %v1494 = vsel %vm1427, %v1473, 0.0
        %1495 = vadd.xlane.f32.xlu0 %v1494
        %v1496 = vpop.xlane.xlu0 %1495
        %v1497 = vsel %vm1427, %v1475, 0.0
        %1498 = vadd.xlane.f32.xlu0 %v1497
        %v1499 = vpop.xlane.xlu0 %1498
        %v1500 = vrcp.pop %v1478
        %v1501 = vrcp.pop %v1481
        %v1502 = vrcp.pop %v1484
        %v1503 = vrcp.pop %v1487
        %v1504 = vrcp.pop %v1490
        %v1505 = vrcp.pop %v1493
        %v1506 = vrcp.pop %v1496
        %v1507 = vrcp.pop %v1499
        %v1508 = vmul.f32 %v1461, %v1500
        %v1509 = vmul.f32 %v1463, %v1501
        %v1510 = vmul.f32 %v1465, %v1502
        %v1511 = vmul.f32 %v1467, %v1503
        %v1512 = vmul.f32 %v1469, %v1504
        %v1513 = vmul.f32 %v1471, %v1505
        %v1514 = vmul.f32 %v1473, %v1506
        %v1515 = vmul.f32 %v1475, %v1507
        %v1517 = vsel %vm1427, %v1508, 0
        %v1520 = vsel %vm1427, %v1509, 0
        %v1523 = vsel %vm1427, %v1510, 0
        %v1526 = vsel %vm1427, %v1511, 0
        %v1529 = vsel %vm1427, %v1512, 0
        %v1532 = vsel %vm1427, %v1513, 0
        %v1535 = vsel %vm1427, %v1514, 0
        %v1538 = vsel %vm1427, %v1515, 0
        %1540 = vmatpush.msra.mxu0 0.0
        %1541 = vmatpush.msra.mxu0 0.0
        %1542 = vmatpush.msra.mxu0 0.0
        %1543 = vmatpush.msra.mxu0 0.0
        %1544 = vmatpush.msra.mxu0 0.0
        %1545 = vmatpush.msra.mxu0 0.0
        %1546 = vmatpush.msra.mxu0 0.0
        %1547 = vmatpush.msra.mxu0 0.0
        %1548 = vmatpush.msra.mxu0 %v1303
        %1549 = vmatpush.msra.mxu0 %v1300
        %1550 = vmatpush.msra.mxu0 %v1297
        %1551 = vmatpush.msra.mxu0 %v1294
        %1552 = vmatpush.msra.mxu0 %v1291
        %1553 = vmatpush.msra.mxu0 %v1288
        %1554 = vmatpush.msra.mxu0 %v1285
        %1555 = vmatpush.msra.mxu0 %v1282
        %1556 = vmatmul.f32.gmra.mxu0 %v1517
        %v1557 = vpop.f32.mrf.mxu0
        %v1558 = vadd.f32 0.0, %v1557
        %1559 = vmatmul.f32.gmra.mxu0 %v1520
        %v1560 = vpop.f32.mrf.mxu0
        %v1561 = vadd.f32 0.0, %v1560
        %1562 = vmatmul.f32.gmra.mxu0 %v1523
        %v1563 = vpop.f32.mrf.mxu0
        %v1564 = vadd.f32 0.0, %v1563
        %1565 = vmatmul.f32.gmra.mxu0 %v1526
        %v1566 = vpop.f32.mrf.mxu0
        %v1567 = vadd.f32 0.0, %v1566
        %1568 = vmatmul.f32.gmra.mxu0 %v1529
        %v1569 = vpop.f32.mrf.mxu0
        %v1570 = vadd.f32 0.0, %v1569
        %1571 = vmatmul.f32.gmra.mxu0 %v1532
        %v1572 = vpop.f32.mrf.mxu0
        %v1573 = vadd.f32 0.0, %v1572
        %1574 = vmatmul.f32.gmra.mxu0 %v1535
        %v1575 = vpop.f32.mrf.mxu0
        %v1576 = vadd.f32 0.0, %v1575
        %1577 = vmatmul.f32.gmra.mxu0 %v1538
        %v1578 = vpop.f32.mrf.mxu0
        %v1579 = vadd.f32 0.0, %v1578
        %1580 = vdwg.mxu0
        %1581 = vrot.lane.b32.xlu0 %v1152, 96
        %v1582 = vpop.permute.xlu0 %1581
        %1583 = vrot.lane.b32.xlu0 %v1155, 96
        %v1584 = vpop.permute.xlu0 %1583
        %1585 = vrot.lane.b32.xlu0 %v1158, 96
        %v1586 = vpop.permute.xlu0 %1585
        %1587 = vrot.lane.b32.xlu0 %v1161, 96
        %v1588 = vpop.permute.xlu0 %1587
        %1589 = vrot.lane.b32.xlu0 %v1164, 96
        %v1590 = vpop.permute.xlu0 %1589
        %1591 = vrot.lane.b32.xlu0 %v1167, 96
        %v1592 = vpop.permute.xlu0 %1591
        %1593 = vrot.lane.b32.xlu0 %v1170, 96
        %v1594 = vpop.permute.xlu0 %1593
        %1595 = vrot.lane.b32.xlu0 %v1173, 96
        %v1596 = vpop.permute.xlu0 %1595
        %1597 = vrot.lane.b32.xlu0 %v1217, 96
        %v1598 = vpop.permute.xlu0 %1597
        %1599 = vrot.lane.b32.xlu0 %v1220, 96
        %v1600 = vpop.permute.xlu0 %1599
        %1601 = vrot.lane.b32.xlu0 %v1223, 96
        %v1602 = vpop.permute.xlu0 %1601
        %1603 = vrot.lane.b32.xlu0 %v1226, 96
        %v1604 = vpop.permute.xlu0 %1603
        %1605 = vrot.lane.b32.xlu0 %v1229, 96
        %v1606 = vpop.permute.xlu0 %1605
        %1607 = vrot.lane.b32.xlu0 %v1232, 96
        %v1608 = vpop.permute.xlu0 %1607
        %1609 = vrot.lane.b32.xlu0 %v1235, 96
        %v1610 = vpop.permute.xlu0 %1609
        %1611 = vrot.lane.b32.xlu0 %v1238, 96
        %v1612 = vpop.permute.xlu0 %1611
        %v1613 = vsel %vm1329, %v1582, 0
        %v1615 = vsel %vm1329, %v1584, 0
        %v1617 = vsel %vm1329, %v1586, 0
        %v1619 = vsel %vm1329, %v1588, 0
        %v1621 = vsel %vm1329, %v1590, 0
        %v1623 = vsel %vm1329, %v1592, 0
        %v1625 = vsel %vm1329, %v1594, 0
        %v1627 = vsel %vm1329, %v1596, 0
        %v1629 = vsel %vm1329, %v1598, 0
        %v1631 = vsel %vm1329, %v1600, 0
        %v1633 = vsel %vm1329, %v1602, 0
        %v1635 = vsel %vm1329, %v1604, 0
        %v1637 = vsel %vm1329, %v1606, 0
        %v1639 = vsel %vm1329, %v1608, 0
        %v1641 = vsel %vm1329, %v1610, 0
        %v1643 = vsel %vm1329, %v1612, 0
        %1645 = vmatpush.xpose.msra.mxu0 0.0
        %1646 = vmatpush.xpose.msra.mxu0 0.0
        %1647 = vmatpush.xpose.msra.mxu0 0.0
        %1648 = vmatpush.xpose.msra.mxu0 0.0
        %1649 = vmatpush.xpose.msra.mxu0 0.0
        %1650 = vmatpush.xpose.msra.mxu0 0.0
        %1651 = vmatpush.xpose.msra.mxu0 0.0
        %1652 = vmatpush.xpose.msra.mxu0 0.0
        %1653 = vmatpush.xpose.msra.mxu0 %v1643
        %1654 = vmatpush.xpose.msra.mxu0 %v1641
        %1655 = vmatpush.xpose.msra.mxu0 %v1639
        %1656 = vmatpush.xpose.msra.mxu0 %v1637
        %1657 = vmatpush.xpose.msra.mxu0 %v1635
        %1658 = vmatpush.xpose.msra.mxu0 %v1633
        %1659 = vmatpush.xpose.msra.mxu0 %v1631
        %1660 = vmatpush.xpose.msra.mxu0 %v1629
        %1661 = vmatmul.f32.gmra.mxu0 %v1613
        %v1662 = vpop.f32.mrf.mxu0
        %v1663 = vadd.f32 0.0, %v1662
        %1664 = vmatmul.f32.gmra.mxu0 %v1615
        %v1665 = vpop.f32.mrf.mxu0
        %v1666 = vadd.f32 0.0, %v1665
        %1667 = vmatmul.f32.gmra.mxu0 %v1617
        %v1668 = vpop.f32.mrf.mxu0
        %v1669 = vadd.f32 0.0, %v1668
        %1670 = vmatmul.f32.gmra.mxu0 %v1619
        %v1671 = vpop.f32.mrf.mxu0
        %v1672 = vadd.f32 0.0, %v1671
        %1673 = vmatmul.f32.gmra.mxu0 %v1621
        %v1674 = vpop.f32.mrf.mxu0
        %v1675 = vadd.f32 0.0, %v1674
        %1676 = vmatmul.f32.gmra.mxu0 %v1623
        %v1677 = vpop.f32.mrf.mxu0
        %v1678 = vadd.f32 0.0, %v1677
        %1679 = vmatmul.f32.gmra.mxu0 %v1625
        %v1680 = vpop.f32.mrf.mxu0
        %v1681 = vadd.f32 0.0, %v1680
        %1682 = vmatmul.f32.gmra.mxu0 %v1627
        %v1683 = vpop.f32.mrf.mxu0
        %v1684 = vadd.f32 0.0, %v1683
        %1685 = vdwg.mxu0
        %v1686 = vmul.f32 %v1663, 0.17677669
        %v1687 = vmul.f32 %v1666, 0.17677669
        %v1688 = vmul.f32 %v1669, 0.17677669
        %v1689 = vmul.f32 %v1672, 0.17677669
        %v1690 = vmul.f32 %v1675, 0.17677669
        %v1691 = vmul.f32 %v1678, 0.17677669
        %v1692 = vmul.f32 %v1681, 0.17677669
        %v1693 = vmul.f32 %v1684, 0.17677669
        %v1694 = vsel %vm1427, %v1686, -inf
        %1695 = vmax.xlane.f32.xlu0 %v1694
        %v1696 = vpop.xlane.xlu0 %1695
        %v1697 = vsel %vm1427, %v1687, -inf
        %1698 = vmax.xlane.f32.xlu0 %v1697
        %v1699 = vpop.xlane.xlu0 %1698
        %v1700 = vsel %vm1427, %v1688, -inf
        %1701 = vmax.xlane.f32.xlu0 %v1700
        %v1702 = vpop.xlane.xlu0 %1701
        %v1703 = vsel %vm1427, %v1689, -inf
        %1704 = vmax.xlane.f32.xlu0 %v1703
        %v1705 = vpop.xlane.xlu0 %1704
        %v1706 = vsel %vm1427, %v1690, -inf
        %1707 = vmax.xlane.f32.xlu0 %v1706
        %v1708 = vpop.xlane.xlu0 %1707
        %v1709 = vsel %vm1427, %v1691, -inf
        %1710 = vmax.xlane.f32.xlu0 %v1709
        %v1711 = vpop.xlane.xlu0 %1710
        %v1712 = vsel %vm1427, %v1692, -inf
        %1713 = vmax.xlane.f32.xlu0 %v1712
        %v1714 = vpop.xlane.xlu0 %1713
        %v1715 = vsel %vm1427, %v1693, -inf
        %1716 = vmax.xlane.f32.xlu0 %v1715
        %v1717 = vpop.xlane.xlu0 %1716
        %v1718 = vsub.f32 %v1686, %v1696
        %v1719 = vsub.f32 %v1687, %v1699
        %v1720 = vsub.f32 %v1688, %v1702
        %v1721 = vsub.f32 %v1689, %v1705
        %v1722 = vsub.f32 %v1690, %v1708
        %v1723 = vsub.f32 %v1691, %v1711
        %v1724 = vsub.f32 %v1692, %v1714
        %v1725 = vsub.f32 %v1693, %v1717
        %v1726 = vmul.f32 %v1718, 1.442695
        %v1727 = vpow.pop %v1726
        %v1728 = vmul.f32 %v1719, 1.442695
        %v1729 = vpow.pop %v1728
        %v1730 = vmul.f32 %v1720, 1.442695
        %v1731 = vpow.pop %v1730
        %v1732 = vmul.f32 %v1721, 1.442695
        %v1733 = vpow.pop %v1732
        %v1734 = vmul.f32 %v1722, 1.442695
        %v1735 = vpow.pop %v1734
        %v1736 = vmul.f32 %v1723, 1.442695
        %v1737 = vpow.pop %v1736
        %v1738 = vmul.f32 %v1724, 1.442695
        %v1739 = vpow.pop %v1738
        %v1740 = vmul.f32 %v1725, 1.442695
        %v1741 = vpow.pop %v1740
        %v1742 = vsel %vm1427, %v1727, 0.0
        %1743 = vadd.xlane.f32.xlu0 %v1742
        %v1744 = vpop.xlane.xlu0 %1743
        %v1745 = vsel %vm1427, %v1729, 0.0
        %1746 = vadd.xlane.f32.xlu0 %v1745
        %v1747 = vpop.xlane.xlu0 %1746
        %v1748 = vsel %vm1427, %v1731, 0.0
        %1749 = vadd.xlane.f32.xlu0 %v1748
        %v1750 = vpop.xlane.xlu0 %1749
        %v1751 = vsel %vm1427, %v1733, 0.0
        %1752 = vadd.xlane.f32.xlu0 %v1751
        %v1753 = vpop.xlane.xlu0 %1752
        %v1754 = vsel %vm1427, %v1735, 0.0
        %1755 = vadd.xlane.f32.xlu0 %v1754
        %v1756 = vpop.xlane.xlu0 %1755
        %v1757 = vsel %vm1427, %v1737, 0.0
        %1758 = vadd.xlane.f32.xlu0 %v1757
        %v1759 = vpop.xlane.xlu0 %1758
        %v1760 = vsel %vm1427, %v1739, 0.0
        %1761 = vadd.xlane.f32.xlu0 %v1760
        %v1762 = vpop.xlane.xlu0 %1761
        %v1763 = vsel %vm1427, %v1741, 0.0
        %1764 = vadd.xlane.f32.xlu0 %v1763
        %v1765 = vpop.xlane.xlu0 %1764
        %v1766 = vrcp.pop %v1744
        %v1767 = vrcp.pop %v1747
        %v1768 = vrcp.pop %v1750
        %v1769 = vrcp.pop %v1753
        %v1770 = vrcp.pop %v1756
        %v1771 = vrcp.pop %v1759
        %v1772 = vrcp.pop %v1762
        %v1773 = vrcp.pop %v1765
        %v1774 = vmul.f32 %v1727, %v1766
        %v1775 = vmul.f32 %v1729, %v1767
        %v1776 = vmul.f32 %v1731, %v1768
        %v1777 = vmul.f32 %v1733, %v1769
        %v1778 = vmul.f32 %v1735, %v1770
        %v1779 = vmul.f32 %v1737, %v1771
        %v1780 = vmul.f32 %v1739, %v1772
        %v1781 = vmul.f32 %v1741, %v1773
        %1790 = vrot.lane.b32.xlu0 %v1282, 96
        %v1791 = vpop.permute.xlu0 %1790
        %1792 = vrot.lane.b32.xlu0 %v1285, 96
        %v1793 = vpop.permute.xlu0 %1792
        %1794 = vrot.lane.b32.xlu0 %v1288, 96
        %v1795 = vpop.permute.xlu0 %1794
        %1796 = vrot.lane.b32.xlu0 %v1291, 96
        %v1797 = vpop.permute.xlu0 %1796
        %1798 = vrot.lane.b32.xlu0 %v1294, 96
        %v1799 = vpop.permute.xlu0 %1798
        %1800 = vrot.lane.b32.xlu0 %v1297, 96
        %v1801 = vpop.permute.xlu0 %1800
        %1802 = vrot.lane.b32.xlu0 %v1300, 96
        %v1803 = vpop.permute.xlu0 %1802
        %1804 = vrot.lane.b32.xlu0 %v1303, 96
        %v1805 = vpop.permute.xlu0 %1804
        %v1815 = vsel %vm1427, %v1774, 0
        %v1818 = vsel %vm1427, %v1775, 0
        %v1821 = vsel %vm1427, %v1776, 0
        %v1824 = vsel %vm1427, %v1777, 0
        %v1827 = vsel %vm1427, %v1778, 0
        %v1830 = vsel %vm1427, %v1779, 0
        %v1833 = vsel %vm1427, %v1780, 0
        %v1836 = vsel %vm1427, %v1781, 0
        %1838 = vmatpush.msra.mxu0 0.0
        %1839 = vmatpush.msra.mxu0 0.0
        %1840 = vmatpush.msra.mxu0 0.0
        %1841 = vmatpush.msra.mxu0 0.0
        %1842 = vmatpush.msra.mxu0 0.0
        %1843 = vmatpush.msra.mxu0 0.0
        %1844 = vmatpush.msra.mxu0 0.0
        %1845 = vmatpush.msra.mxu0 0.0
        %1846 = vmatpush.msra.mxu0 %v1805
        %1847 = vmatpush.msra.mxu0 %v1803
        %1848 = vmatpush.msra.mxu0 %v1801
        %1849 = vmatpush.msra.mxu0 %v1799
        %1850 = vmatpush.msra.mxu0 %v1797
        %1851 = vmatpush.msra.mxu0 %v1795
        %1852 = vmatpush.msra.mxu0 %v1793
        %1853 = vmatpush.msra.mxu0 %v1791
        %1854 = vmatmul.f32.gmra.mxu0 %v1815
        %v1855 = vpop.f32.mrf.mxu0
        %v1856 = vadd.f32 0.0, %v1855
        %1857 = vmatmul.f32.gmra.mxu0 %v1818
        %v1858 = vpop.f32.mrf.mxu0
        %v1859 = vadd.f32 0.0, %v1858
        %1860 = vmatmul.f32.gmra.mxu0 %v1821
        %v1861 = vpop.f32.mrf.mxu0
        %v1862 = vadd.f32 0.0, %v1861
        %1863 = vmatmul.f32.gmra.mxu0 %v1824
        %v1864 = vpop.f32.mrf.mxu0
        %v1865 = vadd.f32 0.0, %v1864
        %1866 = vmatmul.f32.gmra.mxu0 %v1827
        %v1867 = vpop.f32.mrf.mxu0
        %v1868 = vadd.f32 0.0, %v1867
        %1869 = vmatmul.f32.gmra.mxu0 %v1830
        %v1870 = vpop.f32.mrf.mxu0
        %v1871 = vadd.f32 0.0, %v1870
        %1872 = vmatmul.f32.gmra.mxu0 %v1833
        %v1873 = vpop.f32.mrf.mxu0
        %v1874 = vadd.f32 0.0, %v1873
        %1875 = vmatmul.f32.gmra.mxu0 %v1836
        %v1876 = vpop.f32.mrf.mxu0
        %v1877 = vadd.f32 0.0, %v1876
        %1878 = vdwg.mxu0
        %1879 = vrot.lane.b32.xlu0 %v1152, 64
        %v1880 = vpop.permute.xlu0 %1879
        %1881 = vrot.lane.b32.xlu0 %v1155, 64
        %v1882 = vpop.permute.xlu0 %1881
        %1883 = vrot.lane.b32.xlu0 %v1158, 64
        %v1884 = vpop.permute.xlu0 %1883
        %1885 = vrot.lane.b32.xlu0 %v1161, 64
        %v1886 = vpop.permute.xlu0 %1885
        %1887 = vrot.lane.b32.xlu0 %v1164, 64
        %v1888 = vpop.permute.xlu0 %1887
        %1889 = vrot.lane.b32.xlu0 %v1167, 64
        %v1890 = vpop.permute.xlu0 %1889
        %1891 = vrot.lane.b32.xlu0 %v1170, 64
        %v1892 = vpop.permute.xlu0 %1891
        %1893 = vrot.lane.b32.xlu0 %v1173, 64
        %v1894 = vpop.permute.xlu0 %1893
        %1895 = vrot.lane.b32.xlu0 %v1217, 64
        %v1896 = vpop.permute.xlu0 %1895
        %1897 = vrot.lane.b32.xlu0 %v1220, 64
        %v1898 = vpop.permute.xlu0 %1897
        %1899 = vrot.lane.b32.xlu0 %v1223, 64
        %v1900 = vpop.permute.xlu0 %1899
        %1901 = vrot.lane.b32.xlu0 %v1226, 64
        %v1902 = vpop.permute.xlu0 %1901
        %1903 = vrot.lane.b32.xlu0 %v1229, 64
        %v1904 = vpop.permute.xlu0 %1903
        %1905 = vrot.lane.b32.xlu0 %v1232, 64
        %v1906 = vpop.permute.xlu0 %1905
        %1907 = vrot.lane.b32.xlu0 %v1235, 64
        %v1908 = vpop.permute.xlu0 %1907
        %1909 = vrot.lane.b32.xlu0 %v1238, 64
        %v1910 = vpop.permute.xlu0 %1909
        %v1911 = vsel %vm1329, %v1880, 0
        %v1913 = vsel %vm1329, %v1882, 0
        %v1915 = vsel %vm1329, %v1884, 0
        %v1917 = vsel %vm1329, %v1886, 0
        %v1919 = vsel %vm1329, %v1888, 0
        %v1921 = vsel %vm1329, %v1890, 0
        %v1923 = vsel %vm1329, %v1892, 0
        %v1925 = vsel %vm1329, %v1894, 0
        %v1927 = vsel %vm1329, %v1896, 0
        %v1929 = vsel %vm1329, %v1898, 0
        %v1931 = vsel %vm1329, %v1900, 0
        %v1933 = vsel %vm1329, %v1902, 0
        %v1935 = vsel %vm1329, %v1904, 0
        %v1937 = vsel %vm1329, %v1906, 0
        %v1939 = vsel %vm1329, %v1908, 0
        %v1941 = vsel %vm1329, %v1910, 0
        %1943 = vmatpush.xpose.msra.mxu0 0.0
        %1944 = vmatpush.xpose.msra.mxu0 0.0
        %1945 = vmatpush.xpose.msra.mxu0 0.0
        %1946 = vmatpush.xpose.msra.mxu0 0.0
        %1947 = vmatpush.xpose.msra.mxu0 0.0
        %1948 = vmatpush.xpose.msra.mxu0 0.0
        %1949 = vmatpush.xpose.msra.mxu0 0.0
        %1950 = vmatpush.xpose.msra.mxu0 0.0
        %1951 = vmatpush.xpose.msra.mxu0 %v1941
        %1952 = vmatpush.xpose.msra.mxu0 %v1939
        %1953 = vmatpush.xpose.msra.mxu0 %v1937
        %1954 = vmatpush.xpose.msra.mxu0 %v1935
        %1955 = vmatpush.xpose.msra.mxu0 %v1933
        %1956 = vmatpush.xpose.msra.mxu0 %v1931
        %1957 = vmatpush.xpose.msra.mxu0 %v1929
        %1958 = vmatpush.xpose.msra.mxu0 %v1927
        %1959 = vmatmul.f32.gmra.mxu0 %v1911
        %v1960 = vpop.f32.mrf.mxu0
        %v1961 = vadd.f32 0.0, %v1960
        %1962 = vmatmul.f32.gmra.mxu0 %v1913
        %v1963 = vpop.f32.mrf.mxu0
        %v1964 = vadd.f32 0.0, %v1963
        %1965 = vmatmul.f32.gmra.mxu0 %v1915
        %v1966 = vpop.f32.mrf.mxu0
        %v1967 = vadd.f32 0.0, %v1966
        %1968 = vmatmul.f32.gmra.mxu0 %v1917
        %v1969 = vpop.f32.mrf.mxu0
        %v1970 = vadd.f32 0.0, %v1969
        %1971 = vmatmul.f32.gmra.mxu0 %v1919
        %v1972 = vpop.f32.mrf.mxu0
        %v1973 = vadd.f32 0.0, %v1972
        %1974 = vmatmul.f32.gmra.mxu0 %v1921
        %v1975 = vpop.f32.mrf.mxu0
        %v1976 = vadd.f32 0.0, %v1975
        %1977 = vmatmul.f32.gmra.mxu0 %v1923
        %v1978 = vpop.f32.mrf.mxu0
        %v1979 = vadd.f32 0.0, %v1978
        %1980 = vmatmul.f32.gmra.mxu0 %v1925
        %v1981 = vpop.f32.mrf.mxu0
        %v1982 = vadd.f32 0.0, %v1981
        %1983 = vdwg.mxu0
        %v1984 = vmul.f32 %v1961, 0.17677669
        %v1985 = vmul.f32 %v1964, 0.17677669
        %v1986 = vmul.f32 %v1967, 0.17677669
        %v1987 = vmul.f32 %v1970, 0.17677669
        %v1988 = vmul.f32 %v1973, 0.17677669
        %v1989 = vmul.f32 %v1976, 0.17677669
        %v1990 = vmul.f32 %v1979, 0.17677669
        %v1991 = vmul.f32 %v1982, 0.17677669
        %v1992 = vsel %vm1427, %v1984, -inf
        %1993 = vmax.xlane.f32.xlu0 %v1992
        %v1994 = vpop.xlane.xlu0 %1993
        %v1995 = vsel %vm1427, %v1985, -inf
        %1996 = vmax.xlane.f32.xlu0 %v1995
        %v1997 = vpop.xlane.xlu0 %1996
        %v1998 = vsel %vm1427, %v1986, -inf
        %1999 = vmax.xlane.f32.xlu0 %v1998
        %v2000 = vpop.xlane.xlu0 %1999
        %v2001 = vsel %vm1427, %v1987, -inf
        %2002 = vmax.xlane.f32.xlu0 %v2001
        %v2003 = vpop.xlane.xlu0 %2002
        %v2004 = vsel %vm1427, %v1988, -inf
        %2005 = vmax.xlane.f32.xlu0 %v2004
        %v2006 = vpop.xlane.xlu0 %2005
        %v2007 = vsel %vm1427, %v1989, -inf
        %2008 = vmax.xlane.f32.xlu0 %v2007
        %v2009 = vpop.xlane.xlu0 %2008
        %v2010 = vsel %vm1427, %v1990, -inf
        %2011 = vmax.xlane.f32.xlu0 %v2010
        %v2012 = vpop.xlane.xlu0 %2011
        %v2013 = vsel %vm1427, %v1991, -inf
        %2014 = vmax.xlane.f32.xlu0 %v2013
        %v2015 = vpop.xlane.xlu0 %2014
        %v2016 = vsub.f32 %v1984, %v1994
        %v2017 = vsub.f32 %v1985, %v1997
        %v2018 = vsub.f32 %v1986, %v2000
        %v2019 = vsub.f32 %v1987, %v2003
        %v2020 = vsub.f32 %v1988, %v2006
        %v2021 = vsub.f32 %v1989, %v2009
        %v2022 = vsub.f32 %v1990, %v2012
        %v2023 = vsub.f32 %v1991, %v2015
        %v2024 = vmul.f32 %v2016, 1.442695
        %v2025 = vpow.pop %v2024
        %v2026 = vmul.f32 %v2017, 1.442695
        %v2027 = vpow.pop %v2026
        %v2028 = vmul.f32 %v2018, 1.442695
        %v2029 = vpow.pop %v2028
        %v2030 = vmul.f32 %v2019, 1.442695
        %v2031 = vpow.pop %v2030
        %v2032 = vmul.f32 %v2020, 1.442695
        %v2033 = vpow.pop %v2032
        %v2034 = vmul.f32 %v2021, 1.442695
        %v2035 = vpow.pop %v2034
        %v2036 = vmul.f32 %v2022, 1.442695
        %v2037 = vpow.pop %v2036
        %v2038 = vmul.f32 %v2023, 1.442695
        %v2039 = vpow.pop %v2038
        %v2040 = vsel %vm1427, %v2025, 0.0
        %2041 = vadd.xlane.f32.xlu0 %v2040
        %v2042 = vpop.xlane.xlu0 %2041
        %v2043 = vsel %vm1427, %v2027, 0.0
        %2044 = vadd.xlane.f32.xlu0 %v2043
        %v2045 = vpop.xlane.xlu0 %2044
        %v2046 = vsel %vm1427, %v2029, 0.0
        %2047 = vadd.xlane.f32.xlu0 %v2046
        %v2048 = vpop.xlane.xlu0 %2047
        %v2049 = vsel %vm1427, %v2031, 0.0
        %2050 = vadd.xlane.f32.xlu0 %v2049
        %v2051 = vpop.xlane.xlu0 %2050
        %v2052 = vsel %vm1427, %v2033, 0.0
        %2053 = vadd.xlane.f32.xlu0 %v2052
        %v2054 = vpop.xlane.xlu0 %2053
        %v2055 = vsel %vm1427, %v2035, 0.0
        %2056 = vadd.xlane.f32.xlu0 %v2055
        %v2057 = vpop.xlane.xlu0 %2056
        %v2058 = vsel %vm1427, %v2037, 0.0
        %2059 = vadd.xlane.f32.xlu0 %v2058
        %v2060 = vpop.xlane.xlu0 %2059
        %v2061 = vsel %vm1427, %v2039, 0.0
        %2062 = vadd.xlane.f32.xlu0 %v2061
        %v2063 = vpop.xlane.xlu0 %2062
        %v2064 = vrcp.pop %v2042
        %v2065 = vrcp.pop %v2045
        %v2066 = vrcp.pop %v2048
        %v2067 = vrcp.pop %v2051
        %v2068 = vrcp.pop %v2054
        %v2069 = vrcp.pop %v2057
        %v2070 = vrcp.pop %v2060
        %v2071 = vrcp.pop %v2063
        %v2072 = vmul.f32 %v2025, %v2064
        %v2073 = vmul.f32 %v2027, %v2065
        %v2074 = vmul.f32 %v2029, %v2066
        %v2075 = vmul.f32 %v2031, %v2067
        %v2076 = vmul.f32 %v2033, %v2068
        %v2077 = vmul.f32 %v2035, %v2069
        %v2078 = vmul.f32 %v2037, %v2070
        %v2079 = vmul.f32 %v2039, %v2071
        %2080 = vrot.lane.b32.xlu0 %v1282, 64
        %v2081 = vpop.permute.xlu0 %2080
        %2082 = vrot.lane.b32.xlu0 %v1285, 64
        %v2083 = vpop.permute.xlu0 %2082
        %2084 = vrot.lane.b32.xlu0 %v1288, 64
        %v2085 = vpop.permute.xlu0 %2084
        %2086 = vrot.lane.b32.xlu0 %v1291, 64
        %v2087 = vpop.permute.xlu0 %2086
        %2088 = vrot.lane.b32.xlu0 %v1294, 64
        %v2089 = vpop.permute.xlu0 %2088
        %2090 = vrot.lane.b32.xlu0 %v1297, 64
        %v2091 = vpop.permute.xlu0 %2090
        %2092 = vrot.lane.b32.xlu0 %v1300, 64
        %v2093 = vpop.permute.xlu0 %2092
        %2094 = vrot.lane.b32.xlu0 %v1303, 64
        %v2095 = vpop.permute.xlu0 %2094
        %v2105 = vsel %vm1427, %v2072, 0
        %v2108 = vsel %vm1427, %v2073, 0
        %v2111 = vsel %vm1427, %v2074, 0
        %v2114 = vsel %vm1427, %v2075, 0
        %v2117 = vsel %vm1427, %v2076, 0
        %v2120 = vsel %vm1427, %v2077, 0
        %v2123 = vsel %vm1427, %v2078, 0
        %v2126 = vsel %vm1427, %v2079, 0
        %2128 = vmatpush.msra.mxu0 0.0
        %2129 = vmatpush.msra.mxu0 0.0
        %2130 = vmatpush.msra.mxu0 0.0
        %2131 = vmatpush.msra.mxu0 0.0
        %2132 = vmatpush.msra.mxu0 0.0
        %2133 = vmatpush.msra.mxu0 0.0
        %2134 = vmatpush.msra.mxu0 0.0
        %2135 = vmatpush.msra.mxu0 0.0
        %2136 = vmatpush.msra.mxu0 %v2095
        %2137 = vmatpush.msra.mxu0 %v2093
        %2138 = vmatpush.msra.mxu0 %v2091
        %2139 = vmatpush.msra.mxu0 %v2089
        %2140 = vmatpush.msra.mxu0 %v2087
        %2141 = vmatpush.msra.mxu0 %v2085
        %2142 = vmatpush.msra.mxu0 %v2083
        %2143 = vmatpush.msra.mxu0 %v2081
        %2144 = vmatmul.f32.gmra.mxu0 %v2105
        %v2145 = vpop.f32.mrf.mxu0
        %v2146 = vadd.f32 0.0, %v2145
        %2147 = vmatmul.f32.gmra.mxu0 %v2108
        %v2148 = vpop.f32.mrf.mxu0
        %v2149 = vadd.f32 0.0, %v2148
        %2150 = vmatmul.f32.gmra.mxu0 %v2111
        %v2151 = vpop.f32.mrf.mxu0
        %v2152 = vadd.f32 0.0, %v2151
        %2153 = vmatmul.f32.gmra.mxu0 %v2114
        %v2154 = vpop.f32.mrf.mxu0
        %v2155 = vadd.f32 0.0, %v2154
        %2156 = vmatmul.f32.gmra.mxu0 %v2117
        %v2157 = vpop.f32.mrf.mxu0
        %v2158 = vadd.f32 0.0, %v2157
        %2159 = vmatmul.f32.gmra.mxu0 %v2120
        %v2160 = vpop.f32.mrf.mxu0
        %v2161 = vadd.f32 0.0, %v2160
        %2162 = vmatmul.f32.gmra.mxu0 %v2123
        %v2163 = vpop.f32.mrf.mxu0
        %v2164 = vadd.f32 0.0, %v2163
        %2165 = vmatmul.f32.gmra.mxu0 %v2126
        %v2166 = vpop.f32.mrf.mxu0
        %v2167 = vadd.f32 0.0, %v2166
        %2168 = vdwg.mxu0
        %2169 = vrot.lane.b32.xlu0 %v1152, 32
        %v2170 = vpop.permute.xlu0 %2169
        %2171 = vrot.lane.b32.xlu0 %v1155, 32
        %v2172 = vpop.permute.xlu0 %2171
        %2173 = vrot.lane.b32.xlu0 %v1158, 32
        %v2174 = vpop.permute.xlu0 %2173
        %2175 = vrot.lane.b32.xlu0 %v1161, 32
        %v2176 = vpop.permute.xlu0 %2175
        %2177 = vrot.lane.b32.xlu0 %v1164, 32
        %v2178 = vpop.permute.xlu0 %2177
        %2179 = vrot.lane.b32.xlu0 %v1167, 32
        %v2180 = vpop.permute.xlu0 %2179
        %2181 = vrot.lane.b32.xlu0 %v1170, 32
        %v2182 = vpop.permute.xlu0 %2181
        %2183 = vrot.lane.b32.xlu0 %v1173, 32
        %v2184 = vpop.permute.xlu0 %2183
        %2185 = vrot.lane.b32.xlu0 %v1217, 32
        %v2186 = vpop.permute.xlu0 %2185
        %2187 = vrot.lane.b32.xlu0 %v1220, 32
        %v2188 = vpop.permute.xlu0 %2187
        %2189 = vrot.lane.b32.xlu0 %v1223, 32
        %v2190 = vpop.permute.xlu0 %2189
        %2191 = vrot.lane.b32.xlu0 %v1226, 32
        %v2192 = vpop.permute.xlu0 %2191
        %2193 = vrot.lane.b32.xlu0 %v1229, 32
        %v2194 = vpop.permute.xlu0 %2193
        %2195 = vrot.lane.b32.xlu0 %v1232, 32
        %v2196 = vpop.permute.xlu0 %2195
        %2197 = vrot.lane.b32.xlu0 %v1235, 32
        %v2198 = vpop.permute.xlu0 %2197
        %2199 = vrot.lane.b32.xlu0 %v1238, 32
        %v2200 = vpop.permute.xlu0 %2199
        %v2201 = vsel %vm1329, %v2170, 0
        %v2203 = vsel %vm1329, %v2172, 0
        %v2205 = vsel %vm1329, %v2174, 0
        %v2207 = vsel %vm1329, %v2176, 0
        %v2209 = vsel %vm1329, %v2178, 0
        %v2211 = vsel %vm1329, %v2180, 0
        %v2213 = vsel %vm1329, %v2182, 0
        %v2215 = vsel %vm1329, %v2184, 0
        %v2217 = vsel %vm1329, %v2186, 0
        %v2219 = vsel %vm1329, %v2188, 0
        %v2221 = vsel %vm1329, %v2190, 0
        %v2223 = vsel %vm1329, %v2192, 0
        %v2225 = vsel %vm1329, %v2194, 0
        %v2227 = vsel %vm1329, %v2196, 0
        %v2229 = vsel %vm1329, %v2198, 0
        %v2231 = vsel %vm1329, %v2200, 0
        %2233 = vmatpush.xpose.msra.mxu0 0.0
        %2234 = vmatpush.xpose.msra.mxu0 0.0
        %2235 = vmatpush.xpose.msra.mxu0 0.0
        %2236 = vmatpush.xpose.msra.mxu0 0.0
        %2237 = vmatpush.xpose.msra.mxu0 0.0
        %2238 = vmatpush.xpose.msra.mxu0 0.0
        %2239 = vmatpush.xpose.msra.mxu0 0.0
        %2240 = vmatpush.xpose.msra.mxu0 0.0
        %2241 = vmatpush.xpose.msra.mxu0 %v2231
        %2242 = vmatpush.xpose.msra.mxu0 %v2229
        %2243 = vmatpush.xpose.msra.mxu0 %v2227
        %2244 = vmatpush.xpose.msra.mxu0 %v2225
        %2245 = vmatpush.xpose.msra.mxu0 %v2223
        %2246 = vmatpush.xpose.msra.mxu0 %v2221
        %2247 = vmatpush.xpose.msra.mxu0 %v2219
        %2248 = vmatpush.xpose.msra.mxu0 %v2217
        %2249 = vmatmul.f32.gmra.mxu0 %v2201
        %v2250 = vpop.f32.mrf.mxu0
        %v2251 = vadd.f32 0.0, %v2250
        %2252 = vmatmul.f32.gmra.mxu0 %v2203
        %v2253 = vpop.f32.mrf.mxu0
        %v2254 = vadd.f32 0.0, %v2253
        %2255 = vmatmul.f32.gmra.mxu0 %v2205
        %v2256 = vpop.f32.mrf.mxu0
        %v2257 = vadd.f32 0.0, %v2256
        %2258 = vmatmul.f32.gmra.mxu0 %v2207
        %v2259 = vpop.f32.mrf.mxu0
        %v2260 = vadd.f32 0.0, %v2259
        %2261 = vmatmul.f32.gmra.mxu0 %v2209
        %v2262 = vpop.f32.mrf.mxu0
        %v2263 = vadd.f32 0.0, %v2262
        %2264 = vmatmul.f32.gmra.mxu0 %v2211
        %v2265 = vpop.f32.mrf.mxu0
        %v2266 = vadd.f32 0.0, %v2265
        %2267 = vmatmul.f32.gmra.mxu0 %v2213
        %v2268 = vpop.f32.mrf.mxu0
        %v2269 = vadd.f32 0.0, %v2268
        %2270 = vmatmul.f32.gmra.mxu0 %v2215
        %v2271 = vpop.f32.mrf.mxu0
        %v2272 = vadd.f32 0.0, %v2271
        %2273 = vdwg.mxu0
        %v2274 = vmul.f32 %v2251, 0.17677669
        %v2275 = vmul.f32 %v2254, 0.17677669
        %v2276 = vmul.f32 %v2257, 0.17677669
        %v2277 = vmul.f32 %v2260, 0.17677669
        %v2278 = vmul.f32 %v2263, 0.17677669
        %v2279 = vmul.f32 %v2266, 0.17677669
        %v2280 = vmul.f32 %v2269, 0.17677669
        %v2281 = vmul.f32 %v2272, 0.17677669
        %v2282 = vsel %vm1427, %v2274, -inf
        %2283 = vmax.xlane.f32.xlu0 %v2282
        %v2284 = vpop.xlane.xlu0 %2283
        %v2285 = vsel %vm1427, %v2275, -inf
        %2286 = vmax.xlane.f32.xlu0 %v2285
        %v2287 = vpop.xlane.xlu0 %2286
        %v2288 = vsel %vm1427, %v2276, -inf
        %2289 = vmax.xlane.f32.xlu0 %v2288
        %v2290 = vpop.xlane.xlu0 %2289
        %v2291 = vsel %vm1427, %v2277, -inf
        %2292 = vmax.xlane.f32.xlu0 %v2291
        %v2293 = vpop.xlane.xlu0 %2292
        %v2294 = vsel %vm1427, %v2278, -inf
        %2295 = vmax.xlane.f32.xlu0 %v2294
        %v2296 = vpop.xlane.xlu0 %2295
        %v2297 = vsel %vm1427, %v2279, -inf
        %2298 = vmax.xlane.f32.xlu0 %v2297
        %v2299 = vpop.xlane.xlu0 %2298
        %v2300 = vsel %vm1427, %v2280, -inf
        %2301 = vmax.xlane.f32.xlu0 %v2300
        %v2302 = vpop.xlane.xlu0 %2301
        %v2303 = vsel %vm1427, %v2281, -inf
        %2304 = vmax.xlane.f32.xlu0 %v2303
        %v2305 = vpop.xlane.xlu0 %2304
        %v2306 = vsub.f32 %v2274, %v2284
        %v2307 = vsub.f32 %v2275, %v2287
        %v2308 = vsub.f32 %v2276, %v2290
        %v2309 = vsub.f32 %v2277, %v2293
        %v2310 = vsub.f32 %v2278, %v2296
        %v2311 = vsub.f32 %v2279, %v2299
        %v2312 = vsub.f32 %v2280, %v2302
        %v2313 = vsub.f32 %v2281, %v2305
        %v2314 = vmul.f32 %v2306, 1.442695
        %v2315 = vpow.pop %v2314
        %v2316 = vmul.f32 %v2307, 1.442695
        %v2317 = vpow.pop %v2316
        %v2318 = vmul.f32 %v2308, 1.442695
        %v2319 = vpow.pop %v2318
        %v2320 = vmul.f32 %v2309, 1.442695
        %v2321 = vpow.pop %v2320
        %v2322 = vmul.f32 %v2310, 1.442695
        %v2323 = vpow.pop %v2322
        %v2324 = vmul.f32 %v2311, 1.442695
        %v2325 = vpow.pop %v2324
        %v2326 = vmul.f32 %v2312, 1.442695
        %v2327 = vpow.pop %v2326
        %v2328 = vmul.f32 %v2313, 1.442695
        %v2329 = vpow.pop %v2328
        %v2330 = vsel %vm1427, %v2315, 0.0
        %2331 = vadd.xlane.f32.xlu0 %v2330
        %v2332 = vpop.xlane.xlu0 %2331
        %v2333 = vsel %vm1427, %v2317, 0.0
        %2334 = vadd.xlane.f32.xlu0 %v2333
        %v2335 = vpop.xlane.xlu0 %2334
        %v2336 = vsel %vm1427, %v2319, 0.0
        %2337 = vadd.xlane.f32.xlu0 %v2336
        %v2338 = vpop.xlane.xlu0 %2337
        %v2339 = vsel %vm1427, %v2321, 0.0
        %2340 = vadd.xlane.f32.xlu0 %v2339
        %v2341 = vpop.xlane.xlu0 %2340
        %v2342 = vsel %vm1427, %v2323, 0.0
        %2343 = vadd.xlane.f32.xlu0 %v2342
        %v2344 = vpop.xlane.xlu0 %2343
        %v2345 = vsel %vm1427, %v2325, 0.0
        %2346 = vadd.xlane.f32.xlu0 %v2345
        %v2347 = vpop.xlane.xlu0 %2346
        %v2348 = vsel %vm1427, %v2327, 0.0
        %2349 = vadd.xlane.f32.xlu0 %v2348
        %v2350 = vpop.xlane.xlu0 %2349
        %v2351 = vsel %vm1427, %v2329, 0.0
        %2352 = vadd.xlane.f32.xlu0 %v2351
        %v2353 = vpop.xlane.xlu0 %2352
        %v2354 = vrcp.pop %v2332
        %v2355 = vrcp.pop %v2335
        %v2356 = vrcp.pop %v2338
        %v2357 = vrcp.pop %v2341
        %v2358 = vrcp.pop %v2344
        %v2359 = vrcp.pop %v2347
        %v2360 = vrcp.pop %v2350
        %v2361 = vrcp.pop %v2353
        %v2362 = vmul.f32 %v2315, %v2354
        %v2363 = vmul.f32 %v2317, %v2355
        %v2364 = vmul.f32 %v2319, %v2356
        %v2365 = vmul.f32 %v2321, %v2357
        %v2366 = vmul.f32 %v2323, %v2358
        %v2367 = vmul.f32 %v2325, %v2359
        %v2368 = vmul.f32 %v2327, %v2360
        %v2369 = vmul.f32 %v2329, %v2361
        %2370 = vrot.lane.b32.xlu0 %v1282, 32
        %v2371 = vpop.permute.xlu0 %2370
        %2372 = vrot.lane.b32.xlu0 %v1285, 32
        %v2373 = vpop.permute.xlu0 %2372
        %2374 = vrot.lane.b32.xlu0 %v1288, 32
        %v2375 = vpop.permute.xlu0 %2374
        %2376 = vrot.lane.b32.xlu0 %v1291, 32
        %v2377 = vpop.permute.xlu0 %2376
        %2378 = vrot.lane.b32.xlu0 %v1294, 32
        %v2379 = vpop.permute.xlu0 %2378
        %2380 = vrot.lane.b32.xlu0 %v1297, 32
        %v2381 = vpop.permute.xlu0 %2380
        %2382 = vrot.lane.b32.xlu0 %v1300, 32
        %v2383 = vpop.permute.xlu0 %2382
        %2384 = vrot.lane.b32.xlu0 %v1303, 32
        %v2385 = vpop.permute.xlu0 %2384
        %v2395 = vsel %vm1427, %v2362, 0
        %v2398 = vsel %vm1427, %v2363, 0
        %v2401 = vsel %vm1427, %v2364, 0
        %v2404 = vsel %vm1427, %v2365, 0
        %v2407 = vsel %vm1427, %v2366, 0
        %v2410 = vsel %vm1427, %v2367, 0
        %v2413 = vsel %vm1427, %v2368, 0
        %v2416 = vsel %vm1427, %v2369, 0
        %2418 = vmatpush.msra.mxu0 0.0
        %2419 = vmatpush.msra.mxu0 0.0
        %2420 = vmatpush.msra.mxu0 0.0
        %2421 = vmatpush.msra.mxu0 0.0
        %2422 = vmatpush.msra.mxu0 0.0
        %2423 = vmatpush.msra.mxu0 0.0
        %2424 = vmatpush.msra.mxu0 0.0
        %2425 = vmatpush.msra.mxu0 0.0
        %2426 = vmatpush.msra.mxu0 %v2385
        %2427 = vmatpush.msra.mxu0 %v2383
        %2428 = vmatpush.msra.mxu0 %v2381
        %2429 = vmatpush.msra.mxu0 %v2379
        %2430 = vmatpush.msra.mxu0 %v2377
        %2431 = vmatpush.msra.mxu0 %v2375
        %2432 = vmatpush.msra.mxu0 %v2373
        %2433 = vmatpush.msra.mxu0 %v2371
        %2434 = vmatmul.f32.gmra.mxu0 %v2395
        %v2435 = vpop.f32.mrf.mxu0
        %v2436 = vadd.f32 0.0, %v2435
        %2437 = vmatmul.f32.gmra.mxu0 %v2398
        %v2438 = vpop.f32.mrf.mxu0
        %v2439 = vadd.f32 0.0, %v2438
        %2440 = vmatmul.f32.gmra.mxu0 %v2401
        %v2441 = vpop.f32.mrf.mxu0
        %v2442 = vadd.f32 0.0, %v2441
        %2443 = vmatmul.f32.gmra.mxu0 %v2404
        %v2444 = vpop.f32.mrf.mxu0
        %v2445 = vadd.f32 0.0, %v2444
        %2446 = vmatmul.f32.gmra.mxu0 %v2407
        %v2447 = vpop.f32.mrf.mxu0
        %v2448 = vadd.f32 0.0, %v2447
        %2449 = vmatmul.f32.gmra.mxu0 %v2410
        %v2450 = vpop.f32.mrf.mxu0
        %v2451 = vadd.f32 0.0, %v2450
        %2452 = vmatmul.f32.gmra.mxu0 %v2413
        %v2453 = vpop.f32.mrf.mxu0
        %v2454 = vadd.f32 0.0, %v2453
        %2455 = vmatmul.f32.gmra.mxu0 %v2416
        %v2456 = vpop.f32.mrf.mxu0
        %v2457 = vadd.f32 0.0, %v2456
        %2458 = vdwg.mxu0
        %2467 = vrot.lane.b32.xlu0 %v1856, 32
        %v2468 = vpop.permute.xlu0 %2467
        %2469 = vrot.lane.b32.xlu0 %v1859, 32
        %v2470 = vpop.permute.xlu0 %2469
        %2471 = vrot.lane.b32.xlu0 %v1862, 32
        %v2472 = vpop.permute.xlu0 %2471
        %2473 = vrot.lane.b32.xlu0 %v1865, 32
        %v2474 = vpop.permute.xlu0 %2473
        %2475 = vrot.lane.b32.xlu0 %v1868, 32
        %v2476 = vpop.permute.xlu0 %2475
        %2477 = vrot.lane.b32.xlu0 %v1871, 32
        %v2478 = vpop.permute.xlu0 %2477
        %2479 = vrot.lane.b32.xlu0 %v1874, 32
        %v2480 = vpop.permute.xlu0 %2479
        %2481 = vrot.lane.b32.xlu0 %v1877, 32
        %v2482 = vpop.permute.xlu0 %2481
        %2499 = vrot.lane.b32.xlu0 %v2146, 64
        %v2500 = vpop.permute.xlu0 %2499
        %2501 = vrot.lane.b32.xlu0 %v2149, 64
        %v2502 = vpop.permute.xlu0 %2501
        %2503 = vrot.lane.b32.xlu0 %v2152, 64
        %v2504 = vpop.permute.xlu0 %2503
        %2505 = vrot.lane.b32.xlu0 %v2155, 64
        %v2506 = vpop.permute.xlu0 %2505
        %2507 = vrot.lane.b32.xlu0 %v2158, 64
        %v2508 = vpop.permute.xlu0 %2507
        %2509 = vrot.lane.b32.xlu0 %v2161, 64
        %v2510 = vpop.permute.xlu0 %2509
        %2511 = vrot.lane.b32.xlu0 %v2164, 64
        %v2512 = vpop.permute.xlu0 %2511
        %2513 = vrot.lane.b32.xlu0 %v2167, 64
        %v2514 = vpop.permute.xlu0 %2513
        %2531 = vrot.lane.b32.xlu0 %v2436, 96
        %v2532 = vpop.permute.xlu0 %2531
        %2533 = vrot.lane.b32.xlu0 %v2439, 96
        %v2534 = vpop.permute.xlu0 %2533
        %2535 = vrot.lane.b32.xlu0 %v2442, 96
        %v2536 = vpop.permute.xlu0 %2535
        %2537 = vrot.lane.b32.xlu0 %v2445, 96
        %v2538 = vpop.permute.xlu0 %2537
        %2539 = vrot.lane.b32.xlu0 %v2448, 96
        %v2540 = vpop.permute.xlu0 %2539
        %2541 = vrot.lane.b32.xlu0 %v2451, 96
        %v2542 = vpop.permute.xlu0 %2541
        %2543 = vrot.lane.b32.xlu0 %v2454, 96
        %v2544 = vpop.permute.xlu0 %2543
        %2545 = vrot.lane.b32.xlu0 %v2457, 96
        %v2546 = vpop.permute.xlu0 %2545
        %v2555 = vsel %vm1329, %v1558, %v2468
        %v2556 = vsel %vm1329, %v1561, %v2470
        %v2557 = vsel %vm1329, %v1564, %v2472
        %v2558 = vsel %vm1329, %v1567, %v2474
        %v2559 = vsel %vm1329, %v1570, %v2476
        %v2560 = vsel %vm1329, %v1573, %v2478
        %v2561 = vsel %vm1329, %v1576, %v2480
        %v2562 = vsel %vm1329, %v1579, %v2482
        %v2563 = vsel %vm1427, %v2555, %v2500
        %v2564 = vsel %vm1427, %v2556, %v2502
        %v2565 = vsel %vm1427, %v2557, %v2504
        %v2566 = vsel %vm1427, %v2558, %v2506
        %v2567 = vsel %vm1427, %v2559, %v2508
        %v2568 = vsel %vm1427, %v2560, %v2510
        %v2569 = vsel %vm1427, %v2561, %v2512
        %v2570 = vsel %vm1427, %v2562, %v2514
        %vm2571 = vcmask 785408
        %v2572 = vsel %vm2571, %v2563, %v2532
        %v2573 = vsel %vm2571, %v2564, %v2534
        %v2574 = vsel %vm2571, %v2565, %v2536
        %v2575 = vsel %vm2571, %v2566, %v2538
        %v2576 = vsel %vm2571, %v2567, %v2540
        %v2577 = vsel %vm2571, %v2568, %v2542
        %v2578 = vsel %vm2571, %v2569, %v2544
        %v2579 = vsel %vm2571, %v2570, %v2546
        %v2581 = vsel %vm1329, %v1176, 0
        %v2584 = vsel %vm1329, %v1179, 0
        %v2587 = vsel %vm1329, %v1182, 0
        %v2590 = vsel %vm1329, %v1185, 0
        %v2593 = vsel %vm1329, %v1188, 0
        %v2596 = vsel %vm1329, %v1191, 0
        %v2599 = vsel %vm1329, %v1194, 0
        %v2602 = vsel %vm1329, %v1197, 0
        %v2605 = vsel %vm1329, %v1241, 0
        %v2608 = vsel %vm1329, %v1244, 0
        %v2611 = vsel %vm1329, %v1247, 0
        %v2614 = vsel %vm1329, %v1250, 0
        %v2617 = vsel %vm1329, %v1253, 0
        %v2620 = vsel %vm1329, %v1256, 0
        %v2623 = vsel %vm1329, %v1259, 0
        %v2626 = vsel %vm1329, %v1262, 0
        %2628 = vmatpush.xpose.msra.mxu0 0.0
        %2629 = vmatpush.xpose.msra.mxu0 0.0
        %2630 = vmatpush.xpose.msra.mxu0 0.0
        %2631 = vmatpush.xpose.msra.mxu0 0.0
        %2632 = vmatpush.xpose.msra.mxu0 0.0
        %2633 = vmatpush.xpose.msra.mxu0 0.0
        %2634 = vmatpush.xpose.msra.mxu0 0.0
        %2635 = vmatpush.xpose.msra.mxu0 0.0
        %2636 = vmatpush.xpose.msra.mxu0 %v2626
        %2637 = vmatpush.xpose.msra.mxu0 %v2623
        %2638 = vmatpush.xpose.msra.mxu0 %v2620
        %2639 = vmatpush.xpose.msra.mxu0 %v2617
        %2640 = vmatpush.xpose.msra.mxu0 %v2614
        %2641 = vmatpush.xpose.msra.mxu0 %v2611
        %2642 = vmatpush.xpose.msra.mxu0 %v2608
        %2643 = vmatpush.xpose.msra.mxu0 %v2605
        %2644 = vmatmul.f32.gmra.mxu0 %v2581
        %v2645 = vpop.f32.mrf.mxu0
        %v2646 = vadd.f32 0.0, %v2645
        %2647 = vmatmul.f32.gmra.mxu0 %v2584
        %v2648 = vpop.f32.mrf.mxu0
        %v2649 = vadd.f32 0.0, %v2648
        %2650 = vmatmul.f32.gmra.mxu0 %v2587
        %v2651 = vpop.f32.mrf.mxu0
        %v2652 = vadd.f32 0.0, %v2651
        %2653 = vmatmul.f32.gmra.mxu0 %v2590
        %v2654 = vpop.f32.mrf.mxu0
        %v2655 = vadd.f32 0.0, %v2654
        %2656 = vmatmul.f32.gmra.mxu0 %v2593
        %v2657 = vpop.f32.mrf.mxu0
        %v2658 = vadd.f32 0.0, %v2657
        %2659 = vmatmul.f32.gmra.mxu0 %v2596
        %v2660 = vpop.f32.mrf.mxu0
        %v2661 = vadd.f32 0.0, %v2660
        %2662 = vmatmul.f32.gmra.mxu0 %v2599
        %v2663 = vpop.f32.mrf.mxu0
        %v2664 = vadd.f32 0.0, %v2663
        %2665 = vmatmul.f32.gmra.mxu0 %v2602
        %v2666 = vpop.f32.mrf.mxu0
        %v2667 = vadd.f32 0.0, %v2666
        %2668 = vdwg.mxu0
        %v2669 = vmul.f32 %v2646, 0.17677669
        %v2670 = vmul.f32 %v2649, 0.17677669
        %v2671 = vmul.f32 %v2652, 0.17677669
        %v2672 = vmul.f32 %v2655, 0.17677669
        %v2673 = vmul.f32 %v2658, 0.17677669
        %v2674 = vmul.f32 %v2661, 0.17677669
        %v2675 = vmul.f32 %v2664, 0.17677669
        %v2676 = vmul.f32 %v2667, 0.17677669
        %v2677 = vsel %vm1427, %v2669, -inf
        %2678 = vmax.xlane.f32.xlu0 %v2677
        %v2679 = vpop.xlane.xlu0 %2678
        %v2680 = vsel %vm1427, %v2670, -inf
        %2681 = vmax.xlane.f32.xlu0 %v2680
        %v2682 = vpop.xlane.xlu0 %2681
        %v2683 = vsel %vm1427, %v2671, -inf
        %2684 = vmax.xlane.f32.xlu0 %v2683
        %v2685 = vpop.xlane.xlu0 %2684
        %v2686 = vsel %vm1427, %v2672, -inf
        %2687 = vmax.xlane.f32.xlu0 %v2686
        %v2688 = vpop.xlane.xlu0 %2687
        %v2689 = vsel %vm1427, %v2673, -inf
        %2690 = vmax.xlane.f32.xlu0 %v2689
        %v2691 = vpop.xlane.xlu0 %2690
        %v2692 = vsel %vm1427, %v2674, -inf
        %2693 = vmax.xlane.f32.xlu0 %v2692
        %v2694 = vpop.xlane.xlu0 %2693
        %v2695 = vsel %vm1427, %v2675, -inf
        %2696 = vmax.xlane.f32.xlu0 %v2695
        %v2697 = vpop.xlane.xlu0 %2696
        %v2698 = vsel %vm1427, %v2676, -inf
        %2699 = vmax.xlane.f32.xlu0 %v2698
        %v2700 = vpop.xlane.xlu0 %2699
        %v2701 = vsub.f32 %v2669, %v2679
        %v2702 = vsub.f32 %v2670, %v2682
        %v2703 = vsub.f32 %v2671, %v2685
        %v2704 = vsub.f32 %v2672, %v2688
        %v2705 = vsub.f32 %v2673, %v2691
        %v2706 = vsub.f32 %v2674, %v2694
        %v2707 = vsub.f32 %v2675, %v2697
        %v2708 = vsub.f32 %v2676, %v2700
        %v2709 = vmul.f32 %v2701, 1.442695
        %v2710 = vpow.pop %v2709
        %v2711 = vmul.f32 %v2702, 1.442695
        %v2712 = vpow.pop %v2711
        %v2713 = vmul.f32 %v2703, 1.442695
        %v2714 = vpow.pop %v2713
        %v2715 = vmul.f32 %v2704, 1.442695
        %v2716 = vpow.pop %v2715
        %v2717 = vmul.f32 %v2705, 1.442695
        %v2718 = vpow.pop %v2717
        %v2719 = vmul.f32 %v2706, 1.442695
        %v2720 = vpow.pop %v2719
        %v2721 = vmul.f32 %v2707, 1.442695
        %v2722 = vpow.pop %v2721
        %v2723 = vmul.f32 %v2708, 1.442695
        %v2724 = vpow.pop %v2723
        %v2725 = vsel %vm1427, %v2710, 0.0
        %2726 = vadd.xlane.f32.xlu0 %v2725
        %v2727 = vpop.xlane.xlu0 %2726
        %v2728 = vsel %vm1427, %v2712, 0.0
        %2729 = vadd.xlane.f32.xlu0 %v2728
        %v2730 = vpop.xlane.xlu0 %2729
        %v2731 = vsel %vm1427, %v2714, 0.0
        %2732 = vadd.xlane.f32.xlu0 %v2731
        %v2733 = vpop.xlane.xlu0 %2732
        %v2734 = vsel %vm1427, %v2716, 0.0
        %2735 = vadd.xlane.f32.xlu0 %v2734
        %v2736 = vpop.xlane.xlu0 %2735
        %v2737 = vsel %vm1427, %v2718, 0.0
        %2738 = vadd.xlane.f32.xlu0 %v2737
        %v2739 = vpop.xlane.xlu0 %2738
        %v2740 = vsel %vm1427, %v2720, 0.0
        %2741 = vadd.xlane.f32.xlu0 %v2740
        %v2742 = vpop.xlane.xlu0 %2741
        %v2743 = vsel %vm1427, %v2722, 0.0
        %2744 = vadd.xlane.f32.xlu0 %v2743
        %v2745 = vpop.xlane.xlu0 %2744
        %v2746 = vsel %vm1427, %v2724, 0.0
        %2747 = vadd.xlane.f32.xlu0 %v2746
        %v2748 = vpop.xlane.xlu0 %2747
        %v2749 = vrcp.pop %v2727
        %v2750 = vrcp.pop %v2730
        %v2751 = vrcp.pop %v2733
        %v2752 = vrcp.pop %v2736
        %v2753 = vrcp.pop %v2739
        %v2754 = vrcp.pop %v2742
        %v2755 = vrcp.pop %v2745
        %v2756 = vrcp.pop %v2748
        %v2757 = vmul.f32 %v2710, %v2749
        %v2758 = vmul.f32 %v2712, %v2750
        %v2759 = vmul.f32 %v2714, %v2751
        %v2760 = vmul.f32 %v2716, %v2752
        %v2761 = vmul.f32 %v2718, %v2753
        %v2762 = vmul.f32 %v2720, %v2754
        %v2763 = vmul.f32 %v2722, %v2755
        %v2764 = vmul.f32 %v2724, %v2756
        %v2766 = vsel %vm1427, %v2757, 0
        %v2769 = vsel %vm1427, %v2758, 0
        %v2772 = vsel %vm1427, %v2759, 0
        %v2775 = vsel %vm1427, %v2760, 0
        %v2778 = vsel %vm1427, %v2761, 0
        %v2781 = vsel %vm1427, %v2762, 0
        %v2784 = vsel %vm1427, %v2763, 0
        %v2787 = vsel %vm1427, %v2764, 0
        %2789 = vmatpush.msra.mxu0 0.0
        %2790 = vmatpush.msra.mxu0 0.0
        %2791 = vmatpush.msra.mxu0 0.0
        %2792 = vmatpush.msra.mxu0 0.0
        %2793 = vmatpush.msra.mxu0 0.0
        %2794 = vmatpush.msra.mxu0 0.0
        %2795 = vmatpush.msra.mxu0 0.0
        %2796 = vmatpush.msra.mxu0 0.0
        %2797 = vmatpush.msra.mxu0 %v1327
        %2798 = vmatpush.msra.mxu0 %v1324
        %2799 = vmatpush.msra.mxu0 %v1321
        %2800 = vmatpush.msra.mxu0 %v1318
        %2801 = vmatpush.msra.mxu0 %v1315
        %2802 = vmatpush.msra.mxu0 %v1312
        %2803 = vmatpush.msra.mxu0 %v1309
        %2804 = vmatpush.msra.mxu0 %v1306
        %2805 = vmatmul.f32.gmra.mxu0 %v2766
        %v2806 = vpop.f32.mrf.mxu0
        %v2807 = vadd.f32 0.0, %v2806
        %2808 = vmatmul.f32.gmra.mxu0 %v2769
        %v2809 = vpop.f32.mrf.mxu0
        %v2810 = vadd.f32 0.0, %v2809
        %2811 = vmatmul.f32.gmra.mxu0 %v2772
        %v2812 = vpop.f32.mrf.mxu0
        %v2813 = vadd.f32 0.0, %v2812
        %2814 = vmatmul.f32.gmra.mxu0 %v2775
        %v2815 = vpop.f32.mrf.mxu0
        %v2816 = vadd.f32 0.0, %v2815
        %2817 = vmatmul.f32.gmra.mxu0 %v2778
        %v2818 = vpop.f32.mrf.mxu0
        %v2819 = vadd.f32 0.0, %v2818
        %2820 = vmatmul.f32.gmra.mxu0 %v2781
        %v2821 = vpop.f32.mrf.mxu0
        %v2822 = vadd.f32 0.0, %v2821
        %2823 = vmatmul.f32.gmra.mxu0 %v2784
        %v2824 = vpop.f32.mrf.mxu0
        %v2825 = vadd.f32 0.0, %v2824
        %2826 = vmatmul.f32.gmra.mxu0 %v2787
        %v2827 = vpop.f32.mrf.mxu0
        %v2828 = vadd.f32 0.0, %v2827
        %2829 = vdwg.mxu0
        %2830 = vrot.lane.b32.xlu0 %v1176, 96
        %v2831 = vpop.permute.xlu0 %2830
        %2832 = vrot.lane.b32.xlu0 %v1179, 96
        %v2833 = vpop.permute.xlu0 %2832
        %2834 = vrot.lane.b32.xlu0 %v1182, 96
        %v2835 = vpop.permute.xlu0 %2834
        %2836 = vrot.lane.b32.xlu0 %v1185, 96
        %v2837 = vpop.permute.xlu0 %2836
        %2838 = vrot.lane.b32.xlu0 %v1188, 96
        %v2839 = vpop.permute.xlu0 %2838
        %2840 = vrot.lane.b32.xlu0 %v1191, 96
        %v2841 = vpop.permute.xlu0 %2840
        %2842 = vrot.lane.b32.xlu0 %v1194, 96
        %v2843 = vpop.permute.xlu0 %2842
        %2844 = vrot.lane.b32.xlu0 %v1197, 96
        %v2845 = vpop.permute.xlu0 %2844
        %2846 = vrot.lane.b32.xlu0 %v1241, 96
        %v2847 = vpop.permute.xlu0 %2846
        %2848 = vrot.lane.b32.xlu0 %v1244, 96
        %v2849 = vpop.permute.xlu0 %2848
        %2850 = vrot.lane.b32.xlu0 %v1247, 96
        %v2851 = vpop.permute.xlu0 %2850
        %2852 = vrot.lane.b32.xlu0 %v1250, 96
        %v2853 = vpop.permute.xlu0 %2852
        %2854 = vrot.lane.b32.xlu0 %v1253, 96
        %v2855 = vpop.permute.xlu0 %2854
        %2856 = vrot.lane.b32.xlu0 %v1256, 96
        %v2857 = vpop.permute.xlu0 %2856
        %2858 = vrot.lane.b32.xlu0 %v1259, 96
        %v2859 = vpop.permute.xlu0 %2858
        %2860 = vrot.lane.b32.xlu0 %v1262, 96
        %v2861 = vpop.permute.xlu0 %2860
        %v2862 = vsel %vm1329, %v2831, 0
        %v2864 = vsel %vm1329, %v2833, 0
        %v2866 = vsel %vm1329, %v2835, 0
        %v2868 = vsel %vm1329, %v2837, 0
        %v2870 = vsel %vm1329, %v2839, 0
        %v2872 = vsel %vm1329, %v2841, 0
        %v2874 = vsel %vm1329, %v2843, 0
        %v2876 = vsel %vm1329, %v2845, 0
        %v2878 = vsel %vm1329, %v2847, 0
        %v2880 = vsel %vm1329, %v2849, 0
        %v2882 = vsel %vm1329, %v2851, 0
        %v2884 = vsel %vm1329, %v2853, 0
        %v2886 = vsel %vm1329, %v2855, 0
        %v2888 = vsel %vm1329, %v2857, 0
        %v2890 = vsel %vm1329, %v2859, 0
        %v2892 = vsel %vm1329, %v2861, 0
        %2894 = vmatpush.xpose.msra.mxu0 0.0
        %2895 = vmatpush.xpose.msra.mxu0 0.0
        %2896 = vmatpush.xpose.msra.mxu0 0.0
        %2897 = vmatpush.xpose.msra.mxu0 0.0
        %2898 = vmatpush.xpose.msra.mxu0 0.0
        %2899 = vmatpush.xpose.msra.mxu0 0.0
        %2900 = vmatpush.xpose.msra.mxu0 0.0
        %2901 = vmatpush.xpose.msra.mxu0 0.0
        %2902 = vmatpush.xpose.msra.mxu0 %v2892
        %2903 = vmatpush.xpose.msra.mxu0 %v2890
        %2904 = vmatpush.xpose.msra.mxu0 %v2888
        %2905 = vmatpush.xpose.msra.mxu0 %v2886
        %2906 = vmatpush.xpose.msra.mxu0 %v2884
        %2907 = vmatpush.xpose.msra.mxu0 %v2882
        %2908 = vmatpush.xpose.msra.mxu0 %v2880
        %2909 = vmatpush.xpose.msra.mxu0 %v2878
        %2910 = vmatmul.f32.gmra.mxu0 %v2862
        %v2911 = vpop.f32.mrf.mxu0
        %v2912 = vadd.f32 0.0, %v2911
        %2913 = vmatmul.f32.gmra.mxu0 %v2864
        %v2914 = vpop.f32.mrf.mxu0
        %v2915 = vadd.f32 0.0, %v2914
        %2916 = vmatmul.f32.gmra.mxu0 %v2866
        %v2917 = vpop.f32.mrf.mxu0
        %v2918 = vadd.f32 0.0, %v2917
        %2919 = vmatmul.f32.gmra.mxu0 %v2868
        %v2920 = vpop.f32.mrf.mxu0
        %v2921 = vadd.f32 0.0, %v2920
        %2922 = vmatmul.f32.gmra.mxu0 %v2870
        %v2923 = vpop.f32.mrf.mxu0
        %v2924 = vadd.f32 0.0, %v2923
        %2925 = vmatmul.f32.gmra.mxu0 %v2872
        %v2926 = vpop.f32.mrf.mxu0
        %v2927 = vadd.f32 0.0, %v2926
        %2928 = vmatmul.f32.gmra.mxu0 %v2874
        %v2929 = vpop.f32.mrf.mxu0
        %v2930 = vadd.f32 0.0, %v2929
        %2931 = vmatmul.f32.gmra.mxu0 %v2876
        %v2932 = vpop.f32.mrf.mxu0
        %v2933 = vadd.f32 0.0, %v2932
        %2934 = vdwg.mxu0
        %v2935 = vmul.f32 %v2912, 0.17677669
        %v2936 = vmul.f32 %v2915, 0.17677669
        %v2937 = vmul.f32 %v2918, 0.17677669
        %v2938 = vmul.f32 %v2921, 0.17677669
        %v2939 = vmul.f32 %v2924, 0.17677669
        %v2940 = vmul.f32 %v2927, 0.17677669
        %v2941 = vmul.f32 %v2930, 0.17677669
        %v2942 = vmul.f32 %v2933, 0.17677669
        %v2943 = vsel %vm1427, %v2935, -inf
        %2944 = vmax.xlane.f32.xlu0 %v2943
        %v2945 = vpop.xlane.xlu0 %2944
        %v2946 = vsel %vm1427, %v2936, -inf
        %2947 = vmax.xlane.f32.xlu0 %v2946
        %v2948 = vpop.xlane.xlu0 %2947
        %v2949 = vsel %vm1427, %v2937, -inf
        %2950 = vmax.xlane.f32.xlu0 %v2949
        %v2951 = vpop.xlane.xlu0 %2950
        %v2952 = vsel %vm1427, %v2938, -inf
        %2953 = vmax.xlane.f32.xlu0 %v2952
        %v2954 = vpop.xlane.xlu0 %2953
        %v2955 = vsel %vm1427, %v2939, -inf
        %2956 = vmax.xlane.f32.xlu0 %v2955
        %v2957 = vpop.xlane.xlu0 %2956
        %v2958 = vsel %vm1427, %v2940, -inf
        %2959 = vmax.xlane.f32.xlu0 %v2958
        %v2960 = vpop.xlane.xlu0 %2959
        %v2961 = vsel %vm1427, %v2941, -inf
        %2962 = vmax.xlane.f32.xlu0 %v2961
        %v2963 = vpop.xlane.xlu0 %2962
        %v2964 = vsel %vm1427, %v2942, -inf
        %2965 = vmax.xlane.f32.xlu0 %v2964
        %v2966 = vpop.xlane.xlu0 %2965
        %v2967 = vsub.f32 %v2935, %v2945
        %v2968 = vsub.f32 %v2936, %v2948
        %v2969 = vsub.f32 %v2937, %v2951
        %v2970 = vsub.f32 %v2938, %v2954
        %v2971 = vsub.f32 %v2939, %v2957
        %v2972 = vsub.f32 %v2940, %v2960
        %v2973 = vsub.f32 %v2941, %v2963
        %v2974 = vsub.f32 %v2942, %v2966
        %v2975 = vmul.f32 %v2967, 1.442695
        %v2976 = vpow.pop %v2975
        %v2977 = vmul.f32 %v2968, 1.442695
        %v2978 = vpow.pop %v2977
        %v2979 = vmul.f32 %v2969, 1.442695
        %v2980 = vpow.pop %v2979
        %v2981 = vmul.f32 %v2970, 1.442695
        %v2982 = vpow.pop %v2981
        %v2983 = vmul.f32 %v2971, 1.442695
        %v2984 = vpow.pop %v2983
        %v2985 = vmul.f32 %v2972, 1.442695
        %v2986 = vpow.pop %v2985
        %v2987 = vmul.f32 %v2973, 1.442695
        %v2988 = vpow.pop %v2987
        %v2989 = vmul.f32 %v2974, 1.442695
        %v2990 = vpow.pop %v2989
        %v2991 = vsel %vm1427, %v2976, 0.0
        %2992 = vadd.xlane.f32.xlu0 %v2991
        %v2993 = vpop.xlane.xlu0 %2992
        %v2994 = vsel %vm1427, %v2978, 0.0
        %2995 = vadd.xlane.f32.xlu0 %v2994
        %v2996 = vpop.xlane.xlu0 %2995
        %v2997 = vsel %vm1427, %v2980, 0.0
        %2998 = vadd.xlane.f32.xlu0 %v2997
        %v2999 = vpop.xlane.xlu0 %2998
        %v3000 = vsel %vm1427, %v2982, 0.0
        %3001 = vadd.xlane.f32.xlu0 %v3000
        %v3002 = vpop.xlane.xlu0 %3001
        %v3003 = vsel %vm1427, %v2984, 0.0
        %3004 = vadd.xlane.f32.xlu0 %v3003
        %v3005 = vpop.xlane.xlu0 %3004
        %v3006 = vsel %vm1427, %v2986, 0.0
        %3007 = vadd.xlane.f32.xlu0 %v3006
        %v3008 = vpop.xlane.xlu0 %3007
        %v3009 = vsel %vm1427, %v2988, 0.0
        %3010 = vadd.xlane.f32.xlu0 %v3009
        %v3011 = vpop.xlane.xlu0 %3010
        %v3012 = vsel %vm1427, %v2990, 0.0
        %3013 = vadd.xlane.f32.xlu0 %v3012
        %v3014 = vpop.xlane.xlu0 %3013
        %v3015 = vrcp.pop %v2993
        %v3016 = vrcp.pop %v2996
        %v3017 = vrcp.pop %v2999
        %v3018 = vrcp.pop %v3002
        %v3019 = vrcp.pop %v3005
        %v3020 = vrcp.pop %v3008
        %v3021 = vrcp.pop %v3011
        %v3022 = vrcp.pop %v3014
        %v3023 = vmul.f32 %v2976, %v3015
        %v3024 = vmul.f32 %v2978, %v3016
        %v3025 = vmul.f32 %v2980, %v3017
        %v3026 = vmul.f32 %v2982, %v3018
        %v3027 = vmul.f32 %v2984, %v3019
        %v3028 = vmul.f32 %v2986, %v3020
        %v3029 = vmul.f32 %v2988, %v3021
        %v3030 = vmul.f32 %v2990, %v3022
        %3039 = vrot.lane.b32.xlu0 %v1306, 96
        %v3040 = vpop.permute.xlu0 %3039
        %3041 = vrot.lane.b32.xlu0 %v1309, 96
        %v3042 = vpop.permute.xlu0 %3041
        %3043 = vrot.lane.b32.xlu0 %v1312, 96
        %v3044 = vpop.permute.xlu0 %3043
        %3045 = vrot.lane.b32.xlu0 %v1315, 96
        %v3046 = vpop.permute.xlu0 %3045
        %3047 = vrot.lane.b32.xlu0 %v1318, 96
        %v3048 = vpop.permute.xlu0 %3047
        %3049 = vrot.lane.b32.xlu0 %v1321, 96
        %v3050 = vpop.permute.xlu0 %3049
        %3051 = vrot.lane.b32.xlu0 %v1324, 96
        %v3052 = vpop.permute.xlu0 %3051
        %3053 = vrot.lane.b32.xlu0 %v1327, 96
        %v3054 = vpop.permute.xlu0 %3053
        %v3064 = vsel %vm1427, %v3023, 0
        %v3067 = vsel %vm1427, %v3024, 0
        %v3070 = vsel %vm1427, %v3025, 0
        %v3073 = vsel %vm1427, %v3026, 0
        %v3076 = vsel %vm1427, %v3027, 0
        %v3079 = vsel %vm1427, %v3028, 0
        %v3082 = vsel %vm1427, %v3029, 0
        %v3085 = vsel %vm1427, %v3030, 0
        %3087 = vmatpush.msra.mxu0 0.0
        %3088 = vmatpush.msra.mxu0 0.0
        %3089 = vmatpush.msra.mxu0 0.0
        %3090 = vmatpush.msra.mxu0 0.0
        %3091 = vmatpush.msra.mxu0 0.0
        %3092 = vmatpush.msra.mxu0 0.0
        %3093 = vmatpush.msra.mxu0 0.0
        %3094 = vmatpush.msra.mxu0 0.0
        %3095 = vmatpush.msra.mxu0 %v3054
        %3096 = vmatpush.msra.mxu0 %v3052
        %3097 = vmatpush.msra.mxu0 %v3050
        %3098 = vmatpush.msra.mxu0 %v3048
        %3099 = vmatpush.msra.mxu0 %v3046
        %3100 = vmatpush.msra.mxu0 %v3044
        %3101 = vmatpush.msra.mxu0 %v3042
        %3102 = vmatpush.msra.mxu0 %v3040
        %3103 = vmatmul.f32.gmra.mxu0 %v3064
        %v3104 = vpop.f32.mrf.mxu0
        %v3105 = vadd.f32 0.0, %v3104
        %3106 = vmatmul.f32.gmra.mxu0 %v3067
        %v3107 = vpop.f32.mrf.mxu0
        %v3108 = vadd.f32 0.0, %v3107
        %3109 = vmatmul.f32.gmra.mxu0 %v3070
        %v3110 = vpop.f32.mrf.mxu0
        %v3111 = vadd.f32 0.0, %v3110
        %3112 = vmatmul.f32.gmra.mxu0 %v3073
        %v3113 = vpop.f32.mrf.mxu0
        %v3114 = vadd.f32 0.0, %v3113
        %3115 = vmatmul.f32.gmra.mxu0 %v3076
        %v3116 = vpop.f32.mrf.mxu0
        %v3117 = vadd.f32 0.0, %v3116
        %3118 = vmatmul.f32.gmra.mxu0 %v3079
        %v3119 = vpop.f32.mrf.mxu0
        %v3120 = vadd.f32 0.0, %v3119
        %3121 = vmatmul.f32.gmra.mxu0 %v3082
        %v3122 = vpop.f32.mrf.mxu0
        %v3123 = vadd.f32 0.0, %v3122
        %3124 = vmatmul.f32.gmra.mxu0 %v3085
        %v3125 = vpop.f32.mrf.mxu0
        %v3126 = vadd.f32 0.0, %v3125
        %3127 = vdwg.mxu0
        %3128 = vrot.lane.b32.xlu0 %v1176, 64
        %v3129 = vpop.permute.xlu0 %3128
        %3130 = vrot.lane.b32.xlu0 %v1179, 64
        %v3131 = vpop.permute.xlu0 %3130
        %3132 = vrot.lane.b32.xlu0 %v1182, 64
        %v3133 = vpop.permute.xlu0 %3132
        %3134 = vrot.lane.b32.xlu0 %v1185, 64
        %v3135 = vpop.permute.xlu0 %3134
        %3136 = vrot.lane.b32.xlu0 %v1188, 64
        %v3137 = vpop.permute.xlu0 %3136
        %3138 = vrot.lane.b32.xlu0 %v1191, 64
        %v3139 = vpop.permute.xlu0 %3138
        %3140 = vrot.lane.b32.xlu0 %v1194, 64
        %v3141 = vpop.permute.xlu0 %3140
        %3142 = vrot.lane.b32.xlu0 %v1197, 64
        %v3143 = vpop.permute.xlu0 %3142
        %3144 = vrot.lane.b32.xlu0 %v1241, 64
        %v3145 = vpop.permute.xlu0 %3144
        %3146 = vrot.lane.b32.xlu0 %v1244, 64
        %v3147 = vpop.permute.xlu0 %3146
        %3148 = vrot.lane.b32.xlu0 %v1247, 64
        %v3149 = vpop.permute.xlu0 %3148
        %3150 = vrot.lane.b32.xlu0 %v1250, 64
        %v3151 = vpop.permute.xlu0 %3150
        %3152 = vrot.lane.b32.xlu0 %v1253, 64
        %v3153 = vpop.permute.xlu0 %3152
        %3154 = vrot.lane.b32.xlu0 %v1256, 64
        %v3155 = vpop.permute.xlu0 %3154
        %3156 = vrot.lane.b32.xlu0 %v1259, 64
        %v3157 = vpop.permute.xlu0 %3156
        %3158 = vrot.lane.b32.xlu0 %v1262, 64
        %v3159 = vpop.permute.xlu0 %3158
        %v3160 = vsel %vm1329, %v3129, 0
        %v3162 = vsel %vm1329, %v3131, 0
        %v3164 = vsel %vm1329, %v3133, 0
        %v3166 = vsel %vm1329, %v3135, 0
        %v3168 = vsel %vm1329, %v3137, 0
        %v3170 = vsel %vm1329, %v3139, 0
        %v3172 = vsel %vm1329, %v3141, 0
        %v3174 = vsel %vm1329, %v3143, 0
        %v3176 = vsel %vm1329, %v3145, 0
        %v3178 = vsel %vm1329, %v3147, 0
        %v3180 = vsel %vm1329, %v3149, 0
        %v3182 = vsel %vm1329, %v3151, 0
        %v3184 = vsel %vm1329, %v3153, 0
        %v3186 = vsel %vm1329, %v3155, 0
        %v3188 = vsel %vm1329, %v3157, 0
        %v3190 = vsel %vm1329, %v3159, 0
        %3192 = vmatpush.xpose.msra.mxu0 0.0
        %3193 = vmatpush.xpose.msra.mxu0 0.0
        %3194 = vmatpush.xpose.msra.mxu0 0.0
        %3195 = vmatpush.xpose.msra.mxu0 0.0
        %3196 = vmatpush.xpose.msra.mxu0 0.0
        %3197 = vmatpush.xpose.msra.mxu0 0.0
        %3198 = vmatpush.xpose.msra.mxu0 0.0
        %3199 = vmatpush.xpose.msra.mxu0 0.0
        %3200 = vmatpush.xpose.msra.mxu0 %v3190
        %3201 = vmatpush.xpose.msra.mxu0 %v3188
        %3202 = vmatpush.xpose.msra.mxu0 %v3186
        %3203 = vmatpush.xpose.msra.mxu0 %v3184
        %3204 = vmatpush.xpose.msra.mxu0 %v3182
        %3205 = vmatpush.xpose.msra.mxu0 %v3180
        %3206 = vmatpush.xpose.msra.mxu0 %v3178
        %3207 = vmatpush.xpose.msra.mxu0 %v3176
        %3208 = vmatmul.f32.gmra.mxu0 %v3160
        %v3209 = vpop.f32.mrf.mxu0
        %v3210 = vadd.f32 0.0, %v3209
        %3211 = vmatmul.f32.gmra.mxu0 %v3162
        %v3212 = vpop.f32.mrf.mxu0
        %v3213 = vadd.f32 0.0, %v3212
        %3214 = vmatmul.f32.gmra.mxu0 %v3164
        %v3215 = vpop.f32.mrf.mxu0
        %v3216 = vadd.f32 0.0, %v3215
        %3217 = vmatmul.f32.gmra.mxu0 %v3166
        %v3218 = vpop.f32.mrf.mxu0
        %v3219 = vadd.f32 0.0, %v3218
        %3220 = vmatmul.f32.gmra.mxu0 %v3168
        %v3221 = vpop.f32.mrf.mxu0
        %v3222 = vadd.f32 0.0, %v3221
        %3223 = vmatmul.f32.gmra.mxu0 %v3170
        %v3224 = vpop.f32.mrf.mxu0
        %v3225 = vadd.f32 0.0, %v3224
        %3226 = vmatmul.f32.gmra.mxu0 %v3172
        %v3227 = vpop.f32.mrf.mxu0
        %v3228 = vadd.f32 0.0, %v3227
        %3229 = vmatmul.f32.gmra.mxu0 %v3174
        %v3230 = vpop.f32.mrf.mxu0
        %v3231 = vadd.f32 0.0, %v3230
        %3232 = vdwg.mxu0
        %v3233 = vmul.f32 %v3210, 0.17677669
        %v3234 = vmul.f32 %v3213, 0.17677669
        %v3235 = vmul.f32 %v3216, 0.17677669
        %v3236 = vmul.f32 %v3219, 0.17677669
        %v3237 = vmul.f32 %v3222, 0.17677669
        %v3238 = vmul.f32 %v3225, 0.17677669
        %v3239 = vmul.f32 %v3228, 0.17677669
        %v3240 = vmul.f32 %v3231, 0.17677669
        %v3241 = vsel %vm1427, %v3233, -inf
        %3242 = vmax.xlane.f32.xlu0 %v3241
        %v3243 = vpop.xlane.xlu0 %3242
        %v3244 = vsel %vm1427, %v3234, -inf
        %3245 = vmax.xlane.f32.xlu0 %v3244
        %v3246 = vpop.xlane.xlu0 %3245
        %v3247 = vsel %vm1427, %v3235, -inf
        %3248 = vmax.xlane.f32.xlu0 %v3247
        %v3249 = vpop.xlane.xlu0 %3248
        %v3250 = vsel %vm1427, %v3236, -inf
        %3251 = vmax.xlane.f32.xlu0 %v3250
        %v3252 = vpop.xlane.xlu0 %3251
        %v3253 = vsel %vm1427, %v3237, -inf
        %3254 = vmax.xlane.f32.xlu0 %v3253
        %v3255 = vpop.xlane.xlu0 %3254
        %v3256 = vsel %vm1427, %v3238, -inf
        %3257 = vmax.xlane.f32.xlu0 %v3256
        %v3258 = vpop.xlane.xlu0 %3257
        %v3259 = vsel %vm1427, %v3239, -inf
        %3260 = vmax.xlane.f32.xlu0 %v3259
        %v3261 = vpop.xlane.xlu0 %3260
        %v3262 = vsel %vm1427, %v3240, -inf
        %3263 = vmax.xlane.f32.xlu0 %v3262
        %v3264 = vpop.xlane.xlu0 %3263
        %v3265 = vsub.f32 %v3233, %v3243
        %v3266 = vsub.f32 %v3234, %v3246
        %v3267 = vsub.f32 %v3235, %v3249
        %v3268 = vsub.f32 %v3236, %v3252
        %v3269 = vsub.f32 %v3237, %v3255
        %v3270 = vsub.f32 %v3238, %v3258
        %v3271 = vsub.f32 %v3239, %v3261
        %v3272 = vsub.f32 %v3240, %v3264
        %v3273 = vmul.f32 %v3265, 1.442695
        %v3274 = vpow.pop %v3273
        %v3275 = vmul.f32 %v3266, 1.442695
        %v3276 = vpow.pop %v3275
        %v3277 = vmul.f32 %v3267, 1.442695
        %v3278 = vpow.pop %v3277
        %v3279 = vmul.f32 %v3268, 1.442695
        %v3280 = vpow.pop %v3279
        %v3281 = vmul.f32 %v3269, 1.442695
        %v3282 = vpow.pop %v3281
        %v3283 = vmul.f32 %v3270, 1.442695
        %v3284 = vpow.pop %v3283
        %v3285 = vmul.f32 %v3271, 1.442695
        %v3286 = vpow.pop %v3285
        %v3287 = vmul.f32 %v3272, 1.442695
        %v3288 = vpow.pop %v3287
        %v3289 = vsel %vm1427, %v3274, 0.0
        %3290 = vadd.xlane.f32.xlu0 %v3289
        %v3291 = vpop.xlane.xlu0 %3290
        %v3292 = vsel %vm1427, %v3276, 0.0
        %3293 = vadd.xlane.f32.xlu0 %v3292
        %v3294 = vpop.xlane.xlu0 %3293
        %v3295 = vsel %vm1427, %v3278, 0.0
        %3296 = vadd.xlane.f32.xlu0 %v3295
        %v3297 = vpop.xlane.xlu0 %3296
        %v3298 = vsel %vm1427, %v3280, 0.0
        %3299 = vadd.xlane.f32.xlu0 %v3298
        %v3300 = vpop.xlane.xlu0 %3299
        %v3301 = vsel %vm1427, %v3282, 0.0
        %3302 = vadd.xlane.f32.xlu0 %v3301
        %v3303 = vpop.xlane.xlu0 %3302
        %v3304 = vsel %vm1427, %v3284, 0.0
        %3305 = vadd.xlane.f32.xlu0 %v3304
        %v3306 = vpop.xlane.xlu0 %3305
        %v3307 = vsel %vm1427, %v3286, 0.0
        %3308 = vadd.xlane.f32.xlu0 %v3307
        %v3309 = vpop.xlane.xlu0 %3308
        %v3310 = vsel %vm1427, %v3288, 0.0
        %3311 = vadd.xlane.f32.xlu0 %v3310
        %v3312 = vpop.xlane.xlu0 %3311
        %v3313 = vrcp.pop %v3291
        %v3314 = vrcp.pop %v3294
        %v3315 = vrcp.pop %v3297
        %v3316 = vrcp.pop %v3300
        %v3317 = vrcp.pop %v3303
        %v3318 = vrcp.pop %v3306
        %v3319 = vrcp.pop %v3309
        %v3320 = vrcp.pop %v3312
        %v3321 = vmul.f32 %v3274, %v3313
        %v3322 = vmul.f32 %v3276, %v3314
        %v3323 = vmul.f32 %v3278, %v3315
        %v3324 = vmul.f32 %v3280, %v3316
        %v3325 = vmul.f32 %v3282, %v3317
        %v3326 = vmul.f32 %v3284, %v3318
        %v3327 = vmul.f32 %v3286, %v3319
        %v3328 = vmul.f32 %v3288, %v3320
        %3329 = vrot.lane.b32.xlu0 %v1306, 64
        %v3330 = vpop.permute.xlu0 %3329
        %3331 = vrot.lane.b32.xlu0 %v1309, 64
        %v3332 = vpop.permute.xlu0 %3331
        %3333 = vrot.lane.b32.xlu0 %v1312, 64
        %v3334 = vpop.permute.xlu0 %3333
        %3335 = vrot.lane.b32.xlu0 %v1315, 64
        %v3336 = vpop.permute.xlu0 %3335
        %3337 = vrot.lane.b32.xlu0 %v1318, 64
        %v3338 = vpop.permute.xlu0 %3337
        %3339 = vrot.lane.b32.xlu0 %v1321, 64
        %v3340 = vpop.permute.xlu0 %3339
        %3341 = vrot.lane.b32.xlu0 %v1324, 64
        %v3342 = vpop.permute.xlu0 %3341
        %3343 = vrot.lane.b32.xlu0 %v1327, 64
        %v3344 = vpop.permute.xlu0 %3343
        %v3354 = vsel %vm1427, %v3321, 0
        %v3357 = vsel %vm1427, %v3322, 0
        %v3360 = vsel %vm1427, %v3323, 0
        %v3363 = vsel %vm1427, %v3324, 0
        %v3366 = vsel %vm1427, %v3325, 0
        %v3369 = vsel %vm1427, %v3326, 0
        %v3372 = vsel %vm1427, %v3327, 0
        %v3375 = vsel %vm1427, %v3328, 0
        %3377 = vmatpush.msra.mxu0 0.0
        %3378 = vmatpush.msra.mxu0 0.0
        %3379 = vmatpush.msra.mxu0 0.0
        %3380 = vmatpush.msra.mxu0 0.0
        %3381 = vmatpush.msra.mxu0 0.0
        %3382 = vmatpush.msra.mxu0 0.0
        %3383 = vmatpush.msra.mxu0 0.0
        %3384 = vmatpush.msra.mxu0 0.0
        %3385 = vmatpush.msra.mxu0 %v3344
        %3386 = vmatpush.msra.mxu0 %v3342
        %3387 = vmatpush.msra.mxu0 %v3340
        %3388 = vmatpush.msra.mxu0 %v3338
        %3389 = vmatpush.msra.mxu0 %v3336
        %3390 = vmatpush.msra.mxu0 %v3334
        %3391 = vmatpush.msra.mxu0 %v3332
        %3392 = vmatpush.msra.mxu0 %v3330
        %3393 = vmatmul.f32.gmra.mxu0 %v3354
        %v3394 = vpop.f32.mrf.mxu0
        %v3395 = vadd.f32 0.0, %v3394
        %3396 = vmatmul.f32.gmra.mxu0 %v3357
        %v3397 = vpop.f32.mrf.mxu0
        %v3398 = vadd.f32 0.0, %v3397
        %3399 = vmatmul.f32.gmra.mxu0 %v3360
        %v3400 = vpop.f32.mrf.mxu0
        %v3401 = vadd.f32 0.0, %v3400
        %3402 = vmatmul.f32.gmra.mxu0 %v3363
        %v3403 = vpop.f32.mrf.mxu0
        %v3404 = vadd.f32 0.0, %v3403
        %3405 = vmatmul.f32.gmra.mxu0 %v3366
        %v3406 = vpop.f32.mrf.mxu0
        %v3407 = vadd.f32 0.0, %v3406
        %3408 = vmatmul.f32.gmra.mxu0 %v3369
        %v3409 = vpop.f32.mrf.mxu0
        %v3410 = vadd.f32 0.0, %v3409
        %3411 = vmatmul.f32.gmra.mxu0 %v3372
        %v3412 = vpop.f32.mrf.mxu0
        %v3413 = vadd.f32 0.0, %v3412
        %3414 = vmatmul.f32.gmra.mxu0 %v3375
        %v3415 = vpop.f32.mrf.mxu0
        %v3416 = vadd.f32 0.0, %v3415
        %3417 = vdwg.mxu0
        %3418 = vrot.lane.b32.xlu0 %v1176, 32
        %v3419 = vpop.permute.xlu0 %3418
        %3420 = vrot.lane.b32.xlu0 %v1179, 32
        %v3421 = vpop.permute.xlu0 %3420
        %3422 = vrot.lane.b32.xlu0 %v1182, 32
        %v3423 = vpop.permute.xlu0 %3422
        %3424 = vrot.lane.b32.xlu0 %v1185, 32
        %v3425 = vpop.permute.xlu0 %3424
        %3426 = vrot.lane.b32.xlu0 %v1188, 32
        %v3427 = vpop.permute.xlu0 %3426
        %3428 = vrot.lane.b32.xlu0 %v1191, 32
        %v3429 = vpop.permute.xlu0 %3428
        %3430 = vrot.lane.b32.xlu0 %v1194, 32
        %v3431 = vpop.permute.xlu0 %3430
        %3432 = vrot.lane.b32.xlu0 %v1197, 32
        %v3433 = vpop.permute.xlu0 %3432
        %3434 = vrot.lane.b32.xlu0 %v1241, 32
        %v3435 = vpop.permute.xlu0 %3434
        %3436 = vrot.lane.b32.xlu0 %v1244, 32
        %v3437 = vpop.permute.xlu0 %3436
        %3438 = vrot.lane.b32.xlu0 %v1247, 32
        %v3439 = vpop.permute.xlu0 %3438
        %3440 = vrot.lane.b32.xlu0 %v1250, 32
        %v3441 = vpop.permute.xlu0 %3440
        %3442 = vrot.lane.b32.xlu0 %v1253, 32
        %v3443 = vpop.permute.xlu0 %3442
        %3444 = vrot.lane.b32.xlu0 %v1256, 32
        %v3445 = vpop.permute.xlu0 %3444
        %3446 = vrot.lane.b32.xlu0 %v1259, 32
        %v3447 = vpop.permute.xlu0 %3446
        %3448 = vrot.lane.b32.xlu0 %v1262, 32
        %v3449 = vpop.permute.xlu0 %3448
        %v3450 = vsel %vm1329, %v3419, 0
        %v3452 = vsel %vm1329, %v3421, 0
        %v3454 = vsel %vm1329, %v3423, 0
        %v3456 = vsel %vm1329, %v3425, 0
        %v3458 = vsel %vm1329, %v3427, 0
        %v3460 = vsel %vm1329, %v3429, 0
        %v3462 = vsel %vm1329, %v3431, 0
        %v3464 = vsel %vm1329, %v3433, 0
        %v3466 = vsel %vm1329, %v3435, 0
        %v3468 = vsel %vm1329, %v3437, 0
        %v3470 = vsel %vm1329, %v3439, 0
        %v3472 = vsel %vm1329, %v3441, 0
        %v3474 = vsel %vm1329, %v3443, 0
        %v3476 = vsel %vm1329, %v3445, 0
        %v3478 = vsel %vm1329, %v3447, 0
        %v3480 = vsel %vm1329, %v3449, 0
        %3482 = vmatpush.xpose.msra.mxu0 0.0
        %3483 = vmatpush.xpose.msra.mxu0 0.0
        %3484 = vmatpush.xpose.msra.mxu0 0.0
        %3485 = vmatpush.xpose.msra.mxu0 0.0
        %3486 = vmatpush.xpose.msra.mxu0 0.0
        %3487 = vmatpush.xpose.msra.mxu0 0.0
        %3488 = vmatpush.xpose.msra.mxu0 0.0
        %3489 = vmatpush.xpose.msra.mxu0 0.0
        %3490 = vmatpush.xpose.msra.mxu0 %v3480
        %3491 = vmatpush.xpose.msra.mxu0 %v3478
        %3492 = vmatpush.xpose.msra.mxu0 %v3476
        %3493 = vmatpush.xpose.msra.mxu0 %v3474
        %3494 = vmatpush.xpose.msra.mxu0 %v3472
        %3495 = vmatpush.xpose.msra.mxu0 %v3470
        %3496 = vmatpush.xpose.msra.mxu0 %v3468
        %3497 = vmatpush.xpose.msra.mxu0 %v3466
        %3498 = vmatmul.f32.gmra.mxu0 %v3450
        %v3499 = vpop.f32.mrf.mxu0
        %v3500 = vadd.f32 0.0, %v3499
        %3501 = vmatmul.f32.gmra.mxu0 %v3452
        %v3502 = vpop.f32.mrf.mxu0
        %v3503 = vadd.f32 0.0, %v3502
        %3504 = vmatmul.f32.gmra.mxu0 %v3454
        %v3505 = vpop.f32.mrf.mxu0
        %v3506 = vadd.f32 0.0, %v3505
        %3507 = vmatmul.f32.gmra.mxu0 %v3456
        %v3508 = vpop.f32.mrf.mxu0
        %v3509 = vadd.f32 0.0, %v3508
        %3510 = vmatmul.f32.gmra.mxu0 %v3458
        %v3511 = vpop.f32.mrf.mxu0
        %v3512 = vadd.f32 0.0, %v3511
        %3513 = vmatmul.f32.gmra.mxu0 %v3460
        %v3514 = vpop.f32.mrf.mxu0
        %v3515 = vadd.f32 0.0, %v3514
        %3516 = vmatmul.f32.gmra.mxu0 %v3462
        %v3517 = vpop.f32.mrf.mxu0
        %v3518 = vadd.f32 0.0, %v3517
        %3519 = vmatmul.f32.gmra.mxu0 %v3464
        %v3520 = vpop.f32.mrf.mxu0
        %v3521 = vadd.f32 0.0, %v3520
        %3522 = vdwg.mxu0
        %v3523 = vmul.f32 %v3500, 0.17677669
        %v3524 = vmul.f32 %v3503, 0.17677669
        %v3525 = vmul.f32 %v3506, 0.17677669
        %v3526 = vmul.f32 %v3509, 0.17677669
        %v3527 = vmul.f32 %v3512, 0.17677669
        %v3528 = vmul.f32 %v3515, 0.17677669
        %v3529 = vmul.f32 %v3518, 0.17677669
        %v3530 = vmul.f32 %v3521, 0.17677669
        %v3531 = vsel %vm1427, %v3523, -inf
        %3532 = vmax.xlane.f32.xlu0 %v3531
        %v3533 = vpop.xlane.xlu0 %3532
        %v3534 = vsel %vm1427, %v3524, -inf
        %3535 = vmax.xlane.f32.xlu0 %v3534
        %v3536 = vpop.xlane.xlu0 %3535
        %v3537 = vsel %vm1427, %v3525, -inf
        %3538 = vmax.xlane.f32.xlu0 %v3537
        %v3539 = vpop.xlane.xlu0 %3538
        %v3540 = vsel %vm1427, %v3526, -inf
        %3541 = vmax.xlane.f32.xlu0 %v3540
        %v3542 = vpop.xlane.xlu0 %3541
        %v3543 = vsel %vm1427, %v3527, -inf
        %3544 = vmax.xlane.f32.xlu0 %v3543
        %v3545 = vpop.xlane.xlu0 %3544
        %v3546 = vsel %vm1427, %v3528, -inf
        %3547 = vmax.xlane.f32.xlu0 %v3546
        %v3548 = vpop.xlane.xlu0 %3547
        %v3549 = vsel %vm1427, %v3529, -inf
        %3550 = vmax.xlane.f32.xlu0 %v3549
        %v3551 = vpop.xlane.xlu0 %3550
        %v3552 = vsel %vm1427, %v3530, -inf
        %3553 = vmax.xlane.f32.xlu0 %v3552
        %v3554 = vpop.xlane.xlu0 %3553
        %v3555 = vsub.f32 %v3523, %v3533
        %v3556 = vsub.f32 %v3524, %v3536
        %v3557 = vsub.f32 %v3525, %v3539
        %v3558 = vsub.f32 %v3526, %v3542
        %v3559 = vsub.f32 %v3527, %v3545
        %v3560 = vsub.f32 %v3528, %v3548
        %v3561 = vsub.f32 %v3529, %v3551
        %v3562 = vsub.f32 %v3530, %v3554
        %v3563 = vmul.f32 %v3555, 1.442695
        %v3564 = vpow.pop %v3563
        %v3565 = vmul.f32 %v3556, 1.442695
        %v3566 = vpow.pop %v3565
        %v3567 = vmul.f32 %v3557, 1.442695
        %v3568 = vpow.pop %v3567
        %v3569 = vmul.f32 %v3558, 1.442695
        %v3570 = vpow.pop %v3569
        %v3571 = vmul.f32 %v3559, 1.442695
        %v3572 = vpow.pop %v3571
        %v3573 = vmul.f32 %v3560, 1.442695
        %v3574 = vpow.pop %v3573
        %v3575 = vmul.f32 %v3561, 1.442695
        %v3576 = vpow.pop %v3575
        %v3577 = vmul.f32 %v3562, 1.442695
        %v3578 = vpow.pop %v3577
        %v3579 = vsel %vm1427, %v3564, 0.0
        %3580 = vadd.xlane.f32.xlu0 %v3579
        %v3581 = vpop.xlane.xlu0 %3580
        %v3582 = vsel %vm1427, %v3566, 0.0
        %3583 = vadd.xlane.f32.xlu0 %v3582
        %v3584 = vpop.xlane.xlu0 %3583
        %v3585 = vsel %vm1427, %v3568, 0.0
        %3586 = vadd.xlane.f32.xlu0 %v3585
        %v3587 = vpop.xlane.xlu0 %3586
        %v3588 = vsel %vm1427, %v3570, 0.0
        %3589 = vadd.xlane.f32.xlu0 %v3588
        %v3590 = vpop.xlane.xlu0 %3589
        %v3591 = vsel %vm1427, %v3572, 0.0
        %3592 = vadd.xlane.f32.xlu0 %v3591
        %v3593 = vpop.xlane.xlu0 %3592
        %v3594 = vsel %vm1427, %v3574, 0.0
        %3595 = vadd.xlane.f32.xlu0 %v3594
        %v3596 = vpop.xlane.xlu0 %3595
        %v3597 = vsel %vm1427, %v3576, 0.0
        %3598 = vadd.xlane.f32.xlu0 %v3597
        %v3599 = vpop.xlane.xlu0 %3598
        %v3600 = vsel %vm1427, %v3578, 0.0
        %3601 = vadd.xlane.f32.xlu0 %v3600
        %v3602 = vpop.xlane.xlu0 %3601
        %v3603 = vrcp.pop %v3581
        %v3604 = vrcp.pop %v3584
        %v3605 = vrcp.pop %v3587
        %v3606 = vrcp.pop %v3590
        %v3607 = vrcp.pop %v3593
        %v3608 = vrcp.pop %v3596
        %v3609 = vrcp.pop %v3599
        %v3610 = vrcp.pop %v3602
        %v3611 = vmul.f32 %v3564, %v3603
        %v3612 = vmul.f32 %v3566, %v3604
        %v3613 = vmul.f32 %v3568, %v3605
        %v3614 = vmul.f32 %v3570, %v3606
        %v3615 = vmul.f32 %v3572, %v3607
        %v3616 = vmul.f32 %v3574, %v3608
        %v3617 = vmul.f32 %v3576, %v3609
        %v3618 = vmul.f32 %v3578, %v3610
        %3619 = vrot.lane.b32.xlu0 %v1306, 32
        %v3620 = vpop.permute.xlu0 %3619
        %3621 = vrot.lane.b32.xlu0 %v1309, 32
        %v3622 = vpop.permute.xlu0 %3621
        %3623 = vrot.lane.b32.xlu0 %v1312, 32
        %v3624 = vpop.permute.xlu0 %3623
        %3625 = vrot.lane.b32.xlu0 %v1315, 32
        %v3626 = vpop.permute.xlu0 %3625
        %3627 = vrot.lane.b32.xlu0 %v1318, 32
        %v3628 = vpop.permute.xlu0 %3627
        %3629 = vrot.lane.b32.xlu0 %v1321, 32
        %v3630 = vpop.permute.xlu0 %3629
        %3631 = vrot.lane.b32.xlu0 %v1324, 32
        %v3632 = vpop.permute.xlu0 %3631
        %3633 = vrot.lane.b32.xlu0 %v1327, 32
        %v3634 = vpop.permute.xlu0 %3633
        %v3644 = vsel %vm1427, %v3611, 0
        %v3647 = vsel %vm1427, %v3612, 0
        %v3650 = vsel %vm1427, %v3613, 0
        %v3653 = vsel %vm1427, %v3614, 0
        %v3656 = vsel %vm1427, %v3615, 0
        %v3659 = vsel %vm1427, %v3616, 0
        %v3662 = vsel %vm1427, %v3617, 0
        %v3665 = vsel %vm1427, %v3618, 0
        %3667 = vmatpush.msra.mxu0 0.0
        %3668 = vmatpush.msra.mxu0 0.0
        %3669 = vmatpush.msra.mxu0 0.0
        %3670 = vmatpush.msra.mxu0 0.0
        %3671 = vmatpush.msra.mxu0 0.0
        %3672 = vmatpush.msra.mxu0 0.0
        %3673 = vmatpush.msra.mxu0 0.0
        %3674 = vmatpush.msra.mxu0 0.0
        %3675 = vmatpush.msra.mxu0 %v3634
        %3676 = vmatpush.msra.mxu0 %v3632
        %3677 = vmatpush.msra.mxu0 %v3630
        %3678 = vmatpush.msra.mxu0 %v3628
        %3679 = vmatpush.msra.mxu0 %v3626
        %3680 = vmatpush.msra.mxu0 %v3624
        %3681 = vmatpush.msra.mxu0 %v3622
        %3682 = vmatpush.msra.mxu0 %v3620
        %3683 = vmatmul.f32.gmra.mxu0 %v3644
        %v3684 = vpop.f32.mrf.mxu0
        %v3685 = vadd.f32 0.0, %v3684
        %3686 = vmatmul.f32.gmra.mxu0 %v3647
        %v3687 = vpop.f32.mrf.mxu0
        %v3688 = vadd.f32 0.0, %v3687
        %3689 = vmatmul.f32.gmra.mxu0 %v3650
        %v3690 = vpop.f32.mrf.mxu0
        %v3691 = vadd.f32 0.0, %v3690
        %3692 = vmatmul.f32.gmra.mxu0 %v3653
        %v3693 = vpop.f32.mrf.mxu0
        %v3694 = vadd.f32 0.0, %v3693
        %3695 = vmatmul.f32.gmra.mxu0 %v3656
        %v3696 = vpop.f32.mrf.mxu0
        %v3697 = vadd.f32 0.0, %v3696
        %3698 = vmatmul.f32.gmra.mxu0 %v3659
        %v3699 = vpop.f32.mrf.mxu0
        %v3700 = vadd.f32 0.0, %v3699
        %3701 = vmatmul.f32.gmra.mxu0 %v3662
        %v3702 = vpop.f32.mrf.mxu0
        %v3703 = vadd.f32 0.0, %v3702
        %3704 = vmatmul.f32.gmra.mxu0 %v3665
        %v3705 = vpop.f32.mrf.mxu0
        %v3706 = vadd.f32 0.0, %v3705
        %3707 = vdwg.mxu0
        %3716 = vrot.lane.b32.xlu0 %v3105, 32
        %v3717 = vpop.permute.xlu0 %3716
        %3718 = vrot.lane.b32.xlu0 %v3108, 32
        %v3719 = vpop.permute.xlu0 %3718
        %3720 = vrot.lane.b32.xlu0 %v3111, 32
        %v3721 = vpop.permute.xlu0 %3720
        %3722 = vrot.lane.b32.xlu0 %v3114, 32
        %v3723 = vpop.permute.xlu0 %3722
        %3724 = vrot.lane.b32.xlu0 %v3117, 32
        %v3725 = vpop.permute.xlu0 %3724
        %3726 = vrot.lane.b32.xlu0 %v3120, 32
        %v3727 = vpop.permute.xlu0 %3726
        %3728 = vrot.lane.b32.xlu0 %v3123, 32
        %v3729 = vpop.permute.xlu0 %3728
        %3730 = vrot.lane.b32.xlu0 %v3126, 32
        %v3731 = vpop.permute.xlu0 %3730
        %3748 = vrot.lane.b32.xlu0 %v3395, 64
        %v3749 = vpop.permute.xlu0 %3748
        %3750 = vrot.lane.b32.xlu0 %v3398, 64
        %v3751 = vpop.permute.xlu0 %3750
        %3752 = vrot.lane.b32.xlu0 %v3401, 64
        %v3753 = vpop.permute.xlu0 %3752
        %3754 = vrot.lane.b32.xlu0 %v3404, 64
        %v3755 = vpop.permute.xlu0 %3754
        %3756 = vrot.lane.b32.xlu0 %v3407, 64
        %v3757 = vpop.permute.xlu0 %3756
        %3758 = vrot.lane.b32.xlu0 %v3410, 64
        %v3759 = vpop.permute.xlu0 %3758
        %3760 = vrot.lane.b32.xlu0 %v3413, 64
        %v3761 = vpop.permute.xlu0 %3760
        %3762 = vrot.lane.b32.xlu0 %v3416, 64
        %v3763 = vpop.permute.xlu0 %3762
        %3780 = vrot.lane.b32.xlu0 %v3685, 96
        %v3781 = vpop.permute.xlu0 %3780
        %3782 = vrot.lane.b32.xlu0 %v3688, 96
        %v3783 = vpop.permute.xlu0 %3782
        %3784 = vrot.lane.b32.xlu0 %v3691, 96
        %v3785 = vpop.permute.xlu0 %3784
        %3786 = vrot.lane.b32.xlu0 %v3694, 96
        %v3787 = vpop.permute.xlu0 %3786
        %3788 = vrot.lane.b32.xlu0 %v3697, 96
        %v3789 = vpop.permute.xlu0 %3788
        %3790 = vrot.lane.b32.xlu0 %v3700, 96
        %v3791 = vpop.permute.xlu0 %3790
        %3792 = vrot.lane.b32.xlu0 %v3703, 96
        %v3793 = vpop.permute.xlu0 %3792
        %3794 = vrot.lane.b32.xlu0 %v3706, 96
        %v3795 = vpop.permute.xlu0 %3794
        %v3804 = vsel %vm1329, %v2807, %v3717
        %v3805 = vsel %vm1329, %v2810, %v3719
        %v3806 = vsel %vm1329, %v2813, %v3721
        %v3807 = vsel %vm1329, %v2816, %v3723
        %v3808 = vsel %vm1329, %v2819, %v3725
        %v3809 = vsel %vm1329, %v2822, %v3727
        %v3810 = vsel %vm1329, %v2825, %v3729
        %v3811 = vsel %vm1329, %v2828, %v3731
        %v3812 = vsel %vm1427, %v3804, %v3749
        %v3813 = vsel %vm1427, %v3805, %v3751
        %v3814 = vsel %vm1427, %v3806, %v3753
        %v3815 = vsel %vm1427, %v3807, %v3755
        %v3816 = vsel %vm1427, %v3808, %v3757
        %v3817 = vsel %vm1427, %v3809, %v3759
        %v3818 = vsel %vm1427, %v3810, %v3761
        %v3819 = vsel %vm1427, %v3811, %v3763
        %v3820 = vsel %vm2571, %v3812, %v3781
        %v3821 = vsel %vm2571, %v3813, %v3783
        %v3822 = vsel %vm2571, %v3814, %v3785
        %v3823 = vsel %vm2571, %v3815, %v3787
        %v3824 = vsel %vm2571, %v3816, %v3789
        %v3825 = vsel %vm2571, %v3817, %v3791
        %v3826 = vsel %vm2571, %v3818, %v3793
        %v3827 = vsel %vm2571, %v3819, %v3795
        %v3828 = vld [vmem:[%s632] sm:$0xff]
        %v3829 = vld [vmem:[%s632 + $0x8] sm:$0xff]
        %v3830 = vld [vmem:[%s632 + $0x10] sm:$0xff]
        %v3831 = vld [vmem:[%s632 + $0x18] sm:$0xff]
        %v3832 = vld [vmem:[%s632 + $0x20] sm:$0xff]
        %v3833 = vld [vmem:[%s632 + $0x28] sm:$0xff]
        %v3834 = vld [vmem:[%s632 + $0x30] sm:$0xff]
        %v3835 = vld [vmem:[%s632 + $0x38] sm:$0xff]
        %v3836 = vld [vmem:[%s632 + $0x40] sm:$0xff]
        %v3837 = vld [vmem:[%s632 + $0x48] sm:$0xff]
        %v3838 = vld [vmem:[%s632 + $0x50] sm:$0xff]
        %v3839 = vld [vmem:[%s632 + $0x58] sm:$0xff]
        %v3840 = vld [vmem:[%s632 + $0x60] sm:$0xff]
        %v3841 = vld [vmem:[%s632 + $0x68] sm:$0xff]
        %v3842 = vld [vmem:[%s632 + $0x70] sm:$0xff]
        %v3843 = vld [vmem:[%s632 + $0x78] sm:$0xff]
        %3844 = vmatpush.msra.mxu0 %v3843
        %3845 = vmatpush.msra.mxu0 %v3842
        %3846 = vmatpush.msra.mxu0 %v3841
        %3847 = vmatpush.msra.mxu0 %v3840
        %3848 = vmatpush.msra.mxu0 %v3839
        %3849 = vmatpush.msra.mxu0 %v3838
        %3850 = vmatpush.msra.mxu0 %v3837
        %3851 = vmatpush.msra.mxu0 %v3836
        %3852 = vmatpush.msra.mxu0 %v3835
        %3853 = vmatpush.msra.mxu0 %v3834
        %3854 = vmatpush.msra.mxu0 %v3833
        %3855 = vmatpush.msra.mxu0 %v3832
        %3856 = vmatpush.msra.mxu0 %v3831
        %3857 = vmatpush.msra.mxu0 %v3830
        %3858 = vmatpush.msra.mxu0 %v3829
        %3859 = vmatpush.msra.mxu0 %v3828
        %3860 = vmatmul.f32.gmra.mxu0 %v2572
        %v3861 = vpop.f32.mrf.mxu0
        %v3862 = vadd.f32 0.0, %v3861
        %3863 = vmatmul.f32.gmra.mxu0 %v2573
        %v3864 = vpop.f32.mrf.mxu0
        %v3865 = vadd.f32 0.0, %v3864
        %3866 = vmatmul.f32.gmra.mxu0 %v2574
        %v3867 = vpop.f32.mrf.mxu0
        %v3868 = vadd.f32 0.0, %v3867
        %3869 = vmatmul.f32.gmra.mxu0 %v2575
        %v3870 = vpop.f32.mrf.mxu0
        %v3871 = vadd.f32 0.0, %v3870
        %3872 = vmatmul.f32.gmra.mxu0 %v2576
        %v3873 = vpop.f32.mrf.mxu0
        %v3874 = vadd.f32 0.0, %v3873
        %3875 = vmatmul.f32.gmra.mxu0 %v2577
        %v3876 = vpop.f32.mrf.mxu0
        %v3877 = vadd.f32 0.0, %v3876
        %3878 = vmatmul.f32.gmra.mxu0 %v2578
        %v3879 = vpop.f32.mrf.mxu0
        %v3880 = vadd.f32 0.0, %v3879
        %3881 = vmatmul.f32.gmra.mxu0 %v2579
        %v3882 = vpop.f32.mrf.mxu0
        %v3883 = vadd.f32 0.0, %v3882
        %3884 = vmatmul.f32.gmra.mxu0 %v3820
        %v3885 = vpop.f32.mrf.mxu0
        %v3886 = vadd.f32 0.0, %v3885
        %3887 = vmatmul.f32.gmra.mxu0 %v3821
        %v3888 = vpop.f32.mrf.mxu0
        %v3889 = vadd.f32 0.0, %v3888
        %3890 = vmatmul.f32.gmra.mxu0 %v3822
        %v3891 = vpop.f32.mrf.mxu0
        %v3892 = vadd.f32 0.0, %v3891
        %3893 = vmatmul.f32.gmra.mxu0 %v3823
        %v3894 = vpop.f32.mrf.mxu0
        %v3895 = vadd.f32 0.0, %v3894
        %3896 = vmatmul.f32.gmra.mxu0 %v3824
        %v3897 = vpop.f32.mrf.mxu0
        %v3898 = vadd.f32 0.0, %v3897
        %3899 = vmatmul.f32.gmra.mxu0 %v3825
        %v3900 = vpop.f32.mrf.mxu0
        %v3901 = vadd.f32 0.0, %v3900
        %3902 = vmatmul.f32.gmra.mxu0 %v3826
        %v3903 = vpop.f32.mrf.mxu0
        %v3904 = vadd.f32 0.0, %v3903
        %3905 = vmatmul.f32.gmra.mxu0 %v3827
        %v3906 = vpop.f32.mrf.mxu0
        %v3907 = vadd.f32 0.0, %v3906
        %3908 = vdwg.mxu0
        %v3909 = vadd.f32 %v695, %v3862
        %v3910 = vadd.f32 %v696, %v3865
        %v3911 = vadd.f32 %v697, %v3868
        %v3912 = vadd.f32 %v698, %v3871
        %v3913 = vadd.f32 %v699, %v3874
        %v3914 = vadd.f32 %v700, %v3877
        %v3915 = vadd.f32 %v701, %v3880
        %v3916 = vadd.f32 %v702, %v3883
        %v3917 = vadd.f32 %v703, %v3886
        %v3918 = vadd.f32 %v704, %v3889
        %v3919 = vadd.f32 %v705, %v3892
        %v3920 = vadd.f32 %v706, %v3895
        %v3921 = vadd.f32 %v707, %v3898
        %v3922 = vadd.f32 %v708, %v3901
        %v3923 = vadd.f32 %v709, %v3904
        %v3924 = vadd.f32 %v710, %v3907
        %v3925 = vld [vmem:[%s635] sm:$0x1]
        %v3927 = vperm.slane %v3925, 0
        %v3929 = vadd.f32 %v3909, %v3927
        %v3930 = vadd.f32 %v3910, %v3927
        %v3931 = vadd.f32 %v3911, %v3927
        %v3932 = vadd.f32 %v3912, %v3927
        %v3933 = vadd.f32 %v3913, %v3927
        %v3934 = vadd.f32 %v3914, %v3927
        %v3935 = vadd.f32 %v3915, %v3927
        %v3936 = vadd.f32 %v3916, %v3927
        %v3937 = vadd.f32 %v3917, %v3927
        %v3938 = vadd.f32 %v3918, %v3927
        %v3939 = vadd.f32 %v3919, %v3927
        %v3940 = vadd.f32 %v3920, %v3927
        %v3941 = vadd.f32 %v3921, %v3927
        %v3942 = vadd.f32 %v3922, %v3927
        %v3943 = vadd.f32 %v3923, %v3927
        %v3944 = vadd.f32 %v3924, %v3927
        %v3945 = vld [vmem:[%s638] sm:$0x1]
        %v3946 = vld [vmem:[%s641] sm:$0x1]
        %3947 = vadd.xlane.f32.xlu0 %v3929
        %v3948 = vpop.xlane.xlu0 %3947
        %3949 = vadd.xlane.f32.xlu0 %v3930
        %v3950 = vpop.xlane.xlu0 %3949
        %3951 = vadd.xlane.f32.xlu0 %v3931
        %v3952 = vpop.xlane.xlu0 %3951
        %3953 = vadd.xlane.f32.xlu0 %v3932
        %v3954 = vpop.xlane.xlu0 %3953
        %3955 = vadd.xlane.f32.xlu0 %v3933
        %v3956 = vpop.xlane.xlu0 %3955
        %3957 = vadd.xlane.f32.xlu0 %v3934
        %v3958 = vpop.xlane.xlu0 %3957
        %3959 = vadd.xlane.f32.xlu0 %v3935
        %v3960 = vpop.xlane.xlu0 %3959
        %3961 = vadd.xlane.f32.xlu0 %v3936
        %v3962 = vpop.xlane.xlu0 %3961
        %3963 = vadd.xlane.f32.xlu0 %v3937
        %v3964 = vpop.xlane.xlu0 %3963
        %3965 = vadd.xlane.f32.xlu0 %v3938
        %v3966 = vpop.xlane.xlu0 %3965
        %3967 = vadd.xlane.f32.xlu0 %v3939
        %v3968 = vpop.xlane.xlu0 %3967
        %3969 = vadd.xlane.f32.xlu0 %v3940
        %v3970 = vpop.xlane.xlu0 %3969
        %3971 = vadd.xlane.f32.xlu0 %v3941
        %v3972 = vpop.xlane.xlu0 %3971
        %3973 = vadd.xlane.f32.xlu0 %v3942
        %v3974 = vpop.xlane.xlu0 %3973
        %3975 = vadd.xlane.f32.xlu0 %v3943
        %v3976 = vpop.xlane.xlu0 %3975
        %3977 = vadd.xlane.f32.xlu0 %v3944
        %v3978 = vpop.xlane.xlu0 %3977
        %v3979 = vmul.f32 %v3948, %v751
        %v3980 = vmul.f32 %v3950, %v751
        %v3981 = vmul.f32 %v3952, %v751
        %v3982 = vmul.f32 %v3954, %v751
        %v3983 = vmul.f32 %v3956, %v751
        %v3984 = vmul.f32 %v3958, %v751
        %v3985 = vmul.f32 %v3960, %v751
        %v3986 = vmul.f32 %v3962, %v751
        %v3987 = vmul.f32 %v3964, %v751
        %v3988 = vmul.f32 %v3966, %v751
        %v3989 = vmul.f32 %v3968, %v751
        %v3990 = vmul.f32 %v3970, %v751
        %v3991 = vmul.f32 %v3972, %v751
        %v3992 = vmul.f32 %v3974, %v751
        %v3993 = vmul.f32 %v3976, %v751
        %v3994 = vmul.f32 %v3978, %v751
        %v3995 = vsub.f32 %v3929, %v3979
        %v3996 = vsub.f32 %v3930, %v3980
        %v3997 = vsub.f32 %v3931, %v3981
        %v3998 = vsub.f32 %v3932, %v3982
        %v3999 = vsub.f32 %v3933, %v3983
        %v4000 = vsub.f32 %v3934, %v3984
        %v4001 = vsub.f32 %v3935, %v3985
        %v4002 = vsub.f32 %v3936, %v3986
        %v4003 = vsub.f32 %v3937, %v3987
        %v4004 = vsub.f32 %v3938, %v3988
        %v4005 = vsub.f32 %v3939, %v3989
        %v4006 = vsub.f32 %v3940, %v3990
        %v4007 = vsub.f32 %v3941, %v3991
        %v4008 = vsub.f32 %v3942, %v3992
        %v4009 = vsub.f32 %v3943, %v3993
        %v4010 = vsub.f32 %v3944, %v3994
        %v4011 = vmul.f32 %v3995, %v3995
        %v4012 = vmul.f32 %v3996, %v3996
        %v4013 = vmul.f32 %v3997, %v3997
        %v4014 = vmul.f32 %v3998, %v3998
        %v4015 = vmul.f32 %v3999, %v3999
        %v4016 = vmul.f32 %v4000, %v4000
        %v4017 = vmul.f32 %v4001, %v4001
        %v4018 = vmul.f32 %v4002, %v4002
        %v4019 = vmul.f32 %v4003, %v4003
        %v4020 = vmul.f32 %v4004, %v4004
        %v4021 = vmul.f32 %v4005, %v4005
        %v4022 = vmul.f32 %v4006, %v4006
        %v4023 = vmul.f32 %v4007, %v4007
        %v4024 = vmul.f32 %v4008, %v4008
        %v4025 = vmul.f32 %v4009, %v4009
        %v4026 = vmul.f32 %v4010, %v4010
        %4027 = vadd.xlane.f32.xlu0 %v4011
        %v4028 = vpop.xlane.xlu0 %4027
        %4029 = vadd.xlane.f32.xlu0 %v4012
        %v4030 = vpop.xlane.xlu0 %4029
        %4031 = vadd.xlane.f32.xlu0 %v4013
        %v4032 = vpop.xlane.xlu0 %4031
        %4033 = vadd.xlane.f32.xlu0 %v4014
        %v4034 = vpop.xlane.xlu0 %4033
        %4035 = vadd.xlane.f32.xlu0 %v4015
        %v4036 = vpop.xlane.xlu0 %4035
        %4037 = vadd.xlane.f32.xlu0 %v4016
        %v4038 = vpop.xlane.xlu0 %4037
        %4039 = vadd.xlane.f32.xlu0 %v4017
        %v4040 = vpop.xlane.xlu0 %4039
        %4041 = vadd.xlane.f32.xlu0 %v4018
        %v4042 = vpop.xlane.xlu0 %4041
        %4043 = vadd.xlane.f32.xlu0 %v4019
        %v4044 = vpop.xlane.xlu0 %4043
        %4045 = vadd.xlane.f32.xlu0 %v4020
        %v4046 = vpop.xlane.xlu0 %4045
        %4047 = vadd.xlane.f32.xlu0 %v4021
        %v4048 = vpop.xlane.xlu0 %4047
        %4049 = vadd.xlane.f32.xlu0 %v4022
        %v4050 = vpop.xlane.xlu0 %4049
        %4051 = vadd.xlane.f32.xlu0 %v4023
        %v4052 = vpop.xlane.xlu0 %4051
        %4053 = vadd.xlane.f32.xlu0 %v4024
        %v4054 = vpop.xlane.xlu0 %4053
        %4055 = vadd.xlane.f32.xlu0 %v4025
        %v4056 = vpop.xlane.xlu0 %4055
        %4057 = vadd.xlane.f32.xlu0 %v4026
        %v4058 = vpop.xlane.xlu0 %4057
        %v4059 = vmul.f32 %v4028, %v751
        %v4060 = vmul.f32 %v4030, %v751
        %v4061 = vmul.f32 %v4032, %v751
        %v4062 = vmul.f32 %v4034, %v751
        %v4063 = vmul.f32 %v4036, %v751
        %v4064 = vmul.f32 %v4038, %v751
        %v4065 = vmul.f32 %v4040, %v751
        %v4066 = vmul.f32 %v4042, %v751
        %v4067 = vmul.f32 %v4044, %v751
        %v4068 = vmul.f32 %v4046, %v751
        %v4069 = vmul.f32 %v4048, %v751
        %v4070 = vmul.f32 %v4050, %v751
        %v4071 = vmul.f32 %v4052, %v751
        %v4072 = vmul.f32 %v4054, %v751
        %v4073 = vmul.f32 %v4056, %v751
        %v4074 = vmul.f32 %v4058, %v751
        %v4075 = vadd.f32 %v4059, 1e-05
        %v4076 = vadd.f32 %v4060, 1e-05
        %v4077 = vadd.f32 %v4061, 1e-05
        %v4078 = vadd.f32 %v4062, 1e-05
        %v4079 = vadd.f32 %v4063, 1e-05
        %v4080 = vadd.f32 %v4064, 1e-05
        %v4081 = vadd.f32 %v4065, 1e-05
        %v4082 = vadd.f32 %v4066, 1e-05
        %v4083 = vadd.f32 %v4067, 1e-05
        %v4084 = vadd.f32 %v4068, 1e-05
        %v4085 = vadd.f32 %v4069, 1e-05
        %v4086 = vadd.f32 %v4070, 1e-05
        %v4087 = vadd.f32 %v4071, 1e-05
        %v4088 = vadd.f32 %v4072, 1e-05
        %v4089 = vadd.f32 %v4073, 1e-05
        %v4090 = vadd.f32 %v4074, 1e-05
        %v4091 = vrsqrt.pop %v4075
        %v4092 = vmul.f32 %v4091, %v4075
        %v4093 = vmul.f32 %v4092, %v4091
        %v4094 = vmul.f32 0.5, %v4093
        %v4095 = vsub.f32 1.5, %v4094
        %v4096 = vmul.f32 %v4091, %v4095
        %vm4097 = vweird.f32 %v4075
        %vm4098 = vweird.f32 %v4091
        %vm4099 = vmor %vm4097, %vm4098
        %v4100 = vsel %vm4099, %v4091, %v4096
        %v4101 = vrsqrt.pop %v4076
        %v4102 = vmul.f32 %v4101, %v4076
        %v4103 = vmul.f32 %v4102, %v4101
        %v4104 = vmul.f32 0.5, %v4103
        %v4105 = vsub.f32 1.5, %v4104
        %v4106 = vmul.f32 %v4101, %v4105
        %vm4107 = vweird.f32 %v4076
        %vm4108 = vweird.f32 %v4101
        %vm4109 = vmor %vm4107, %vm4108
        %v4110 = vsel %vm4109, %v4101, %v4106
        %v4111 = vrsqrt.pop %v4077
        %v4112 = vmul.f32 %v4111, %v4077
        %v4113 = vmul.f32 %v4112, %v4111
        %v4114 = vmul.f32 0.5, %v4113
        %v4115 = vsub.f32 1.5, %v4114
        %v4116 = vmul.f32 %v4111, %v4115
        %vm4117 = vweird.f32 %v4077
        %vm4118 = vweird.f32 %v4111
        %vm4119 = vmor %vm4117, %vm4118
        %v4120 = vsel %vm4119, %v4111, %v4116
        %v4121 = vrsqrt.pop %v4078
        %v4122 = vmul.f32 %v4121, %v4078
        %v4123 = vmul.f32 %v4122, %v4121
        %v4124 = vmul.f32 0.5, %v4123
        %v4125 = vsub.f32 1.5, %v4124
        %v4126 = vmul.f32 %v4121, %v4125
        %vm4127 = vweird.f32 %v4078
        %vm4128 = vweird.f32 %v4121
        %vm4129 = vmor %vm4127, %vm4128
        %v4130 = vsel %vm4129, %v4121, %v4126
        %v4131 = vrsqrt.pop %v4079
        %v4132 = vmul.f32 %v4131, %v4079
        %v4133 = vmul.f32 %v4132, %v4131
        %v4134 = vmul.f32 0.5, %v4133
        %v4135 = vsub.f32 1.5, %v4134
        %v4136 = vmul.f32 %v4131, %v4135
        %vm4137 = vweird.f32 %v4079
        %vm4138 = vweird.f32 %v4131
        %vm4139 = vmor %vm4137, %vm4138
        %v4140 = vsel %vm4139, %v4131, %v4136
        %v4141 = vrsqrt.pop %v4080
        %v4142 = vmul.f32 %v4141, %v4080
        %v4143 = vmul.f32 %v4142, %v4141
        %v4144 = vmul.f32 0.5, %v4143
        %v4145 = vsub.f32 1.5, %v4144
        %v4146 = vmul.f32 %v4141, %v4145
        %vm4147 = vweird.f32 %v4080
        %vm4148 = vweird.f32 %v4141
        %vm4149 = vmor %vm4147, %vm4148
        %v4150 = vsel %vm4149, %v4141, %v4146
        %v4151 = vrsqrt.pop %v4081
        %v4152 = vmul.f32 %v4151, %v4081
        %v4153 = vmul.f32 %v4152, %v4151
        %v4154 = vmul.f32 0.5, %v4153
        %v4155 = vsub.f32 1.5, %v4154
        %v4156 = vmul.f32 %v4151, %v4155
        %vm4157 = vweird.f32 %v4081
        %vm4158 = vweird.f32 %v4151
        %vm4159 = vmor %vm4157, %vm4158
        %v4160 = vsel %vm4159, %v4151, %v4156
        %v4161 = vrsqrt.pop %v4082
        %v4162 = vmul.f32 %v4161, %v4082
        %v4163 = vmul.f32 %v4162, %v4161
        %v4164 = vmul.f32 0.5, %v4163
        %v4165 = vsub.f32 1.5, %v4164
        %v4166 = vmul.f32 %v4161, %v4165
        %vm4167 = vweird.f32 %v4082
        %vm4168 = vweird.f32 %v4161
        %vm4169 = vmor %vm4167, %vm4168
        %v4170 = vsel %vm4169, %v4161, %v4166
        %v4171 = vrsqrt.pop %v4083
        %v4172 = vmul.f32 %v4171, %v4083
        %v4173 = vmul.f32 %v4172, %v4171
        %v4174 = vmul.f32 0.5, %v4173
        %v4175 = vsub.f32 1.5, %v4174
        %v4176 = vmul.f32 %v4171, %v4175
        %vm4177 = vweird.f32 %v4083
        %vm4178 = vweird.f32 %v4171
        %vm4179 = vmor %vm4177, %vm4178
        %v4180 = vsel %vm4179, %v4171, %v4176
        %v4181 = vrsqrt.pop %v4084
        %v4182 = vmul.f32 %v4181, %v4084
        %v4183 = vmul.f32 %v4182, %v4181
        %v4184 = vmul.f32 0.5, %v4183
        %v4185 = vsub.f32 1.5, %v4184
        %v4186 = vmul.f32 %v4181, %v4185
        %vm4187 = vweird.f32 %v4084
        %vm4188 = vweird.f32 %v4181
        %vm4189 = vmor %vm4187, %vm4188
        %v4190 = vsel %vm4189, %v4181, %v4186
        %v4191 = vrsqrt.pop %v4085
        %v4192 = vmul.f32 %v4191, %v4085
        %v4193 = vmul.f32 %v4192, %v4191
        %v4194 = vmul.f32 0.5, %v4193
        %v4195 = vsub.f32 1.5, %v4194
        %v4196 = vmul.f32 %v4191, %v4195
        %vm4197 = vweird.f32 %v4085
        %vm4198 = vweird.f32 %v4191
        %vm4199 = vmor %vm4197, %vm4198
        %v4200 = vsel %vm4199, %v4191, %v4196
        %v4201 = vrsqrt.pop %v4086
        %v4202 = vmul.f32 %v4201, %v4086
        %v4203 = vmul.f32 %v4202, %v4201
        %v4204 = vmul.f32 0.5, %v4203
        %v4205 = vsub.f32 1.5, %v4204
        %v4206 = vmul.f32 %v4201, %v4205
        %vm4207 = vweird.f32 %v4086
        %vm4208 = vweird.f32 %v4201
        %vm4209 = vmor %vm4207, %vm4208
        %v4210 = vsel %vm4209, %v4201, %v4206
        %v4211 = vrsqrt.pop %v4087
        %v4212 = vmul.f32 %v4211, %v4087
        %v4213 = vmul.f32 %v4212, %v4211
        %v4214 = vmul.f32 0.5, %v4213
        %v4215 = vsub.f32 1.5, %v4214
        %v4216 = vmul.f32 %v4211, %v4215
        %vm4217 = vweird.f32 %v4087
        %vm4218 = vweird.f32 %v4211
        %vm4219 = vmor %vm4217, %vm4218
        %v4220 = vsel %vm4219, %v4211, %v4216
        %v4221 = vrsqrt.pop %v4088
        %v4222 = vmul.f32 %v4221, %v4088
        %v4223 = vmul.f32 %v4222, %v4221
        %v4224 = vmul.f32 0.5, %v4223
        %v4225 = vsub.f32 1.5, %v4224
        %v4226 = vmul.f32 %v4221, %v4225
        %vm4227 = vweird.f32 %v4088
        %vm4228 = vweird.f32 %v4221
        %vm4229 = vmor %vm4227, %vm4228
        %v4230 = vsel %vm4229, %v4221, %v4226
        %v4231 = vrsqrt.pop %v4089
        %v4232 = vmul.f32 %v4231, %v4089
        %v4233 = vmul.f32 %v4232, %v4231
        %v4234 = vmul.f32 0.5, %v4233
        %v4235 = vsub.f32 1.5, %v4234
        %v4236 = vmul.f32 %v4231, %v4235
        %vm4237 = vweird.f32 %v4089
        %vm4238 = vweird.f32 %v4231
        %vm4239 = vmor %vm4237, %vm4238
        %v4240 = vsel %vm4239, %v4231, %v4236
        %v4241 = vrsqrt.pop %v4090
        %v4242 = vmul.f32 %v4241, %v4090
        %v4243 = vmul.f32 %v4242, %v4241
        %v4244 = vmul.f32 0.5, %v4243
        %v4245 = vsub.f32 1.5, %v4244
        %v4246 = vmul.f32 %v4241, %v4245
        %vm4247 = vweird.f32 %v4090
        %vm4248 = vweird.f32 %v4241
        %vm4249 = vmor %vm4247, %vm4248
        %v4250 = vsel %vm4249, %v4241, %v4246
        %v4251 = vmul.f32 %v3995, %v4100
        %v4252 = vmul.f32 %v3996, %v4110
        %v4253 = vmul.f32 %v3997, %v4120
        %v4254 = vmul.f32 %v3998, %v4130
        %v4255 = vmul.f32 %v3999, %v4140
        %v4256 = vmul.f32 %v4000, %v4150
        %v4257 = vmul.f32 %v4001, %v4160
        %v4258 = vmul.f32 %v4002, %v4170
        %v4259 = vmul.f32 %v4003, %v4180
        %v4260 = vmul.f32 %v4004, %v4190
        %v4261 = vmul.f32 %v4005, %v4200
        %v4262 = vmul.f32 %v4006, %v4210
        %v4263 = vmul.f32 %v4007, %v4220
        %v4264 = vmul.f32 %v4008, %v4230
        %v4265 = vmul.f32 %v4009, %v4240
        %v4266 = vmul.f32 %v4010, %v4250
        %v4268 = vperm.slane %v3945, 0
        %v4270 = vmul.f32 %v4251, %v4268
        %v4271 = vmul.f32 %v4252, %v4268
        %v4272 = vmul.f32 %v4253, %v4268
        %v4273 = vmul.f32 %v4254, %v4268
        %v4274 = vmul.f32 %v4255, %v4268
        %v4275 = vmul.f32 %v4256, %v4268
        %v4276 = vmul.f32 %v4257, %v4268
        %v4277 = vmul.f32 %v4258, %v4268
        %v4278 = vmul.f32 %v4259, %v4268
        %v4279 = vmul.f32 %v4260, %v4268
        %v4280 = vmul.f32 %v4261, %v4268
        %v4281 = vmul.f32 %v4262, %v4268
        %v4282 = vmul.f32 %v4263, %v4268
        %v4283 = vmul.f32 %v4264, %v4268
        %v4284 = vmul.f32 %v4265, %v4268
        %v4285 = vmul.f32 %v4266, %v4268
        %v4287 = vperm.slane %v3946, 0
        %v4289 = vadd.f32 %v4270, %v4287
        %v4290 = vadd.f32 %v4271, %v4287
        %v4291 = vadd.f32 %v4272, %v4287
        %v4292 = vadd.f32 %v4273, %v4287
        %v4293 = vadd.f32 %v4274, %v4287
        %v4294 = vadd.f32 %v4275, %v4287
        %v4295 = vadd.f32 %v4276, %v4287
        %v4296 = vadd.f32 %v4277, %v4287
        %v4297 = vadd.f32 %v4278, %v4287
        %v4298 = vadd.f32 %v4279, %v4287
        %v4299 = vadd.f32 %v4280, %v4287
        %v4300 = vadd.f32 %v4281, %v4287
        %v4301 = vadd.f32 %v4282, %v4287
        %v4302 = vadd.f32 %v4283, %v4287
        %v4303 = vadd.f32 %v4284, %v4287
        %v4304 = vadd.f32 %v4285, %v4287
        %v4305 = vld [vmem:[%s646] sm:$0xff]
        %v4306 = vld [vmem:[%s646 + $0x8] sm:$0xff]
        %v4307 = vld [vmem:[%s646 + $0x10] sm:$0xff]
        %v4308 = vld [vmem:[%s646 + $0x18] sm:$0xff]
        %v4309 = vld [vmem:[%s646 + $0x20] sm:$0xff]
        %v4310 = vld [vmem:[%s646 + $0x28] sm:$0xff]
        %v4311 = vld [vmem:[%s646 + $0x30] sm:$0xff]
        %v4312 = vld [vmem:[%s646 + $0x38] sm:$0xff]
        %v4313 = vld [vmem:[%s646 + $0x40] sm:$0xff]
        %v4314 = vld [vmem:[%s646 + $0x48] sm:$0xff]
        %v4315 = vld [vmem:[%s646 + $0x50] sm:$0xff]
        %v4316 = vld [vmem:[%s646 + $0x58] sm:$0xff]
        %v4317 = vld [vmem:[%s646 + $0x60] sm:$0xff]
        %v4318 = vld [vmem:[%s646 + $0x68] sm:$0xff]
        %v4319 = vld [vmem:[%s646 + $0x70] sm:$0xff]
        %v4320 = vld [vmem:[%s646 + $0x78] sm:$0xff]
        %v4321 = vld [vmem:[%s646 + $0x80] sm:$0xff]
        %v4322 = vld [vmem:[%s646 + $0x88] sm:$0xff]
        %v4323 = vld [vmem:[%s646 + $0x90] sm:$0xff]
        %v4324 = vld [vmem:[%s646 + $0x98] sm:$0xff]
        %v4325 = vld [vmem:[%s646 + $0xa0] sm:$0xff]
        %v4326 = vld [vmem:[%s646 + $0xa8] sm:$0xff]
        %v4327 = vld [vmem:[%s646 + $0xb0] sm:$0xff]
        %v4328 = vld [vmem:[%s646 + $0xb8] sm:$0xff]
        %v4329 = vld [vmem:[%s646 + $0xc0] sm:$0xff]
        %v4330 = vld [vmem:[%s646 + $0xc8] sm:$0xff]
        %v4331 = vld [vmem:[%s646 + $0xd0] sm:$0xff]
        %v4332 = vld [vmem:[%s646 + $0xd8] sm:$0xff]
        %v4333 = vld [vmem:[%s646 + $0xe0] sm:$0xff]
        %v4334 = vld [vmem:[%s646 + $0xe8] sm:$0xff]
        %v4335 = vld [vmem:[%s646 + $0xf0] sm:$0xff]
        %v4336 = vld [vmem:[%s646 + $0xf8] sm:$0xff]
        %v4337 = vld [vmem:[%s650] sm:$0x3]
        %v4339 = vperm.slane %v4337, 0
        %v4340 = vperm.slane %v4337, 1
        %4343 = vmatpush.msra.mxu0 %v4335
        %4344 = vmatpush.msra.mxu0 %v4333
        %4345 = vmatpush.msra.mxu0 %v4331
        %4346 = vmatpush.msra.mxu0 %v4329
        %4347 = vmatpush.msra.mxu0 %v4327
        %4348 = vmatpush.msra.mxu0 %v4325
        %4349 = vmatpush.msra.mxu0 %v4323
        %4350 = vmatpush.msra.mxu0 %v4321
        %4351 = vmatpush.msra.mxu0 %v4319
        %4352 = vmatpush.msra.mxu0 %v4317
        %4353 = vmatpush.msra.mxu0 %v4315
        %4354 = vmatpush.msra.mxu0 %v4313
        %4355 = vmatpush.msra.mxu0 %v4311
        %4356 = vmatpush.msra.mxu0 %v4309
        %4357 = vmatpush.msra.mxu0 %v4307
        %4358 = vmatpush.msra.mxu0 %v4305
        %4359 = vmatmul.f32.gmra.mxu0 %v4289
        %v4360 = vpop.f32.mrf.mxu0
        %v4361 = vadd.f32 %v4339, %v4360
        %4362 = vmatmul.f32.gmra.mxu0 %v4290
        %v4363 = vpop.f32.mrf.mxu0
        %v4364 = vadd.f32 %v4339, %v4363
        %4365 = vmatmul.f32.gmra.mxu0 %v4291
        %v4366 = vpop.f32.mrf.mxu0
        %v4367 = vadd.f32 %v4339, %v4366
        %4368 = vmatmul.f32.gmra.mxu0 %v4292
        %v4369 = vpop.f32.mrf.mxu0
        %v4370 = vadd.f32 %v4339, %v4369
        %4371 = vmatmul.f32.gmra.mxu0 %v4293
        %v4372 = vpop.f32.mrf.mxu0
        %v4373 = vadd.f32 %v4339, %v4372
        %4374 = vmatmul.f32.gmra.mxu0 %v4294
        %v4375 = vpop.f32.mrf.mxu0
        %v4376 = vadd.f32 %v4339, %v4375
        %4377 = vmatmul.f32.gmra.mxu0 %v4295
        %v4378 = vpop.f32.mrf.mxu0
        %v4379 = vadd.f32 %v4339, %v4378
        %4380 = vmatmul.f32.gmra.mxu0 %v4296
        %v4381 = vpop.f32.mrf.mxu0
        %v4382 = vadd.f32 %v4339, %v4381
        %4383 = vmatmul.f32.gmra.mxu0 %v4297
        %v4384 = vpop.f32.mrf.mxu0
        %v4385 = vadd.f32 %v4339, %v4384
        %4386 = vmatmul.f32.gmra.mxu0 %v4298
        %v4387 = vpop.f32.mrf.mxu0
        %v4388 = vadd.f32 %v4339, %v4387
        %4389 = vmatmul.f32.gmra.mxu0 %v4299
        %v4390 = vpop.f32.mrf.mxu0
        %v4391 = vadd.f32 %v4339, %v4390
        %4392 = vmatmul.f32.gmra.mxu0 %v4300
        %v4393 = vpop.f32.mrf.mxu0
        %v4394 = vadd.f32 %v4339, %v4393
        %4395 = vmatmul.f32.gmra.mxu0 %v4301
        %v4396 = vpop.f32.mrf.mxu0
        %v4397 = vadd.f32 %v4339, %v4396
        %4398 = vmatmul.f32.gmra.mxu0 %v4302
        %v4399 = vpop.f32.mrf.mxu0
        %v4400 = vadd.f32 %v4339, %v4399
        %4401 = vmatmul.f32.gmra.mxu0 %v4303
        %v4402 = vpop.f32.mrf.mxu0
        %v4403 = vadd.f32 %v4339, %v4402
        %4404 = vmatmul.f32.gmra.mxu0 %v4304
        %v4405 = vpop.f32.mrf.mxu0
        %v4406 = vadd.f32 %v4339, %v4405
        %4407 = vdwg.mxu0
        %4408 = vmatpush.msra.mxu0 %v4336
        %4409 = vmatpush.msra.mxu0 %v4334
        %4410 = vmatpush.msra.mxu0 %v4332
        %4411 = vmatpush.msra.mxu0 %v4330
        %4412 = vmatpush.msra.mxu0 %v4328
        %4413 = vmatpush.msra.mxu0 %v4326
        %4414 = vmatpush.msra.mxu0 %v4324
        %4415 = vmatpush.msra.mxu0 %v4322
        %4416 = vmatpush.msra.mxu0 %v4320
        %4417 = vmatpush.msra.mxu0 %v4318
        %4418 = vmatpush.msra.mxu0 %v4316
        %4419 = vmatpush.msra.mxu0 %v4314
        %4420 = vmatpush.msra.mxu0 %v4312
        %4421 = vmatpush.msra.mxu0 %v4310
        %4422 = vmatpush.msra.mxu0 %v4308
        %4423 = vmatpush.msra.mxu0 %v4306
        %4424 = vmatmul.f32.gmra.mxu0 %v4289
        %v4425 = vpop.f32.mrf.mxu0
        %v4426 = vadd.f32 %v4340, %v4425
        %4427 = vmatmul.f32.gmra.mxu0 %v4290
        %v4428 = vpop.f32.mrf.mxu0
        %v4429 = vadd.f32 %v4340, %v4428
        %4430 = vmatmul.f32.gmra.mxu0 %v4291
        %v4431 = vpop.f32.mrf.mxu0
        %v4432 = vadd.f32 %v4340, %v4431
        %4433 = vmatmul.f32.gmra.mxu0 %v4292
        %v4434 = vpop.f32.mrf.mxu0
        %v4435 = vadd.f32 %v4340, %v4434
        %4436 = vmatmul.f32.gmra.mxu0 %v4293
        %v4437 = vpop.f32.mrf.mxu0
        %v4438 = vadd.f32 %v4340, %v4437
        %4439 = vmatmul.f32.gmra.mxu0 %v4294
        %v4440 = vpop.f32.mrf.mxu0
        %v4441 = vadd.f32 %v4340, %v4440
        %4442 = vmatmul.f32.gmra.mxu0 %v4295
        %v4443 = vpop.f32.mrf.mxu0
        %v4444 = vadd.f32 %v4340, %v4443
        %4445 = vmatmul.f32.gmra.mxu0 %v4296
        %v4446 = vpop.f32.mrf.mxu0
        %v4447 = vadd.f32 %v4340, %v4446
        %4448 = vmatmul.f32.gmra.mxu0 %v4297
        %v4449 = vpop.f32.mrf.mxu0
        %v4450 = vadd.f32 %v4340, %v4449
        %4451 = vmatmul.f32.gmra.mxu0 %v4298
        %v4452 = vpop.f32.mrf.mxu0
        %v4453 = vadd.f32 %v4340, %v4452
        %4454 = vmatmul.f32.gmra.mxu0 %v4299
        %v4455 = vpop.f32.mrf.mxu0
        %v4456 = vadd.f32 %v4340, %v4455
        %4457 = vmatmul.f32.gmra.mxu0 %v4300
        %v4458 = vpop.f32.mrf.mxu0
        %v4459 = vadd.f32 %v4340, %v4458
        %4460 = vmatmul.f32.gmra.mxu0 %v4301
        %v4461 = vpop.f32.mrf.mxu0
        %v4462 = vadd.f32 %v4340, %v4461
        %4463 = vmatmul.f32.gmra.mxu0 %v4302
        %v4464 = vpop.f32.mrf.mxu0
        %v4465 = vadd.f32 %v4340, %v4464
        %4466 = vmatmul.f32.gmra.mxu0 %v4303
        %v4467 = vpop.f32.mrf.mxu0
        %v4468 = vadd.f32 %v4340, %v4467
        %4469 = vmatmul.f32.gmra.mxu0 %v4304
        %v4470 = vpop.f32.mrf.mxu0
        %v4471 = vadd.f32 %v4340, %v4470
        %4472 = vdwg.mxu0
        %v4473 = vmax.f32 %v4361, 0.0
        %v4474 = vmax.f32 %v4426, 0.0
        %v4475 = vmax.f32 %v4364, 0.0
        %v4476 = vmax.f32 %v4429, 0.0
        %v4477 = vmax.f32 %v4367, 0.0
        %v4478 = vmax.f32 %v4432, 0.0
        %v4479 = vmax.f32 %v4370, 0.0
        %v4480 = vmax.f32 %v4435, 0.0
        %v4481 = vmax.f32 %v4373, 0.0
        %v4482 = vmax.f32 %v4438, 0.0
        %v4483 = vmax.f32 %v4376, 0.0
        %v4484 = vmax.f32 %v4441, 0.0
        %v4485 = vmax.f32 %v4379, 0.0
        %v4486 = vmax.f32 %v4444, 0.0
        %v4487 = vmax.f32 %v4382, 0.0
        %v4488 = vmax.f32 %v4447, 0.0
        %v4489 = vmax.f32 %v4385, 0.0
        %v4490 = vmax.f32 %v4450, 0.0
        %v4491 = vmax.f32 %v4388, 0.0
        %v4492 = vmax.f32 %v4453, 0.0
        %v4493 = vmax.f32 %v4391, 0.0
        %v4494 = vmax.f32 %v4456, 0.0
        %v4495 = vmax.f32 %v4394, 0.0
        %v4496 = vmax.f32 %v4459, 0.0
        %v4497 = vmax.f32 %v4397, 0.0
        %v4498 = vmax.f32 %v4462, 0.0
        %v4499 = vmax.f32 %v4400, 0.0
        %v4500 = vmax.f32 %v4465, 0.0
        %v4501 = vmax.f32 %v4403, 0.0
        %v4502 = vmax.f32 %v4468, 0.0
        %v4503 = vmax.f32 %v4406, 0.0
        %v4504 = vmax.f32 %v4471, 0.0
        %v4505 = vld [vmem:[%s655] sm:$0xff]
        %v4506 = vld [vmem:[%s655 + $0x8] sm:$0xff]
        %v4507 = vld [vmem:[%s655 + $0x10] sm:$0xff]
        %v4508 = vld [vmem:[%s655 + $0x18] sm:$0xff]
        %v4509 = vld [vmem:[%s655 + $0x20] sm:$0xff]
        %v4510 = vld [vmem:[%s655 + $0x28] sm:$0xff]
        %v4511 = vld [vmem:[%s655 + $0x30] sm:$0xff]
        %v4512 = vld [vmem:[%s655 + $0x38] sm:$0xff]
        %v4513 = vld [vmem:[%s655 + $0x40] sm:$0xff]
        %v4514 = vld [vmem:[%s655 + $0x48] sm:$0xff]
        %v4515 = vld [vmem:[%s655 + $0x50] sm:$0xff]
        %v4516 = vld [vmem:[%s655 + $0x58] sm:$0xff]
        %v4517 = vld [vmem:[%s655 + $0x60] sm:$0xff]
        %v4518 = vld [vmem:[%s655 + $0x68] sm:$0xff]
        %v4519 = vld [vmem:[%s655 + $0x70] sm:$0xff]
        %v4520 = vld [vmem:[%s655 + $0x78] sm:$0xff]
        %v4521 = vld [vmem:[%s655 + $0x80] sm:$0xff]
        %v4522 = vld [vmem:[%s655 + $0x88] sm:$0xff]
        %v4523 = vld [vmem:[%s655 + $0x90] sm:$0xff]
        %v4524 = vld [vmem:[%s655 + $0x98] sm:$0xff]
        %v4525 = vld [vmem:[%s655 + $0xa0] sm:$0xff]
        %v4526 = vld [vmem:[%s655 + $0xa8] sm:$0xff]
        %v4527 = vld [vmem:[%s655 + $0xb0] sm:$0xff]
        %v4528 = vld [vmem:[%s655 + $0xb8] sm:$0xff]
        %v4529 = vld [vmem:[%s655 + $0xc0] sm:$0xff]
        %v4530 = vld [vmem:[%s655 + $0xc8] sm:$0xff]
        %v4531 = vld [vmem:[%s655 + $0xd0] sm:$0xff]
        %v4532 = vld [vmem:[%s655 + $0xd8] sm:$0xff]
        %v4533 = vld [vmem:[%s655 + $0xe0] sm:$0xff]
        %v4534 = vld [vmem:[%s655 + $0xe8] sm:$0xff]
        %v4535 = vld [vmem:[%s655 + $0xf0] sm:$0xff]
        %v4536 = vld [vmem:[%s655 + $0xf8] sm:$0xff]
        %4537 = vmatpush.msra.mxu0 %v4520
        %4538 = vmatpush.msra.mxu0 %v4519
        %4539 = vmatpush.msra.mxu0 %v4518
        %4540 = vmatpush.msra.mxu0 %v4517
        %4541 = vmatpush.msra.mxu0 %v4516
        %4542 = vmatpush.msra.mxu0 %v4515
        %4543 = vmatpush.msra.mxu0 %v4514
        %4544 = vmatpush.msra.mxu0 %v4513
        %4545 = vmatpush.msra.mxu0 %v4512
        %4546 = vmatpush.msra.mxu0 %v4511
        %4547 = vmatpush.msra.mxu0 %v4510
        %4548 = vmatpush.msra.mxu0 %v4509
        %4549 = vmatpush.msra.mxu0 %v4508
        %4550 = vmatpush.msra.mxu0 %v4507
        %4551 = vmatpush.msra.mxu0 %v4506
        %4552 = vmatpush.msra.mxu0 %v4505
        %4553 = vmatmul.f32.gmra.mxu0 %v4473
        %v4554 = vpop.f32.mrf.mxu0
        %v4555 = vadd.f32 0.0, %v4554
        %4556 = vmatmul.f32.gmra.mxu0 %v4475
        %v4557 = vpop.f32.mrf.mxu0
        %v4558 = vadd.f32 0.0, %v4557
        %4559 = vmatmul.f32.gmra.mxu0 %v4477
        %v4560 = vpop.f32.mrf.mxu0
        %v4561 = vadd.f32 0.0, %v4560
        %4562 = vmatmul.f32.gmra.mxu0 %v4479
        %v4563 = vpop.f32.mrf.mxu0
        %v4564 = vadd.f32 0.0, %v4563
        %4565 = vmatmul.f32.gmra.mxu0 %v4481
        %v4566 = vpop.f32.mrf.mxu0
        %v4567 = vadd.f32 0.0, %v4566
        %4568 = vmatmul.f32.gmra.mxu0 %v4483
        %v4569 = vpop.f32.mrf.mxu0
        %v4570 = vadd.f32 0.0, %v4569
        %4571 = vmatmul.f32.gmra.mxu0 %v4485
        %v4572 = vpop.f32.mrf.mxu0
        %v4573 = vadd.f32 0.0, %v4572
        %4574 = vmatmul.f32.gmra.mxu0 %v4487
        %v4575 = vpop.f32.mrf.mxu0
        %v4576 = vadd.f32 0.0, %v4575
        %4577 = vmatmul.f32.gmra.mxu0 %v4489
        %v4578 = vpop.f32.mrf.mxu0
        %v4579 = vadd.f32 0.0, %v4578
        %4580 = vmatmul.f32.gmra.mxu0 %v4491
        %v4581 = vpop.f32.mrf.mxu0
        %v4582 = vadd.f32 0.0, %v4581
        %4583 = vmatmul.f32.gmra.mxu0 %v4493
        %v4584 = vpop.f32.mrf.mxu0
        %v4585 = vadd.f32 0.0, %v4584
        %4586 = vmatmul.f32.gmra.mxu0 %v4495
        %v4587 = vpop.f32.mrf.mxu0
        %v4588 = vadd.f32 0.0, %v4587
        %4589 = vmatmul.f32.gmra.mxu0 %v4497
        %v4590 = vpop.f32.mrf.mxu0
        %v4591 = vadd.f32 0.0, %v4590
        %4592 = vmatmul.f32.gmra.mxu0 %v4499
        %v4593 = vpop.f32.mrf.mxu0
        %v4594 = vadd.f32 0.0, %v4593
        %4595 = vmatmul.f32.gmra.mxu0 %v4501
        %v4596 = vpop.f32.mrf.mxu0
        %v4597 = vadd.f32 0.0, %v4596
        %4598 = vmatmul.f32.gmra.mxu0 %v4503
        %v4599 = vpop.f32.mrf.mxu0
        %v4600 = vadd.f32 0.0, %v4599
        %4601 = vdwg.mxu0
        %4602 = vmatpush.msra.mxu0 %v4536
        %4603 = vmatpush.msra.mxu0 %v4535
        %4604 = vmatpush.msra.mxu0 %v4534
        %4605 = vmatpush.msra.mxu0 %v4533
        %4606 = vmatpush.msra.mxu0 %v4532
        %4607 = vmatpush.msra.mxu0 %v4531
        %4608 = vmatpush.msra.mxu0 %v4530
        %4609 = vmatpush.msra.mxu0 %v4529
        %4610 = vmatpush.msra.mxu0 %v4528
        %4611 = vmatpush.msra.mxu0 %v4527
        %4612 = vmatpush.msra.mxu0 %v4526
        %4613 = vmatpush.msra.mxu0 %v4525
        %4614 = vmatpush.msra.mxu0 %v4524
        %4615 = vmatpush.msra.mxu0 %v4523
        %4616 = vmatpush.msra.mxu0 %v4522
        %4617 = vmatpush.msra.mxu0 %v4521
        %4618 = vmatmul.f32.gmra.mxu0 %v4474
        %v4619 = vpop.f32.mrf.mxu0
        %v4620 = vadd.f32 %v4555, %v4619
        %4621 = vmatmul.f32.gmra.mxu0 %v4476
        %v4622 = vpop.f32.mrf.mxu0
        %v4623 = vadd.f32 %v4558, %v4622
        %4624 = vmatmul.f32.gmra.mxu0 %v4478
        %v4625 = vpop.f32.mrf.mxu0
        %v4626 = vadd.f32 %v4561, %v4625
        %4627 = vmatmul.f32.gmra.mxu0 %v4480
        %v4628 = vpop.f32.mrf.mxu0
        %v4629 = vadd.f32 %v4564, %v4628
        %4630 = vmatmul.f32.gmra.mxu0 %v4482
        %v4631 = vpop.f32.mrf.mxu0
        %v4632 = vadd.f32 %v4567, %v4631
        %4633 = vmatmul.f32.gmra.mxu0 %v4484
        %v4634 = vpop.f32.mrf.mxu0
        %v4635 = vadd.f32 %v4570, %v4634
        %4636 = vmatmul.f32.gmra.mxu0 %v4486
        %v4637 = vpop.f32.mrf.mxu0
        %v4638 = vadd.f32 %v4573, %v4637
        %4639 = vmatmul.f32.gmra.mxu0 %v4488
        %v4640 = vpop.f32.mrf.mxu0
        %v4641 = vadd.f32 %v4576, %v4640
        %4642 = vmatmul.f32.gmra.mxu0 %v4490
        %v4643 = vpop.f32.mrf.mxu0
        %v4644 = vadd.f32 %v4579, %v4643
        %4645 = vmatmul.f32.gmra.mxu0 %v4492
        %v4646 = vpop.f32.mrf.mxu0
        %v4647 = vadd.f32 %v4582, %v4646
        %4648 = vmatmul.f32.gmra.mxu0 %v4494
        %v4649 = vpop.f32.mrf.mxu0
        %v4650 = vadd.f32 %v4585, %v4649
        %4651 = vmatmul.f32.gmra.mxu0 %v4496
        %v4652 = vpop.f32.mrf.mxu0
        %v4653 = vadd.f32 %v4588, %v4652
        %4654 = vmatmul.f32.gmra.mxu0 %v4498
        %v4655 = vpop.f32.mrf.mxu0
        %v4656 = vadd.f32 %v4591, %v4655
        %4657 = vmatmul.f32.gmra.mxu0 %v4500
        %v4658 = vpop.f32.mrf.mxu0
        %v4659 = vadd.f32 %v4594, %v4658
        %4660 = vmatmul.f32.gmra.mxu0 %v4502
        %v4661 = vpop.f32.mrf.mxu0
        %v4662 = vadd.f32 %v4597, %v4661
        %4663 = vmatmul.f32.gmra.mxu0 %v4504
        %v4664 = vpop.f32.mrf.mxu0
        %v4665 = vadd.f32 %v4600, %v4664
        %4666 = vdwg.mxu0
        %v4667 = vadd.f32 %v3929, %v4620
        %v4668 = vadd.f32 %v3930, %v4623
        %v4669 = vadd.f32 %v3931, %v4626
        %v4670 = vadd.f32 %v3932, %v4629
        %v4671 = vadd.f32 %v3933, %v4632
        %v4672 = vadd.f32 %v3934, %v4635
        %v4673 = vadd.f32 %v3935, %v4638
        %v4674 = vadd.f32 %v3936, %v4641
        %v4675 = vadd.f32 %v3937, %v4644
        %v4676 = vadd.f32 %v3938, %v4647
        %v4677 = vadd.f32 %v3939, %v4650
        %v4678 = vadd.f32 %v3940, %v4653
        %v4679 = vadd.f32 %v3941, %v4656
        %v4680 = vadd.f32 %v3942, %v4659
        %v4681 = vadd.f32 %v3943, %v4662
        %v4682 = vadd.f32 %v3944, %v4665
        %v4683 = vld [vmem:[%s658] sm:$0x1]
        %v4685 = vperm.slane %v4683, 0
        %v4687 = vadd.f32 %v4667, %v4685
        %v4688 = vadd.f32 %v4668, %v4685
        %v4689 = vadd.f32 %v4669, %v4685
        %v4690 = vadd.f32 %v4670, %v4685
        %v4691 = vadd.f32 %v4671, %v4685
        %v4692 = vadd.f32 %v4672, %v4685
        %v4693 = vadd.f32 %v4673, %v4685
        %v4694 = vadd.f32 %v4674, %v4685
        %v4695 = vadd.f32 %v4675, %v4685
        %v4696 = vadd.f32 %v4676, %v4685
        %v4697 = vadd.f32 %v4677, %v4685
        %v4698 = vadd.f32 %v4678, %v4685
        %v4699 = vadd.f32 %v4679, %v4685
        %v4700 = vadd.f32 %v4680, %v4685
        %v4701 = vadd.f32 %v4681, %v4685
        %v4702 = vadd.f32 %v4682, %v4685
        %4703 = vst [vmem:[#allocation2] sm:$0xff] %v4687
        %4704 = vst [vmem:[#allocation2 + $0x8] sm:$0xff] %v4688
        %4705 = vst [vmem:[#allocation2 + $0x10] sm:$0xff] %v4689
        %4706 = vst [vmem:[#allocation2 + $0x18] sm:$0xff] %v4690
        %4707 = vst [vmem:[#allocation2 + $0x20] sm:$0xff] %v4691
        %4708 = vst [vmem:[#allocation2 + $0x28] sm:$0xff] %v4692
        %4709 = vst [vmem:[#allocation2 + $0x30] sm:$0xff] %v4693
        %4710 = vst [vmem:[#allocation2 + $0x38] sm:$0xff] %v4694
        %4711 = vst [vmem:[#allocation2 + $0x40] sm:$0xff] %v4695
        %4712 = vst [vmem:[#allocation2 + $0x48] sm:$0xff] %v4696
        %4713 = vst [vmem:[#allocation2 + $0x50] sm:$0xff] %v4697
        %4714 = vst [vmem:[#allocation2 + $0x58] sm:$0xff] %v4698
        %4715 = vst [vmem:[#allocation2 + $0x60] sm:$0xff] %v4699
        %4716 = vst [vmem:[#allocation2 + $0x68] sm:$0xff] %v4700
        %4717 = vst [vmem:[#allocation2 + $0x70] sm:$0xff] %v4701
        %4718 = vst [vmem:[#allocation2 + $0x78] sm:$0xff] %v4702
        %p4719 = scmp.eq.s32.totalorder %s27, 1
        // Predicated region
        $region85: #{forward.3} parent=79 // pred_check
          %p4720 = pneg %p4719
        $region86: #{forward.3} parent=79 // pred_check_branch
          %4722 = sbr.rel (%p4720) target = $region88
        $region87: #{forward.3} parent=79 // pred_region
          %v4723 = vld [vmem:[%s13] sm:$0x1]
          %v4724 = vld [vmem:[%s14] sm:$0x1]
          %4725 = vadd.xlane.f32.xlu0 %v4687
          %v4726 = vpop.xlane.xlu0 %4725
          %4727 = vadd.xlane.f32.xlu0 %v4688
          %v4728 = vpop.xlane.xlu0 %4727
          %4729 = vadd.xlane.f32.xlu0 %v4689
          %v4730 = vpop.xlane.xlu0 %4729
          %4731 = vadd.xlane.f32.xlu0 %v4690
          %v4732 = vpop.xlane.xlu0 %4731
          %4733 = vadd.xlane.f32.xlu0 %v4691
          %v4734 = vpop.xlane.xlu0 %4733
          %4735 = vadd.xlane.f32.xlu0 %v4692
          %v4736 = vpop.xlane.xlu0 %4735
          %4737 = vadd.xlane.f32.xlu0 %v4693
          %v4738 = vpop.xlane.xlu0 %4737
          %4739 = vadd.xlane.f32.xlu0 %v4694
          %v4740 = vpop.xlane.xlu0 %4739
          %4741 = vadd.xlane.f32.xlu0 %v4695
          %v4742 = vpop.xlane.xlu0 %4741
          %4743 = vadd.xlane.f32.xlu0 %v4696
          %v4744 = vpop.xlane.xlu0 %4743
          %4745 = vadd.xlane.f32.xlu0 %v4697
          %v4746 = vpop.xlane.xlu0 %4745
          %4747 = vadd.xlane.f32.xlu0 %v4698
          %v4748 = vpop.xlane.xlu0 %4747
          %4749 = vadd.xlane.f32.xlu0 %v4699
          %v4750 = vpop.xlane.xlu0 %4749
          %4751 = vadd.xlane.f32.xlu0 %v4700
          %v4752 = vpop.xlane.xlu0 %4751
          %4753 = vadd.xlane.f32.xlu0 %v4701
          %v4754 = vpop.xlane.xlu0 %4753
          %4755 = vadd.xlane.f32.xlu0 %v4702
          %v4756 = vpop.xlane.xlu0 %4755
          %v4757 = vmul.f32 %v4726, %v751
          %v4758 = vmul.f32 %v4728, %v751
          %v4759 = vmul.f32 %v4730, %v751
          %v4760 = vmul.f32 %v4732, %v751
          %v4761 = vmul.f32 %v4734, %v751
          %v4762 = vmul.f32 %v4736, %v751
          %v4763 = vmul.f32 %v4738, %v751
          %v4764 = vmul.f32 %v4740, %v751
          %v4765 = vmul.f32 %v4742, %v751
          %v4766 = vmul.f32 %v4744, %v751
          %v4767 = vmul.f32 %v4746, %v751
          %v4768 = vmul.f32 %v4748, %v751
          %v4769 = vmul.f32 %v4750, %v751
          %v4770 = vmul.f32 %v4752, %v751
          %v4771 = vmul.f32 %v4754, %v751
          %v4772 = vmul.f32 %v4756, %v751
          %v4773 = vsub.f32 %v4687, %v4757
          %v4774 = vsub.f32 %v4688, %v4758
          %v4775 = vsub.f32 %v4689, %v4759
          %v4776 = vsub.f32 %v4690, %v4760
          %v4777 = vsub.f32 %v4691, %v4761
          %v4778 = vsub.f32 %v4692, %v4762
          %v4779 = vsub.f32 %v4693, %v4763
          %v4780 = vsub.f32 %v4694, %v4764
          %v4781 = vsub.f32 %v4695, %v4765
          %v4782 = vsub.f32 %v4696, %v4766
          %v4783 = vsub.f32 %v4697, %v4767
          %v4784 = vsub.f32 %v4698, %v4768
          %v4785 = vsub.f32 %v4699, %v4769
          %v4786 = vsub.f32 %v4700, %v4770
          %v4787 = vsub.f32 %v4701, %v4771
          %v4788 = vsub.f32 %v4702, %v4772
          %v4789 = vmul.f32 %v4773, %v4773
          %v4790 = vmul.f32 %v4774, %v4774
          %v4791 = vmul.f32 %v4775, %v4775
          %v4792 = vmul.f32 %v4776, %v4776
          %v4793 = vmul.f32 %v4777, %v4777
          %v4794 = vmul.f32 %v4778, %v4778
          %v4795 = vmul.f32 %v4779, %v4779
          %v4796 = vmul.f32 %v4780, %v4780
          %v4797 = vmul.f32 %v4781, %v4781
          %v4798 = vmul.f32 %v4782, %v4782
          %v4799 = vmul.f32 %v4783, %v4783
          %v4800 = vmul.f32 %v4784, %v4784
          %v4801 = vmul.f32 %v4785, %v4785
          %v4802 = vmul.f32 %v4786, %v4786
          %v4803 = vmul.f32 %v4787, %v4787
          %v4804 = vmul.f32 %v4788, %v4788
          %4805 = vadd.xlane.f32.xlu0 %v4789
          %v4806 = vpop.xlane.xlu0 %4805
          %4807 = vadd.xlane.f32.xlu0 %v4790
          %v4808 = vpop.xlane.xlu0 %4807
          %4809 = vadd.xlane.f32.xlu0 %v4791
          %v4810 = vpop.xlane.xlu0 %4809
          %4811 = vadd.xlane.f32.xlu0 %v4792
          %v4812 = vpop.xlane.xlu0 %4811
          %4813 = vadd.xlane.f32.xlu0 %v4793
          %v4814 = vpop.xlane.xlu0 %4813
          %4815 = vadd.xlane.f32.xlu0 %v4794
          %v4816 = vpop.xlane.xlu0 %4815
          %4817 = vadd.xlane.f32.xlu0 %v4795
          %v4818 = vpop.xlane.xlu0 %4817
          %4819 = vadd.xlane.f32.xlu0 %v4796
          %v4820 = vpop.xlane.xlu0 %4819
          %4821 = vadd.xlane.f32.xlu0 %v4797
          %v4822 = vpop.xlane.xlu0 %4821
          %4823 = vadd.xlane.f32.xlu0 %v4798
          %v4824 = vpop.xlane.xlu0 %4823
          %4825 = vadd.xlane.f32.xlu0 %v4799
          %v4826 = vpop.xlane.xlu0 %4825
          %4827 = vadd.xlane.f32.xlu0 %v4800
          %v4828 = vpop.xlane.xlu0 %4827
          %4829 = vadd.xlane.f32.xlu0 %v4801
          %v4830 = vpop.xlane.xlu0 %4829
          %4831 = vadd.xlane.f32.xlu0 %v4802
          %v4832 = vpop.xlane.xlu0 %4831
          %4833 = vadd.xlane.f32.xlu0 %v4803
          %v4834 = vpop.xlane.xlu0 %4833
          %4835 = vadd.xlane.f32.xlu0 %v4804
          %v4836 = vpop.xlane.xlu0 %4835
          %v4837 = vmul.f32 %v4806, %v751
          %v4838 = vmul.f32 %v4808, %v751
          %v4839 = vmul.f32 %v4810, %v751
          %v4840 = vmul.f32 %v4812, %v751
          %v4841 = vmul.f32 %v4814, %v751
          %v4842 = vmul.f32 %v4816, %v751
          %v4843 = vmul.f32 %v4818, %v751
          %v4844 = vmul.f32 %v4820, %v751
          %v4845 = vmul.f32 %v4822, %v751
          %v4846 = vmul.f32 %v4824, %v751
          %v4847 = vmul.f32 %v4826, %v751
          %v4848 = vmul.f32 %v4828, %v751
          %v4849 = vmul.f32 %v4830, %v751
          %v4850 = vmul.f32 %v4832, %v751
          %v4851 = vmul.f32 %v4834, %v751
          %v4852 = vmul.f32 %v4836, %v751
          %v4853 = vadd.f32 %v4837, 1e-05
          %v4854 = vadd.f32 %v4838, 1e-05
          %v4855 = vadd.f32 %v4839, 1e-05
          %v4856 = vadd.f32 %v4840, 1e-05
          %v4857 = vadd.f32 %v4841, 1e-05
          %v4858 = vadd.f32 %v4842, 1e-05
          %v4859 = vadd.f32 %v4843, 1e-05
          %v4860 = vadd.f32 %v4844, 1e-05
          %v4861 = vadd.f32 %v4845, 1e-05
          %v4862 = vadd.f32 %v4846, 1e-05
          %v4863 = vadd.f32 %v4847, 1e-05
          %v4864 = vadd.f32 %v4848, 1e-05
          %v4865 = vadd.f32 %v4849, 1e-05
          %v4866 = vadd.f32 %v4850, 1e-05
          %v4867 = vadd.f32 %v4851, 1e-05
          %v4868 = vadd.f32 %v4852, 1e-05
          %v4869 = vrsqrt.pop %v4853
          %v4870 = vmul.f32 %v4869, %v4853
          %v4871 = vmul.f32 %v4870, %v4869
          %v4872 = vmul.f32 0.5, %v4871
          %v4873 = vsub.f32 1.5, %v4872
          %v4874 = vmul.f32 %v4869, %v4873
          %vm4875 = vweird.f32 %v4853
          %vm4876 = vweird.f32 %v4869
          %vm4877 = vmor %vm4875, %vm4876
          %v4878 = vsel %vm4877, %v4869, %v4874
          %v4879 = vrsqrt.pop %v4854
          %v4880 = vmul.f32 %v4879, %v4854
          %v4881 = vmul.f32 %v4880, %v4879
          %v4882 = vmul.f32 0.5, %v4881
          %v4883 = vsub.f32 1.5, %v4882
          %v4884 = vmul.f32 %v4879, %v4883
          %vm4885 = vweird.f32 %v4854
          %vm4886 = vweird.f32 %v4879
          %vm4887 = vmor %vm4885, %vm4886
          %v4888 = vsel %vm4887, %v4879, %v4884
          %v4889 = vrsqrt.pop %v4855
          %v4890 = vmul.f32 %v4889, %v4855
          %v4891 = vmul.f32 %v4890, %v4889
          %v4892 = vmul.f32 0.5, %v4891
          %v4893 = vsub.f32 1.5, %v4892
          %v4894 = vmul.f32 %v4889, %v4893
          %vm4895 = vweird.f32 %v4855
          %vm4896 = vweird.f32 %v4889
          %vm4897 = vmor %vm4895, %vm4896
          %v4898 = vsel %vm4897, %v4889, %v4894
          %v4899 = vrsqrt.pop %v4856
          %v4900 = vmul.f32 %v4899, %v4856
          %v4901 = vmul.f32 %v4900, %v4899
          %v4902 = vmul.f32 0.5, %v4901
          %v4903 = vsub.f32 1.5, %v4902
          %v4904 = vmul.f32 %v4899, %v4903
          %vm4905 = vweird.f32 %v4856
          %vm4906 = vweird.f32 %v4899
          %vm4907 = vmor %vm4905, %vm4906
          %v4908 = vsel %vm4907, %v4899, %v4904
          %v4909 = vrsqrt.pop %v4857
          %v4910 = vmul.f32 %v4909, %v4857
          %v4911 = vmul.f32 %v4910, %v4909
          %v4912 = vmul.f32 0.5, %v4911
          %v4913 = vsub.f32 1.5, %v4912
          %v4914 = vmul.f32 %v4909, %v4913
          %vm4915 = vweird.f32 %v4857
          %vm4916 = vweird.f32 %v4909
          %vm4917 = vmor %vm4915, %vm4916
          %v4918 = vsel %vm4917, %v4909, %v4914
          %v4919 = vrsqrt.pop %v4858
          %v4920 = vmul.f32 %v4919, %v4858
          %v4921 = vmul.f32 %v4920, %v4919
          %v4922 = vmul.f32 0.5, %v4921
          %v4923 = vsub.f32 1.5, %v4922
          %v4924 = vmul.f32 %v4919, %v4923
          %vm4925 = vweird.f32 %v4858
          %vm4926 = vweird.f32 %v4919
          %vm4927 = vmor %vm4925, %vm4926
          %v4928 = vsel %vm4927, %v4919, %v4924
          %v4929 = vrsqrt.pop %v4859
          %v4930 = vmul.f32 %v4929, %v4859
          %v4931 = vmul.f32 %v4930, %v4929
          %v4932 = vmul.f32 0.5, %v4931
          %v4933 = vsub.f32 1.5, %v4932
          %v4934 = vmul.f32 %v4929, %v4933
          %vm4935 = vweird.f32 %v4859
          %vm4936 = vweird.f32 %v4929
          %vm4937 = vmor %vm4935, %vm4936
          %v4938 = vsel %vm4937, %v4929, %v4934
          %v4939 = vrsqrt.pop %v4860
          %v4940 = vmul.f32 %v4939, %v4860
          %v4941 = vmul.f32 %v4940, %v4939
          %v4942 = vmul.f32 0.5, %v4941
          %v4943 = vsub.f32 1.5, %v4942
          %v4944 = vmul.f32 %v4939, %v4943
          %vm4945 = vweird.f32 %v4860
          %vm4946 = vweird.f32 %v4939
          %vm4947 = vmor %vm4945, %vm4946
          %v4948 = vsel %vm4947, %v4939, %v4944
          %v4949 = vrsqrt.pop %v4861
          %v4950 = vmul.f32 %v4949, %v4861
          %v4951 = vmul.f32 %v4950, %v4949
          %v4952 = vmul.f32 0.5, %v4951
          %v4953 = vsub.f32 1.5, %v4952
          %v4954 = vmul.f32 %v4949, %v4953
          %vm4955 = vweird.f32 %v4861
          %vm4956 = vweird.f32 %v4949
          %vm4957 = vmor %vm4955, %vm4956
          %v4958 = vsel %vm4957, %v4949, %v4954
          %v4959 = vrsqrt.pop %v4862
          %v4960 = vmul.f32 %v4959, %v4862
          %v4961 = vmul.f32 %v4960, %v4959
          %v4962 = vmul.f32 0.5, %v4961
          %v4963 = vsub.f32 1.5, %v4962
          %v4964 = vmul.f32 %v4959, %v4963
          %vm4965 = vweird.f32 %v4862
          %vm4966 = vweird.f32 %v4959
          %vm4967 = vmor %vm4965, %vm4966
          %v4968 = vsel %vm4967, %v4959, %v4964
          %v4969 = vrsqrt.pop %v4863
          %v4970 = vmul.f32 %v4969, %v4863
          %v4971 = vmul.f32 %v4970, %v4969
          %v4972 = vmul.f32 0.5, %v4971
          %v4973 = vsub.f32 1.5, %v4972
          %v4974 = vmul.f32 %v4969, %v4973
          %vm4975 = vweird.f32 %v4863
          %vm4976 = vweird.f32 %v4969
          %vm4977 = vmor %vm4975, %vm4976
          %v4978 = vsel %vm4977, %v4969, %v4974
          %v4979 = vrsqrt.pop %v4864
          %v4980 = vmul.f32 %v4979, %v4864
          %v4981 = vmul.f32 %v4980, %v4979
          %v4982 = vmul.f32 0.5, %v4981
          %v4983 = vsub.f32 1.5, %v4982
          %v4984 = vmul.f32 %v4979, %v4983
          %vm4985 = vweird.f32 %v4864
          %vm4986 = vweird.f32 %v4979
          %vm4987 = vmor %vm4985, %vm4986
          %v4988 = vsel %vm4987, %v4979, %v4984
          %v4989 = vrsqrt.pop %v4865
          %v4990 = vmul.f32 %v4989, %v4865
          %v4991 = vmul.f32 %v4990, %v4989
          %v4992 = vmul.f32 0.5, %v4991
          %v4993 = vsub.f32 1.5, %v4992
          %v4994 = vmul.f32 %v4989, %v4993
          %vm4995 = vweird.f32 %v4865
          %vm4996 = vweird.f32 %v4989
          %vm4997 = vmor %vm4995, %vm4996
          %v4998 = vsel %vm4997, %v4989, %v4994
          %v4999 = vrsqrt.pop %v4866
          %v5000 = vmul.f32 %v4999, %v4866
          %v5001 = vmul.f32 %v5000, %v4999
          %v5002 = vmul.f32 0.5, %v5001
          %v5003 = vsub.f32 1.5, %v5002
          %v5004 = vmul.f32 %v4999, %v5003
          %vm5005 = vweird.f32 %v4866
          %vm5006 = vweird.f32 %v4999
          %vm5007 = vmor %vm5005, %vm5006
          %v5008 = vsel %vm5007, %v4999, %v5004
          %v5009 = vrsqrt.pop %v4867
          %v5010 = vmul.f32 %v5009, %v4867
          %v5011 = vmul.f32 %v5010, %v5009
          %v5012 = vmul.f32 0.5, %v5011
          %v5013 = vsub.f32 1.5, %v5012
          %v5014 = vmul.f32 %v5009, %v5013
          %vm5015 = vweird.f32 %v4867
          %vm5016 = vweird.f32 %v5009
          %vm5017 = vmor %vm5015, %vm5016
          %v5018 = vsel %vm5017, %v5009, %v5014
          %v5019 = vrsqrt.pop %v4868
          %v5020 = vmul.f32 %v5019, %v4868
          %v5021 = vmul.f32 %v5020, %v5019
          %v5022 = vmul.f32 0.5, %v5021
          %v5023 = vsub.f32 1.5, %v5022
          %v5024 = vmul.f32 %v5019, %v5023
          %vm5025 = vweird.f32 %v4868
          %vm5026 = vweird.f32 %v5019
          %vm5027 = vmor %vm5025, %vm5026
          %v5028 = vsel %vm5027, %v5019, %v5024
          %v5029 = vmul.f32 %v4773, %v4878
          %v5030 = vmul.f32 %v4774, %v4888
          %v5031 = vmul.f32 %v4775, %v4898
          %v5032 = vmul.f32 %v4776, %v4908
          %v5033 = vmul.f32 %v4777, %v4918
          %v5034 = vmul.f32 %v4778, %v4928
          %v5035 = vmul.f32 %v4779, %v4938
          %v5036 = vmul.f32 %v4780, %v4948
          %v5037 = vmul.f32 %v4781, %v4958
          %v5038 = vmul.f32 %v4782, %v4968
          %v5039 = vmul.f32 %v4783, %v4978
          %v5040 = vmul.f32 %v4784, %v4988
          %v5041 = vmul.f32 %v4785, %v4998
          %v5042 = vmul.f32 %v4786, %v5008
          %v5043 = vmul.f32 %v4787, %v5018
          %v5044 = vmul.f32 %v4788, %v5028
          %v5046 = vperm.slane %v4723, 0
          %v5048 = vmul.f32 %v5029, %v5046
          %v5049 = vmul.f32 %v5030, %v5046
          %v5050 = vmul.f32 %v5031, %v5046
          %v5051 = vmul.f32 %v5032, %v5046
          %v5052 = vmul.f32 %v5033, %v5046
          %v5053 = vmul.f32 %v5034, %v5046
          %v5054 = vmul.f32 %v5035, %v5046
          %v5055 = vmul.f32 %v5036, %v5046
          %v5056 = vmul.f32 %v5037, %v5046
          %v5057 = vmul.f32 %v5038, %v5046
          %v5058 = vmul.f32 %v5039, %v5046
          %v5059 = vmul.f32 %v5040, %v5046
          %v5060 = vmul.f32 %v5041, %v5046
          %v5061 = vmul.f32 %v5042, %v5046
          %v5062 = vmul.f32 %v5043, %v5046
          %v5063 = vmul.f32 %v5044, %v5046
          %v5065 = vperm.slane %v4724, 0
          %v5067 = vadd.f32 %v5048, %v5065
          %v5068 = vadd.f32 %v5049, %v5065
          %v5069 = vadd.f32 %v5050, %v5065
          %v5070 = vadd.f32 %v5051, %v5065
          %v5071 = vadd.f32 %v5052, %v5065
          %v5072 = vadd.f32 %v5053, %v5065
          %v5073 = vadd.f32 %v5054, %v5065
          %v5074 = vadd.f32 %v5055, %v5065
          %v5075 = vadd.f32 %v5056, %v5065
          %v5076 = vadd.f32 %v5057, %v5065
          %v5077 = vadd.f32 %v5058, %v5065
          %v5078 = vadd.f32 %v5059, %v5065
          %v5079 = vadd.f32 %v5060, %v5065
          %v5080 = vadd.f32 %v5061, %v5065
          %v5081 = vadd.f32 %v5062, %v5065
          %v5082 = vadd.f32 %v5063, %v5065
          %5083 = vst [vmem:[#allocation3] sm:$0xff] %v5067
          %5084 = vst [vmem:[#allocation3 + $0x8] sm:$0xff] %v5068
          %5085 = vst [vmem:[#allocation3 + $0x10] sm:$0xff] %v5069
          %5086 = vst [vmem:[#allocation3 + $0x18] sm:$0xff] %v5070
          %5087 = vst [vmem:[#allocation3 + $0x20] sm:$0xff] %v5071
          %5088 = vst [vmem:[#allocation3 + $0x28] sm:$0xff] %v5072
          %5089 = vst [vmem:[#allocation3 + $0x30] sm:$0xff] %v5073
          %5090 = vst [vmem:[#allocation3 + $0x38] sm:$0xff] %v5074
          %5091 = vst [vmem:[#allocation3 + $0x40] sm:$0xff] %v5075
          %5092 = vst [vmem:[#allocation3 + $0x48] sm:$0xff] %v5076
          %5093 = vst [vmem:[#allocation3 + $0x50] sm:$0xff] %v5077
          %5094 = vst [vmem:[#allocation3 + $0x58] sm:$0xff] %v5078
          %5095 = vst [vmem:[#allocation3 + $0x60] sm:$0xff] %v5079
          %5096 = vst [vmem:[#allocation3 + $0x68] sm:$0xff] %v5080
          %5097 = vst [vmem:[#allocation3 + $0x70] sm:$0xff] %v5081
          %5098 = vst [vmem:[#allocation3 + $0x78] sm:$0xff] %v5082
        $region88: #{forward.3} parent=79 // pred_fallthru
          _
        // Predicated region
        $region89: #{forward.3} parent=79 // pred_check
          %p5099 = pneg %p415
        $region90: #{forward.3} parent=79 // pred_check_branch
          %5101 = sbr.rel (%p5099) target = $region92
        $region91: #{forward.3} parent=79 // pred_region
          %5103 = vsyncadd [#allocation4], 0
          %s5104 = sshll.u32 [#allocation3], 4
          %s5105 = int_to_ptr.vmem [resolvable:$true] %s5104
          %s5106 = sshll.u32 %s15, 4
          %s5107 = int_to_ptr.hbm [resolvable:$true] %s5106
          %5112 = dma.vmem_to_hbm [thread:$0]  %s5105, 2048, %s5107, [#allocation4], 128, 128, 8
        $region92: #{forward.3} parent=79 // pred_fallthru
          _
        // Predicated region
        $region93: #{forward.3} parent=79 // pred_check
          %p5113 = pneg %p415
        $region94: #{forward.3} parent=79 // pred_check_branch
          %5115 = sbr.rel (%p5113) target = $region96
        $region95: #{forward.3} parent=79 // pred_region
          %5117 = dma.done [#allocation4], 2048
        $region96: #{forward.3} parent=79 // pred_fallthru
          _
      $region80: #{forward.3} parent=5 // pred_fallthru
        _
      %p5118 = scmp.le.s32.totalorder 2, %s22
      // Predicated region
      $region97: #{forward.3} parent=5 // pred_check
        %p5119 = pneg %p5118
      $region98: #{forward.3} parent=5 // pred_check_branch
        %5121 = sbr.rel (%p5119) target = $region100
      $region99: #{forward.3} parent=5 // pred_region
        %s5122 = ssub.s32 %s22, 2
      $region100: #{forward.3} parent=5 // pred_fallthru
        _
    $region6: #{forward.3} parent=1 // loop_footer
      %s26 = sadd.s32 1, %s22
    $region7: #{forward.3} parent=1 // loop_footer_branch
      %21 = sbr.rel target = $region3
    $region8: #{forward.3} parent=1 // loop_exit
      _
    %5123 = vsyncpa [#allocation4], 1
    %s5124 = scalar_lea.sflag [#allocation4], 1
    %5125 = vsyncpa %s5124, 1

</llo_original>
